<compile_context>
chip_gen: v7x
topology: tpu7x:2x2x1
jax: 0.10.0
libtpu: 0.0.40
codegen_flags: <defaults>
</compile_context>

<pallas_src>
import jax
import jax.numpy as jnp
from jax.experimental import pallas as pl
from jax.experimental.pallas import tpu as pltpu

# ----- model hyper-params (match SirenCollection.__init__ semantics) --------
NUM_SIRENS = 100
IN_FEATURES = 2
HIDDEN_FEATURES = 32
HIDDEN_LAYERS = 2
OUT_FEATURES = 1          # collection is used as a scalar-field SIREN
FIRST_OMEGA_0 = 30.0
HIDDEN_OMEGA_0 = 30.0
OUTERMOST_LINEAR = False  # default in the PyTorch module

B_TILE_DEFAULT = 512      # lane-dense batch tile (4 full lane tiles)

# packed-slab layout (per siren), shape (PACK_ROWS, H):
#   rows [l*H, (l+1)*H)        : omega_h * Wh_l              (H, H), l < HIDDEN_LAYERS
#   rows [HIDDEN_LAYERS*H, +H) : "vector block" (H, H), vectors stored as columns:
#       cols 0..IN-1           : omega_0 * W1[:, i]
#       col IN                 : omega_0 * b1
#       cols IN+1 .. XPAD-1    : 0   (padding lanes of the layer-0 matmul)
#       col XPAD + l           : omega_h * bh_l
#       col XPAD + L           : o_scale * Wo[0, :]
#       col XPAD + L + 1 (row0): o_scale * bo[0]
_H = HIDDEN_FEATURES
PACK_ROWS = (HIDDEN_LAYERS + 1) * _H
XPAD = 8                              # sublane-aligned padded coord rows
COL_B1 = IN_FEATURES
COL_BH = XPAD
COL_WO = XPAD + HIDDEN_LAYERS
COL_BO = COL_WO + 1
assert IN_FEATURES + 1 <= XPAD
assert COL_BO + 1 <= _H, "vector block needs more columns than HIDDEN_FEATURES"


# ----------------------------- Pallas kernel --------------------------------
def siren_kernel(n_ref, xpad_ref, p_ref, o_ref):
    del n_ref  # siren selection already happened through the BlockSpec index_map
    H = HIDDEN_FEATURES
    base = HIDDEN_LAYERS * H

    vec = p_ref[0, base:base + H, :]                       # (H, H) vectors-as-columns
    xpad = xpad_ref[0]                                     # (XPAD, Bt) padded coords

    # ---- layer 0 on the MXU: bias folded in via the ones row of xpad --------
    pre = jnp.dot(vec[:, :XPAD], xpad,
                  preferred_element_type=jnp.float32)      # (H, Bt)
    h = jnp.sin(pre)                                       # lane-dense (H, Bt)

    # ---- hidden SineLayers: sin(Wh_l' @ h + bh_l') on the MXU ---------------
    # TODO(synk): per review, bias could be pre-broadcast lane-wise in the slab
    # to shave one lane broadcast per layer; kept as a (H,1) broadcast for now.
    for l in range(HIDDEN_LAYERS):                         # static unroll
        w = p_ref[0, l * H:(l + 1) * H, :]                 # (H, H)
        b = vec[:, COL_BH + l:COL_BH + l + 1]              # (H, 1)
        h = jnp.sin(jnp.dot(w, h, preferred_element_type=jnp.float32) + b)

    # ---- last layer (OUT=1): VPU multiply + sublane reduce (XLU) ------------
    wo = vec[:, COL_WO:COL_WO + 1]                         # (H, 1)
    bo = vec[0:1, COL_BO:COL_BO + 1]                       # (1, 1)
    y = jnp.sum(wo * h, axis=0, keepdims=True) + bo        # (1, Bt)
    if not OUTERMOST_LINEAR:
        y = jnp.sin(y)                                     # omega already folded
    o_ref[0] = y.astype(o_ref.dtype)


# ------------------------------- wrappers ------------------------------------
def _batch_tile(B):
    if B % B_TILE_DEFAULT == 0:
        return B_TILE_DEFAULT
    assert B % 128 == 0, "batch (lane) dimension must be a multiple of 128"
    return B


@jax.jit
def siren_collection_forward_batched(x_pad, n, packed_params):
    """Overhead-amortized multi-query forward.

    x_pad         : (Q, XPAD, B) f32 -- rows 0..IN-1 are coords.T, row IN is
                    all ones, remaining rows zero (see pad_coords()).
    n             : (Q,) int32 -- siren index per query.
    packed_params : (NUM_SIRENS, PACK_ROWS, HIDDEN_FEATURES) f32 slab.
    returns       : (Q, OUT_FEATURES, B) f32
    """
    Q, P, B = x_pad.shape
    S, ROWS, H = packed_params.shape
    bt = _batch_tile(B)
    n = jnp.clip(n.astype(jnp.int32).reshape((Q,)), 0, S - 1)

    grid_spec = pltpu.PrefetchScalarGridSpec(
        num_scalar_prefetch=1,
        # batch innermost: the 12 KB param block stays VMEM-resident across all
        # batch tiles of one query (index_map below depends only on q).
        grid=(Q, B // bt),
        in_specs=[
            pl.BlockSpec((1, XPAD, bt), lambda q, b, n: (q, 0, b)),
            pl.BlockSpec((1, ROWS, H), lambda q, b, n: (n[q], 0, 0)),
        ],
        out_specs=pl.BlockSpec((1, OUT_FEATURES, bt), lambda q, b, n: (q, 0, b)),
    )

    return pl.pallas_call(
        siren_kernel,
        out_shape=jax.ShapeDtypeStruct((Q, OUT_FEATURES, B), jnp.float32),
        grid_spec=grid_spec,
        compiler_params=pltpu.CompilerParams(
            dimension_semantics=("parallel", "arbitrary")),
    )(n, x_pad, packed_params)


def pad_coords(x):
    """(Q, B, IN) coords -> (Q, XPAD, B) transposed + padded slab for layer 0."""
    Q, B, IN = x.shape
    xT = jnp.swapaxes(x, 1, 2)                             # (Q, IN, B)
    ones = jnp.ones((Q, 1, B), x.dtype)
    zeros = jnp.zeros((Q, XPAD - IN - 1, B), x.dtype)
    return jnp.concatenate([xT, ones, zeros], axis=1)


@jax.jit
def siren_collection_forward(x, n, packed_params):
    """PyTorch-compatible SirenCollection.forward(x, n): (B, IN) -> (B, OUT)."""
    x_pad = pad_coords(x[None])                            # (1, XPAD, B)
    n = jnp.asarray(n, jnp.int32).reshape((1,))
    y = siren_collection_forward_batched(x_pad, n, packed_params)  # (1, OUT, B)
    return y[0].T                                          # (B, OUT)


# ----------------------- deterministic parameter init ------------------------
def init_raw_params(key):
    """Raw (un-scaled, PyTorch-layout) parameters mimicking SineLayer init."""
    S, IN, H, L, OUT = (NUM_SIRENS, IN_FEATURES, HIDDEN_FEATURES,
                        HIDDEN_LAYERS, OUT_FEATURES)
    ks = jax.random.split(key, 6)

    w1 = jax.random.uniform(ks[0], (S, H, IN), jnp.float32, -1.0 / IN, 1.0 / IN)
    b1 = jax.random.uniform(ks[1], (S, H), jnp.float32,
                            -1.0 / jnp.sqrt(IN), 1.0 / jnp.sqrt(IN))

    hb = float(jnp.sqrt(6.0 / H) / HIDDEN_OMEGA_0)
    wh = jax.random.uniform(ks[2], (S, L, H, H), jnp.float32, -hb, hb)
    bh = jax.random.uniform(ks[3], (S, L, H), jnp.float32,
                            -1.0 / jnp.sqrt(H), 1.0 / jnp.sqrt(H))

    wo = jax.random.uniform(ks[4], (S, OUT, H), jnp.float32, -hb, hb)
    bo = jax.random.uniform(ks[5], (S, OUT), jnp.float32,
                            -1.0 / jnp.sqrt(H), 1.0 / jnp.sqrt(H))
    return w1, b1, wh, bh, wo, bo


def pack_params(w1, b1, wh, bh, wo, bo):
    """Fold omegas into the parameters and pack into one (S, ROWS, H) slab."""
    S, H = w1.shape[0], HIDDEN_FEATURES
    base = HIDDEN_LAYERS * H
    o_scale = 1.0 if OUTERMOST_LINEAR else HIDDEN_OMEGA_0

    P = jnp.zeros((S, PACK_ROWS, H), jnp.float32)
    for l in range(HIDDEN_LAYERS):
        P = P.at[:, l * H:(l + 1) * H, :].set(HIDDEN_OMEGA_0 * wh[:, l])
    for i in range(IN_FEATURES):
        P = P.at[:, base:base + H, i].set(FIRST_OMEGA_0 * w1[:, :, i])
    P = P.at[:, base:base + H, COL_B1].set(FIRST_OMEGA_0 * b1)
    # cols COL_B1+1 .. XPAD-1 stay zero (match the zero pad rows of x_pad)
    for l in range(HIDDEN_LAYERS):
        P = P.at[:, base:base + H, COL_BH + l].set(HIDDEN_OMEGA_0 * bh[:, l])
    P = P.at[:, base:base + H, COL_WO].set(o_scale * wo[:, 0, :])
    P = P.at[:, base, COL_BO].set(o_scale * bo[:, 0])
    return P


# ------------------------------ reference ------------------------------------
def siren_reference(x, n_idx, w1, b1, wh, bh, wo, bo):
    """Pure-JAX reference straight from the raw (PyTorch-layout) params."""
    h = jnp.sin(FIRST_OMEGA_0 * (x @ w1[n_idx].T + b1[n_idx]))
    for l in range(HIDDEN_LAYERS):
        h = jnp.sin(HIDDEN_OMEGA_0 * (h @ wh[n_idx, l].T + bh[n_idx, l]))
    y = h @ wo[n_idx].T + bo[n_idx]
    if not OUTERMOST_LINEAR:
        y = jnp.sin(HIDDEN_OMEGA_0 * y)
    return y


if __name__ == "__main__":
    key = jax.random.PRNGKey(0)
    k_param, k_x = jax.random.split(key)

    raw_params = init_raw_params(k_param)
    packed = pack_params(*raw_params)

    # ---- multi-query, overhead-amortized path (primary API) ----------------
    Q, B = 3, 1024                                   # grid = (3 queries, 2 batch tiles)
    x = jax.random.uniform(k_x, (Q, B, IN_FEATURES), jnp.float32, -1.0, 1.0)
    n = jnp.array([7, 0, NUM_SIRENS - 1], dtype=jnp.int32)
    x_pad = pad_coords(x)

    out = jax.block_until_ready(siren_collection_forward_batched(x_pad, n, packed))
    assert out.shape == (Q, OUT_FEATURES, B)
    for q in range(Q):
        ref = siren_reference(x[q], int(n[q]), *raw_params)         # (B, OUT)
        err = float(jnp.max(jnp.abs(out[q].T - ref)))
        assert jnp.allclose(out[q].T, ref, atol=1e-4, rtol=1e-4), err

    # ---- single-query PyTorch-compatible path -------------------------------
    y1 = jax.block_until_ready(siren_collection_forward(x[0], 7, packed))
    ref1 = siren_reference(x[0], 7, *raw_params)
    assert y1.shape == (B, OUT_FEATURES)
    assert jnp.allclose(y1, ref1, atol=1e-4, rtol=1e-4), float(
        jnp.max(jnp.abs(y1 - ref1)))

    print("KERNEL_OK")
</pallas_src>

<mosaic_0001>
module attributes {stable_mosaic.version = 11 : i64} {
  func.func @siren_kernel(%arg0: i32, %arg1: i32, %arg2: memref<3xi32, #tpu.memory_space<smem>>, %arg3: memref<1x8x512xf32, #tpu.memory_space<vmem>>, %arg4: memref<1x96x32xf32, #tpu.memory_space<vmem>>, %arg5: memref<1x1x512xf32, #tpu.memory_space<vmem>>) attributes {dimension_semantics = [#tpu.dimension_semantics<parallel>, #tpu.dimension_semantics<arbitrary>], iteration_bounds = array<i64: 3, 2>, scalar_prefetch = 1 : i64, scratch_operands = 0 : i64, tpu.core_type = #tpu.core_type<tc>, window_params = [{transform_indices = @transform_0, window_bounds = array<i64: 1, 8, 512>}, {transform_indices = @transform_1, window_bounds = array<i64: 1, 96, 32>}, {transform_indices = @transform_2, window_bounds = array<i64: 1, 1, 512>}]} {
    %c0 = arith.constant 0 : index
    %c64 = arith.constant 64 : index
    %c0_0 = arith.constant 0 : index
    %0 = vector.load %arg4[%c0, %c64, %c0_0] : memref<1x96x32xf32, #tpu.memory_space<vmem>>, vector<1x32x32xf32>
    %1 = vector.shape_cast %0 : vector<1x32x32xf32> to vector<32x32xf32>
    %c0_1 = arith.constant 0 : index
    %c0_2 = arith.constant 0 : index
    %c0_3 = arith.constant 0 : index
    %2 = vector.load %arg3[%c0_1, %c0_2, %c0_3] : memref<1x8x512xf32, #tpu.memory_space<vmem>>, vector<1x8x512xf32>
    %3 = vector.shape_cast %2 : vector<1x8x512xf32> to vector<8x512xf32>
    %4 = vector.extract_strided_slice %1 {offsets = [0, 0], sizes = [32, 8], strides = [1, 1]} : vector<32x32xf32> to vector<32x8xf32>
    %cst = arith.constant dense<0.000000e+00> : vector<32x512xf32>
    %5 = tpu.matmul %4, %3, %cst {dimension_numbers = #tpu.dot_dimension_numbers<[1], [0], [0], [1], [0, 0, 1, 1], [], []>} : vector<32x8xf32>, vector<8x512xf32>, vector<32x512xf32> -> vector<32x512xf32>
    %6 = math.sin %5 : vector<32x512xf32>
    %c0_4 = arith.constant 0 : index
    %c0_5 = arith.constant 0 : index
    %c0_6 = arith.constant 0 : index
    %7 = vector.load %arg4[%c0_4, %c0_5, %c0_6] : memref<1x96x32xf32, #tpu.memory_space<vmem>>, vector<1x32x32xf32>
    %8 = vector.shape_cast %7 : vector<1x32x32xf32> to vector<32x32xf32>
    %9 = vector.extract_strided_slice %1 {offsets = [0, 8], sizes = [32, 1], strides = [1, 1]} : vector<32x32xf32> to vector<32x1xf32>
    %cst_7 = arith.constant dense<0.000000e+00> : vector<32x512xf32>
    %10 = tpu.matmul %8, %6, %cst_7 {dimension_numbers = #tpu.dot_dimension_numbers<[1], [0], [0], [1], [0, 0, 1, 1], [], []>} : vector<32x32xf32>, vector<32x512xf32>, vector<32x512xf32> -> vector<32x512xf32>
    %11 = vector.broadcast %9 : vector<32x1xf32> to vector<32x512xf32>
    %12 = arith.addf %10, %11 : vector<32x512xf32>
    %13 = math.sin %12 : vector<32x512xf32>
    %c0_8 = arith.constant 0 : index
    %c32 = arith.constant 32 : index
    %c0_9 = arith.constant 0 : index
    %14 = vector.load %arg4[%c0_8, %c32, %c0_9] : memref<1x96x32xf32, #tpu.memory_space<vmem>>, vector<1x32x32xf32>
    %15 = vector.shape_cast %14 : vector<1x32x32xf32> to vector<32x32xf32>
    %16 = vector.extract_strided_slice %1 {offsets = [0, 9], sizes = [32, 1], strides = [1, 1]} : vector<32x32xf32> to vector<32x1xf32>
    %cst_10 = arith.constant dense<0.000000e+00> : vector<32x512xf32>
    %17 = tpu.matmul %15, %13, %cst_10 {dimension_numbers = #tpu.dot_dimension_numbers<[1], [0], [0], [1], [0, 0, 1, 1], [], []>} : vector<32x32xf32>, vector<32x512xf32>, vector<32x512xf32> -> vector<32x512xf32>
    %18 = vector.broadcast %16 : vector<32x1xf32> to vector<32x512xf32>
    %19 = arith.addf %17, %18 : vector<32x512xf32>
    %20 = math.sin %19 : vector<32x512xf32>
    %21 = vector.extract_strided_slice %1 {offsets = [0, 10], sizes = [32, 1], strides = [1, 1]} : vector<32x32xf32> to vector<32x1xf32>
    %22 = vector.extract_strided_slice %1 {offsets = [0, 11], sizes = [1, 1], strides = [1, 1]} : vector<32x32xf32> to vector<1x1xf32>
    %23 = vector.broadcast %21 : vector<32x1xf32> to vector<32x512xf32>
    %24 = arith.mulf %23, %20 : vector<32x512xf32>
    %cst_11 = arith.constant dense<0.000000e+00> : vector<512xf32>
    %25 = vector.multi_reduction <add>, %24, %cst_11 [0] : vector<32x512xf32> to vector<512xf32>
    %26 = vector.shape_cast %25 : vector<512xf32> to vector<1x512xf32>
    %27 = vector.broadcast %22 : vector<1x1xf32> to vector<1x512xf32>
    %28 = arith.addf %26, %27 : vector<1x512xf32>
    %29 = math.sin %28 : vector<1x512xf32>
    %c0_12 = arith.constant 0 : index
    %c0_13 = arith.constant 0 : index
    %c0_14 = arith.constant 0 : index
    %30 = vector.load %arg5[%c0_12, %c0_13, %c0_14] : memref<1x1x512xf32, #tpu.memory_space<vmem>>, vector<1x1x512xf32>
    %31 = vector.shape_cast %30 : vector<1x1x512xf32> to vector<1x512xf32>
    %32 = vector.shape_cast %29 : vector<1x512xf32> to vector<1x1x512xf32>
    tpu.vector_store %arg5[%c0_12, %c0_13, %c0_14], %32 {strides = array<i32>} : memref<1x1x512xf32, #tpu.memory_space<vmem>>, vector<1x1x512xf32>,
    return
  }
  func.func @transform_0(%arg0: i32, %arg1: i32, %arg2: memref<3xi32, #tpu.memory_space<smem>>) -> (i32, i32, i32) {
    %c0_i32 = arith.constant 0 : i32
    %c0_i32_0 = arith.constant 0 : i32
    return %arg0, %c0_i32, %arg1 : i32, i32, i32
  }
  func.func @transform_1(%arg0: i32, %arg1: i32, %arg2: memref<3xi32, #tpu.memory_space<smem>>) -> (i32, i32, i32) {
    %0 = arith.index_cast %arg0 : i32 to index
    %1 = memref.load %arg2[%0] : memref<3xi32, #tpu.memory_space<smem>>
    %c0_i32 = arith.constant 0 : i32
    %c0_i32_0 = arith.constant 0 : i32
    %c0_i32_1 = arith.constant 0 : i32
    return %1, %c0_i32, %c0_i32_0 : i32, i32, i32
  }
  func.func @transform_2(%arg0: i32, %arg1: i32, %arg2: memref<3xi32, #tpu.memory_space<smem>>) -> (i32, i32, i32) {
    %c0_i32 = arith.constant 0 : i32
    %c0_i32_0 = arith.constant 0 : i32
    return %arg0, %c0_i32, %arg1 : i32, i32, i32
  }
}

</mosaic_0001>

<llo_original>
// kernel: siren_collection_forward_batched.1
$region0: #{siren_collection_forward_batched.1}
  #allocation0 [shape = 'u32[]', space=smem, size = 0x4, offset = 0x4, fixed_abs, tag = 'smem constant byte address 0x4 - core index']
  #allocation1 [shape = 'u32[144,128]{1,0:T(1,128)}', space=vmem, size = 0x12000, scoped, tag = 'internal scratch']
  #allocation2 [shape = 's32[1]{0}', space=sflag, size = 0x4, scoped, tag = 'scoped memory for siren_collection_forward_batched.1']
  #allocation3 [shape = 'u8[512]{0}', space=smem, size = 0x200, scoped, tag = 'prefetched SMEM operand 0']
  %s0 = inlined_call_operand.vmem [shape: s32[3], index: 0, kind: input, shape index: {}]
  %s1 = inlined_call_operand.vmem [shape: f32[3,8,1024], index: 1, kind: input, shape index: {}]
  %s2 = inlined_call_operand.vmem [shape: f32[100,96,32], index: 2, kind: input, shape index: {}]
  %s3 = inlined_call_operand.hbm [shape: f32[3,1,1024], index: 3, kind: output, shape index: {}]
  %s4 = sld [smem:[#allocation0]]
  $region41: #{siren_collection_forward_batched.1} parent=0
    _
  %s6 = ssub.s32 1, %s4
  %s7 = scalar_select 0, %s6, %s4
  %s8 = sshll.u32 %s0, 4
  %s9 = int_to_ptr.vmem [resolvable:$true] %s8
  %11 = dma.vmem_to_smem %s9, 16, [#allocation3], [#allocation2]
  %12 = dma.done [#allocation2], 16
  %13 = sfence
  $region1: #{siren_collection_forward_batched.1} parent=0
    #allocation4 [shape = 'u8[4096]{0}', space=vmem, size = 0x1000, scoped, tag = 'output window, operand 0']
    #allocation5 [shape = 's32[2]{0}', space=sflag, size = 0x8, scoped, tag = 'scoped memory for siren_collection_forward_batched.1']
    %14 = vsyncpa [#allocation5], 0
    %s15 = scalar_lea.sflag [#allocation5], 1
    %16 = vsyncpa %s15, 0
    loop: start=0, step=1, limit=8
    $region2: #{siren_collection_forward_batched.1} parent=1 // loop_pre_header
      _
    $region3: #{siren_collection_forward_batched.1} parent=1 // loop_header
      %s18 = sphi 0, %s22
      %p19 = scmp.ge.s32.totalorder %s18, 8
      %s25 = sphi 0, %s37
      %s26 = sphi 0, %s33
      %s27 = sphi 0, %s25
      %s28 = sphi 0, %s26
      %s29 = sphi 0, %s27
      %s30 = sphi 0, %s28
      %s42 = sphi 0, %s44
      %s45 = sphi 0, %s42
      %s46 = sphi 0, %s45
      %s62 = sphi 0, %s46
      %s70 = sphi 0, %s72
      %s73 = sphi 0, %s70
      %s74 = sphi 0, %s73
      %s90 = sphi 0, %s74
      %s98 = sphi 0, %s100
      %s101 = sphi 0, %s98
      %s102 = sphi 0, %s101
      %s118 = sphi 0, %s102
    $region4: #{siren_collection_forward_batched.1} parent=1 // loop_header_branch
      %21 = sbr.rel (%p19) target = $region8
    $region5: #{siren_collection_forward_batched.1} parent=1 // loop_body
      %s23 = ssub.s32 %s18, 1
      %s24 = ssub.s32 %s18, 2
      %s31 = sadd.s32 1, %s26
      %p32 = scmp.ge.s32.totalorder %s31, 2
      %s33 = scalar_select %p32, 0, %s31
      %s34 = sadd.s32 1, %s25
      %s35 = scalar_select %p32, %s34, %s25
      %p36 = scmp.ge.s32.totalorder %s35, 3
      %s37 = scalar_select %p36, 0, %s35
      %s38 = ssub.s32 %s25, %s37
      %s39 = ssub.s32 %s26, %s33
      %s40 = sor.u32 %s38, %s39
      %p41 = scmp.eq.s32.totalorder %s40, 0
      %s43 = sadd.s32 %s42, 1
      %s44 = scalar_select %p41, %s42, %s43
      %p47 = pneg %p41
      %p48 = scmp.eq.s32.totalorder %s18, 5
      %p49 = por %p47, %p48
      %p50 = scmp.ne.s32.totalorder %s42, %s45
      %p51 = scmp.eq.s32.totalorder %s18, 0
      %p52 = por %p50, %p51
      %p53 = scmp.ne.s32.totalorder %s42, %s45
      %p54 = scmp.eq.s32.totalorder %s23, 5
      %p55 = por %p53, %p54
      %p56 = scmp.ne.s32.totalorder %s45, %s46
      %p57 = scmp.eq.s32.totalorder %s23, 0
      %p58 = por %p56, %p57
      %p59 = scmp.ne.s32.totalorder %s45, %s46
      %p60 = scmp.eq.s32.totalorder %s24, 5
      %p61 = por %p59, %p60
      %p63 = scmp.ne.s32.totalorder %s46, %s62
      %p64 = scmp.eq.s32.totalorder %s24, 0
      %p65 = por %p63, %p64
      %s66 = sld [smem:[#allocation3 + %s25]]
      %s67 = sld [smem:[#allocation3 + %s37]]
      %s68 = ssub.s32 %s66, %s67
      %p69 = scmp.eq.s32.totalorder %s68, 0
      %s71 = sadd.s32 %s70, 1
      %s72 = scalar_select %p69, %s70, %s71
      %p75 = pneg %p69
      %p76 = scmp.eq.s32.totalorder %s18, 5
      %p77 = por %p75, %p76
      %p78 = scmp.ne.s32.totalorder %s70, %s73
      %p79 = scmp.eq.s32.totalorder %s18, 0
      %p80 = por %p78, %p79
      %p81 = scmp.ne.s32.totalorder %s70, %s73
      %p82 = scmp.eq.s32.totalorder %s23, 5
      %p83 = por %p81, %p82
      %p84 = scmp.ne.s32.totalorder %s73, %s74
      %p85 = scmp.eq.s32.totalorder %s23, 0
      %p86 = por %p84, %p85
      %p87 = scmp.ne.s32.totalorder %s73, %s74
      %p88 = scmp.eq.s32.totalorder %s24, 5
      %p89 = por %p87, %p88
      %p91 = scmp.ne.s32.totalorder %s74, %s90
      %p92 = scmp.eq.s32.totalorder %s24, 0
      %p93 = por %p91, %p92
      %s94 = ssub.s32 %s25, %s37
      %s95 = ssub.s32 %s26, %s33
      %s96 = sor.u32 %s94, %s95
      %p97 = scmp.eq.s32.totalorder %s96, 0
      %s99 = sadd.s32 %s98, 1
      %s100 = scalar_select %p97, %s98, %s99
      %p103 = pneg %p97
      %p104 = scmp.eq.s32.totalorder %s18, 5
      %p105 = por %p103, %p104
      %p106 = scmp.ne.s32.totalorder %s98, %s101
      %p107 = scmp.eq.s32.totalorder %s18, 0
      %p108 = por %p106, %p107
      %p109 = scmp.ne.s32.totalorder %s98, %s101
      %p110 = scmp.eq.s32.totalorder %s23, 5
      %p111 = por %p109, %p110
      %p112 = scmp.ne.s32.totalorder %s101, %s102
      %p113 = scmp.eq.s32.totalorder %s23, 0
      %p114 = por %p112, %p113
      %p115 = scmp.ne.s32.totalorder %s101, %s102
      %p116 = scmp.eq.s32.totalorder %s24, 5
      %p117 = por %p115, %p116
      %p119 = scmp.ne.s32.totalorder %s102, %s118
      %p120 = scmp.eq.s32.totalorder %s24, 0
      %p121 = por %p119, %p120
      %p122 = scmp.le.s32.totalorder 1, %s18
      %p123 = scmp.lt.s32.totalorder %s18, 7
      %p124 = pnand %p122, %p123
      %p125 = pneg %p124
      // Predicated region
      $region9: #{siren_collection_forward_batched.1} parent=5 // pred_check
        _
      $region10: #{siren_collection_forward_batched.1} parent=5 // pred_check_branch
        %127 = sbr.rel (%p124) target = $region12
      $region11: #{siren_collection_forward_batched.1} parent=5 // pred_region
        %s128 = ssub.s32 %s18, 1
      $region12: #{siren_collection_forward_batched.1} parent=5 // pred_fallthru
        _
      %p129 = scmp.lt.s32.totalorder %s18, 6
      // Predicated region
      $region13: #{siren_collection_forward_batched.1} parent=5 // pred_check
        %p130 = pneg %p129
      $region14: #{siren_collection_forward_batched.1} parent=5 // pred_check_branch
        %132 = sbr.rel (%p130) target = $region16
      $region15: #{siren_collection_forward_batched.1} parent=5 // pred_region
        // Predicated region
        $region17: #{siren_collection_forward_batched.1} parent=15 // pred_check
          %p133 = pneg %p52
        $region18: #{siren_collection_forward_batched.1} parent=15 // pred_check_branch
          %135 = sbr.rel (%p133) target = $region20
        $region19: #{siren_collection_forward_batched.1} parent=15 // pred_region
          %s136 = smul.u32 4, %s26
          %p137 = scmp.lt.s32.totalorder %s25, 2
          %s138 = scalar_select %p137, %s25, 2
          %p139 = scmp.lt.s32.totalorder %s136, 7
          %s140 = scalar_select %p139, %s136, 7
          %s141 = smul.addr %s138, 8
          %s142 = sadd.s32 %s140, %s141
          %s143 = smul.addr %s142, 8
          %s144 = scalar_lea.vmem %s1, %s143
          %s145 = smul.u32 4, %s26
        $region20: #{siren_collection_forward_batched.1} parent=15 // pred_fallthru
          _
        // Predicated region
        $region21: #{siren_collection_forward_batched.1} parent=15 // pred_check
          %p146 = pneg %p80
        $region22: #{siren_collection_forward_batched.1} parent=15 // pred_check_branch
          %148 = sbr.rel (%p146) target = $region24
        $region23: #{siren_collection_forward_batched.1} parent=15 // pred_region
          %s149 = sld [smem:[#allocation3 + %s25]]
          %p150 = scmp.lt.s32.totalorder %s149, 99
          %s151 = scalar_select %p150, %s149, 99
          %s152 = smul.addr %s151, 12
          %s153 = smul.addr %s152, 8
          %s154 = scalar_lea.vmem %s2, %s153
          %s155 = sld [smem:[#allocation3 + %s25]]
        $region24: #{siren_collection_forward_batched.1} parent=15 // pred_fallthru
          _
      $region16: #{siren_collection_forward_batched.1} parent=5 // pred_fallthru
        _
      %p156 = scmp.le.s32.totalorder 1, %s18
      %p157 = scmp.lt.s32.totalorder %s18, 7
      %p158 = pnand %p156, %p157
      %p159 = pneg %p158
      // Predicated region
      $region25: #{siren_collection_forward_batched.1} parent=5 // pred_check
        _
      $region26: #{siren_collection_forward_batched.1} parent=5 // pred_check_branch
        %161 = sbr.rel (%p158) target = $region28
      $region27: #{siren_collection_forward_batched.1} parent=5 // pred_region
        %s162 = ssub.s32 %s18, 1
        %s163 = smul.u32 4, %s28
        %p164 = scmp.lt.s32.totalorder %s27, 2
        %s165 = scalar_select %p164, %s27, 2
        %p166 = scmp.lt.s32.totalorder %s163, 7
        %s167 = scalar_select %p166, %s163, 7
        %s168 = smul.addr %s165, 8
        %s169 = sadd.s32 %s167, %s168
        %s170 = smul.addr %s169, 8
        %s171 = scalar_lea.vmem %s1, %s170
        %p172 = pneg %p58
        %p173 = pneg %p55
        %s174 = sld [smem:[#allocation3 + %s27]]
        %p175 = scmp.lt.s32.totalorder %s174, 99
        %s176 = scalar_select %p175, %s174, 99
        %s177 = smul.addr %s176, 12
        %s178 = smul.addr %s177, 8
        %s179 = scalar_lea.vmem %s2, %s178
        %p180 = pneg %p86
        %p181 = pneg %p83
        %p182 = pneg %p114
        %p183 = pneg %p111
        %s184 = sand.u32 %s101, 1
        %s185 = scalar_lea.sflag [#allocation5], %s184
        %s186 = sand.u32 %s101, 1
        %s187 = smul.addr %s186, 4
        %s188 = scalar_lea.vmem [#allocation4], %s187
        %s189 = smul.u32 4, %s28
        %p190 = scmp.lt.s32.totalorder %s27, 2
        %s191 = scalar_select %p190, %s27, 2
        %p192 = scmp.lt.s32.totalorder %s189, 7
        %s193 = scalar_select %p192, %s189, 7
        %s194 = smul.addr %s191, 8
        %s195 = sadd.s32 %s193, %s194
        %s196 = smul.addr %s195, 8
        %s197 = scalar_lea.vmem %s1, %s196
        %s198 = smul.u32 4, %s28
        %s199 = sld [smem:[#allocation3 + %s27]]
        %p200 = scmp.lt.s32.totalorder %s199, 99
        %s201 = scalar_select %p200, %s199, 99
        %s202 = smul.addr %s201, 12
        %s203 = smul.addr %s202, 8
        %s204 = scalar_lea.vmem %s2, %s203
        %s205 = sld [smem:[#allocation3 + %s27]]
        %s206 = smul.u32 4, %s28
        %v207 = vld [vmem:[%s204 + $0x40] sm:$0xff]
        %v208 = vld [vmem:[%s204 + $0x48] sm:$0xff]
        %v209 = vld [vmem:[%s204 + $0x50] sm:$0xff]
        %v210 = vld [vmem:[%s204 + $0x58] sm:$0xff]
        %v211 = vld [vmem:[%s197] sm:$0xff]
        %v212 = vld [vmem:[%s197 + $0x8] sm:$0xff]
        %v213 = vld [vmem:[%s197 + $0x10] sm:$0xff]
        %v214 = vld [vmem:[%s197 + $0x18] sm:$0xff]
        %vm215 = vcmask 64512
        %v217 = vsel %vm215, %v207, 0
        %v220 = vsel %vm215, %v208, 0
        %v223 = vsel %vm215, %v209, 0
        %v226 = vsel %vm215, %v210, 0
        %228 = vmatprep.subr.mxu0 %v212
        %229 = vmatpush1.msra.mxu0 %v211
        %230 = vmatprep.subr.mxu0 0.0
        %231 = vmatpush1.msra.mxu0 0.0
        %232 = vmatprep.subr.mxu0 0.0
        %233 = vmatpush1.msra.mxu0 0.0
        %234 = vmatprep.subr.mxu0 0.0
        %235 = vmatpush1.msra.mxu0 0.0
        %236 = vmatprep.subr.mxu0 0.0
        %237 = vmatpush1.msra.mxu0 0.0
        %238 = vmatprep.subr.mxu0 0.0
        %239 = vmatpush1.msra.mxu0 0.0
        %240 = vmatprep.subr.mxu0 0.0
        %241 = vmatpush1.msra.mxu0 0.0
        %242 = vmatprep.subr.mxu0 0.0
        %243 = vmatpush1.msra.mxu0 0.0
        %244 = vmatprep.subr.mxu0 0.0
        %245 = vmatpush1.msra.mxu0 0.0
        %246 = vmatprep.subr.mxu0 0.0
        %247 = vmatpush1.msra.mxu0 0.0
        %248 = vmatprep.subr.mxu0 0.0
        %249 = vmatpush1.msra.mxu0 0.0
        %250 = vmatprep.subr.mxu0 0.0
        %251 = vmatpush1.msra.mxu0 0.0
        %252 = vmatprep.subr.mxu0 0.0
        %253 = vmatpush1.msra.mxu0 0.0
        %254 = vmatprep.subr.mxu0 0.0
        %255 = vmatpush1.msra.mxu0 0.0
        %256 = vmatprep.subr.mxu0 0.0
        %257 = vmatpush1.msra.mxu0 0.0
        %258 = vmatprep.subr.mxu0 0.0
        %259 = vmatpush1.msra.mxu0 0.0
        %260 = vmatprep.subr.mxu0 0.0
        %261 = vmatpush1.msra.mxu0 0.0
        %262 = vmatprep.subr.mxu0 0.0
        %263 = vmatpush1.msra.mxu0 0.0
        %264 = vmatprep.subr.mxu0 0.0
        %265 = vmatpush1.msra.mxu0 0.0
        %266 = vmatprep.subr.mxu0 0.0
        %267 = vmatpush1.msra.mxu0 0.0
        %268 = vmatprep.subr.mxu0 0.0
        %269 = vmatpush1.msra.mxu0 0.0
        %270 = vmatprep.subr.mxu0 0.0
        %271 = vmatpush1.msra.mxu0 0.0
        %272 = vmatprep.subr.mxu0 0.0
        %273 = vmatpush1.msra.mxu0 0.0
        %274 = vmatprep.subr.mxu0 0.0
        %275 = vmatpush1.msra.mxu0 0.0
        %276 = vmatprep.subr.mxu0 0.0
        %277 = vmatpush1.msra.mxu0 0.0
        %278 = vmatprep.subr.mxu0 0.0
        %279 = vmatpush1.msra.mxu0 0.0
        %280 = vmatprep.subr.mxu0 0.0
        %281 = vmatpush1.msra.mxu0 0.0
        %282 = vmatprep.subr.mxu0 0.0
        %283 = vmatpush1.msra.mxu0 0.0
        %284 = vmatprep.subr.mxu0 0.0
        %285 = vmatpush1.msra.mxu0 0.0
        %286 = vmatprep.subr.mxu0 0.0
        %287 = vmatpush1.msra.mxu0 0.0
        %288 = vmatprep.subr.mxu0 0.0
        %289 = vmatpush1.msra.mxu0 0.0
        %290 = vmatprep.subr.mxu0 0.0
        %291 = vmatpush1.msra.mxu0 0.0
        %292 = vmatprep.mubr.f32.mxu0 0.0
        %293 = vmatmul.mubr.f32.gmra.mrb[0].mxu0 %v217
        %v294 = vpop.f32.mrb[0].mxu0
        %v295 = vadd.f32 0.0, %v294
        %v296 = vpop.f32.mrb[0].mxu0
        %v297 = vadd.f32 0.0, %v296
        %298 = vmatprep.mubr.f32.mxu0 0.0
        %299 = vmatmul.mubr.f32.gmra.mrb[0].mxu0 %v220
        %v300 = vpop.f32.mrb[0].mxu0
        %v301 = vadd.f32 0.0, %v300
        %v302 = vpop.f32.mrb[0].mxu0
        %v303 = vadd.f32 0.0, %v302
        %304 = vmatprep.mubr.f32.mxu0 0.0
        %305 = vmatmul.mubr.f32.gmra.mrb[0].mxu0 %v223
        %v306 = vpop.f32.mrb[0].mxu0
        %v307 = vadd.f32 0.0, %v306
        %v308 = vpop.f32.mrb[0].mxu0
        %v309 = vadd.f32 0.0, %v308
        %310 = vmatprep.mubr.f32.mxu0 0.0
        %311 = vmatmul.mubr.f32.gmra.mrb[0].mxu0 %v226
        %v312 = vpop.f32.mrb[0].mxu0
        %v313 = vadd.f32 0.0, %v312
        %v314 = vpop.f32.mrb[0].mxu0
        %v315 = vadd.f32 0.0, %v314
        %316 = vdwg.mxu0
        %317 = vmatprep.subr.mxu0 %v214
        %318 = vmatpush1.msra.mxu0 %v213
        %319 = vmatprep.subr.mxu0 0.0
        %320 = vmatpush1.msra.mxu0 0.0
        %321 = vmatprep.subr.mxu0 0.0
        %322 = vmatpush1.msra.mxu0 0.0
        %323 = vmatprep.subr.mxu0 0.0
        %324 = vmatpush1.msra.mxu0 0.0
        %325 = vmatprep.subr.mxu0 0.0
        %326 = vmatpush1.msra.mxu0 0.0
        %327 = vmatprep.subr.mxu0 0.0
        %328 = vmatpush1.msra.mxu0 0.0
        %329 = vmatprep.subr.mxu0 0.0
        %330 = vmatpush1.msra.mxu0 0.0
        %331 = vmatprep.subr.mxu0 0.0
        %332 = vmatpush1.msra.mxu0 0.0
        %333 = vmatprep.subr.mxu0 0.0
        %334 = vmatpush1.msra.mxu0 0.0
        %335 = vmatprep.subr.mxu0 0.0
        %336 = vmatpush1.msra.mxu0 0.0
        %337 = vmatprep.subr.mxu0 0.0
        %338 = vmatpush1.msra.mxu0 0.0
        %339 = vmatprep.subr.mxu0 0.0
        %340 = vmatpush1.msra.mxu0 0.0
        %341 = vmatprep.subr.mxu0 0.0
        %342 = vmatpush1.msra.mxu0 0.0
        %343 = vmatprep.subr.mxu0 0.0
        %344 = vmatpush1.msra.mxu0 0.0
        %345 = vmatprep.subr.mxu0 0.0
        %346 = vmatpush1.msra.mxu0 0.0
        %347 = vmatprep.subr.mxu0 0.0
        %348 = vmatpush1.msra.mxu0 0.0
        %349 = vmatprep.subr.mxu0 0.0
        %350 = vmatpush1.msra.mxu0 0.0
        %351 = vmatprep.subr.mxu0 0.0
        %352 = vmatpush1.msra.mxu0 0.0
        %353 = vmatprep.subr.mxu0 0.0
        %354 = vmatpush1.msra.mxu0 0.0
        %355 = vmatprep.subr.mxu0 0.0
        %356 = vmatpush1.msra.mxu0 0.0
        %357 = vmatprep.subr.mxu0 0.0
        %358 = vmatpush1.msra.mxu0 0.0
        %359 = vmatprep.subr.mxu0 0.0
        %360 = vmatpush1.msra.mxu0 0.0
        %361 = vmatprep.subr.mxu0 0.0
        %362 = vmatpush1.msra.mxu0 0.0
        %363 = vmatprep.subr.mxu0 0.0
        %364 = vmatpush1.msra.mxu0 0.0
        %365 = vmatprep.subr.mxu0 0.0
        %366 = vmatpush1.msra.mxu0 0.0
        %367 = vmatprep.subr.mxu0 0.0
        %368 = vmatpush1.msra.mxu0 0.0
        %369 = vmatprep.subr.mxu0 0.0
        %370 = vmatpush1.msra.mxu0 0.0
        %371 = vmatprep.subr.mxu0 0.0
        %372 = vmatpush1.msra.mxu0 0.0
        %373 = vmatprep.subr.mxu0 0.0
        %374 = vmatpush1.msra.mxu0 0.0
        %375 = vmatprep.subr.mxu0 0.0
        %376 = vmatpush1.msra.mxu0 0.0
        %377 = vmatprep.subr.mxu0 0.0
        %378 = vmatpush1.msra.mxu0 0.0
        %379 = vmatprep.subr.mxu0 0.0
        %380 = vmatpush1.msra.mxu0 0.0
        %381 = vmatprep.mubr.f32.mxu0 0.0
        %382 = vmatmul.mubr.f32.gmra.mrb[0].mxu0 %v217
        %v383 = vpop.f32.mrb[0].mxu0
        %v384 = vadd.f32 0.0, %v383
        %v385 = vpop.f32.mrb[0].mxu0
        %v386 = vadd.f32 0.0, %v385
        %387 = vmatprep.mubr.f32.mxu0 0.0
        %388 = vmatmul.mubr.f32.gmra.mrb[0].mxu0 %v220
        %v389 = vpop.f32.mrb[0].mxu0
        %v390 = vadd.f32 0.0, %v389
        %v391 = vpop.f32.mrb[0].mxu0
        %v392 = vadd.f32 0.0, %v391
        %393 = vmatprep.mubr.f32.mxu0 0.0
        %394 = vmatmul.mubr.f32.gmra.mrb[0].mxu0 %v223
        %v395 = vpop.f32.mrb[0].mxu0
        %v396 = vadd.f32 0.0, %v395
        %v397 = vpop.f32.mrb[0].mxu0
        %v398 = vadd.f32 0.0, %v397
        %399 = vmatprep.mubr.f32.mxu0 0.0
        %400 = vmatmul.mubr.f32.gmra.mrb[0].mxu0 %v226
        %v401 = vpop.f32.mrb[0].mxu0
        %v402 = vadd.f32 0.0, %v401
        %v403 = vpop.f32.mrb[0].mxu0
        %v404 = vadd.f32 0.0, %v403
        %405 = vdwg.mxu0
        %v406 = vand.u32 2147483647, %v295
        %vm407 = vcmp.le.f32.partialorder %v406, 0.7853982
        %vm408 = vcmp.lt.s32.totalorder %v295, 0
        %v409 = vand.u32 %v295, 2139095040
        %v410 = vshrl.u32 %v409, 23
        %v411 = vsub.s32 %v410, 127
        %v412 = vand.u32 2147483647, %v295
        %v413 = vand.u32 %v412, 8388607
        %v414 = vor.u32 %v413, 8388608
        %v415 = vsub.s32 0, %v414
        %v416 = vadd.s32 %v411, 1
        %vm417 = vcmp.gt.s32.totalorder %v416, 0
        %v418 = vsel %vm417, %v416, 0
        %v419 = vshrl.u32 %v418, 5
        %v420 = vand.u32 %v418, 31
        %v421 = vsub.s32 32, %v420
        %v422 = vshrl.u32 683565275, %v421
        %v423 = vshll.u32 683565275, %v420
        %v424 = vshrl.u32 2475754826, %v421
        %v425 = vor.u32 %v423, %v424
        %v426 = vshll.u32 2475754826, %v420
        %v427 = vshrl.u32 2131351028, %v421
        %v428 = vor.u32 %v426, %v427
        %v429 = vshll.u32 2131351028, %v420
        %v430 = vshrl.u32 2102212464, %v421
        %v431 = vor.u32 %v429, %v430
        %v432 = vshll.u32 2102212464, %v420
        %v433 = vshrl.u32 920167782, %v421
        %v434 = vor.u32 %v432, %v433
        %v435 = vshll.u32 920167782, %v420
        %v436 = vshrl.u32 1326507024, %v421
        %v437 = vor.u32 %v435, %v436
        %vm438 = vcmp.lt.s32.totalorder %v419, 1
        %vm439 = vcmp.lt.s32.totalorder %v419, 2
        %vm440 = vcmp.lt.s32.totalorder %v419, 3
        %vm441 = vcmp.lt.s32.totalorder %v419, 4
        %v442 = vsel %vm438, %v422, %v425
        %v443 = vsel %vm441, %v431, 2102212464
        %v444 = vsel %vm440, %v428, %v443
        %v445 = vsel %vm439, %v442, %v444
        %v446 = vsel %vm438, %v425, %v428
        %v447 = vsel %vm441, %v434, 920167782
        %v448 = vsel %vm440, %v431, %v447
        %v449 = vsel %vm439, %v446, %v448
        %v450 = vsel %vm438, %v428, %v431
        %v451 = vsel %vm441, %v437, 1326507024
        %v452 = vsel %vm440, %v434, %v451
        %v453 = vsel %vm439, %v450, %v452
        %v454 = vshll.u32 %v414, 8
        %v455 = vmul.u32.u64.compose %v454, %v453
        %v456 = vextract.low.u32 %v455
        %v457 = vextract.high.u32 %v455
        %v458 = vmul.u32.u64.compose %v454, %v449
        %v459 = vextract.low.u32 %v458
        %v460 = vextract.high.u32 %v458
        %v461 = vmul.u32 %v454, %v445
        %v462 = vadd.s32 %v457, %v459
        %vm463 = vc.u32 %v457, %v459
        %v464 = vadd.s32 %v460, 1
        %v465 = vsel %vm463, %v464, %v460
        %v466 = vadd.s32 %v461, %v465
        %v467 = vadd.s32 %v466, 536870912
        %v468 = vshrl.u32 %v467, 30
        %v469 = vshll.u32 %v468, 30
        %v470 = vsub.s32 %v466, %v469
        %vm471 = vcmp.lt.s32.totalorder %v470, 0
        %v472 = vsub.s32 0, %v470
        %v473 = vsel %vm471, %v472, %v470
        %v474 = vclz %v473
        %v475 = vsub.s32 %v474, 2
        %vm476 = vcmp.gt.s32.totalorder 0, %v475
        %v477 = vsel %vm476, 0, %v475
        %v478 = vsub.s32 32, %v477
        %v479 = vshll.u32 %v470, %v477
        %v480 = vshrl.u32 %v462, %v478
        %v481 = vor.u32 %v479, %v480
        %v482 = vsub.s32 4294967266, %v477
        %v483 = vadd.s32 %v482, 127
        %v484 = vshll.u32 %v483, 23
        %v485 = vor.u32 4788187, %v484
        %v486 = vand.u32 2147483647, %v485
        %v488 = vcvt.s32.f32 %v481
        %v489 = vmul.f32 %v488, %v486
        %v490 = vxor.u32 %v489, 2147483648
        %v491 = vsel %vm408, %v490, %v489
        %v492 = vsub.s32 4, %v468
        %v493 = vsel %vm408, %v492, %v468
        %v494 = vsel %vm407, %v295, %v491
        %v495 = vsel %vm407, 0, %v493
        %v496 = vcosq.f32.pop %v494
        %v497 = vsinq.f32.pop %v494
        %vm498 = vweird.f32 %v295
        %v499 = vadd.s32 %v495, 3
        %v500 = vand.u32 %v499, 3
        %vm501 = vcmp.lt.s32.totalorder %v500, 2
        %vm502 = vcmp.eq.s32.totalorder %v500, 0
        %v503 = vxor.u32 %v497, 2147483648
        %v504 = vsel %vm502, %v496, %v503
        %vm505 = vcmp.eq.s32.totalorder %v500, 2
        %v506 = vxor.u32 %v496, 2147483648
        %v507 = vsel %vm505, %v506, %v497
        %v508 = vsel %vm501, %v504, %v507
        %v509 = vsel %vm498, nan, %v508
        %v510 = vand.u32 2147483647, %v297
        %vm511 = vcmp.le.f32.partialorder %v510, 0.7853982
        %vm512 = vcmp.lt.s32.totalorder %v297, 0
        %v513 = vand.u32 %v297, 2139095040
        %v514 = vshrl.u32 %v513, 23
        %v515 = vsub.s32 %v514, 127
        %v516 = vand.u32 2147483647, %v297
        %v517 = vand.u32 %v516, 8388607
        %v518 = vor.u32 %v517, 8388608
        %v519 = vsub.s32 0, %v518
        %v520 = vadd.s32 %v515, 1
        %vm521 = vcmp.gt.s32.totalorder %v520, 0
        %v522 = vsel %vm521, %v520, 0
        %v523 = vshrl.u32 %v522, 5
        %v524 = vand.u32 %v522, 31
        %v525 = vsub.s32 32, %v524
        %v526 = vshrl.u32 683565275, %v525
        %v527 = vshll.u32 683565275, %v524
        %v528 = vshrl.u32 2475754826, %v525
        %v529 = vor.u32 %v527, %v528
        %v530 = vshll.u32 2475754826, %v524
        %v531 = vshrl.u32 2131351028, %v525
        %v532 = vor.u32 %v530, %v531
        %v533 = vshll.u32 2131351028, %v524
        %v534 = vshrl.u32 2102212464, %v525
        %v535 = vor.u32 %v533, %v534
        %v536 = vshll.u32 2102212464, %v524
        %v537 = vshrl.u32 920167782, %v525
        %v538 = vor.u32 %v536, %v537
        %v539 = vshll.u32 920167782, %v524
        %v540 = vshrl.u32 1326507024, %v525
        %v541 = vor.u32 %v539, %v540
        %vm542 = vcmp.lt.s32.totalorder %v523, 1
        %vm543 = vcmp.lt.s32.totalorder %v523, 2
        %vm544 = vcmp.lt.s32.totalorder %v523, 3
        %vm545 = vcmp.lt.s32.totalorder %v523, 4
        %v546 = vsel %vm542, %v526, %v529
        %v547 = vsel %vm545, %v535, 2102212464
        %v548 = vsel %vm544, %v532, %v547
        %v549 = vsel %vm543, %v546, %v548
        %v550 = vsel %vm542, %v529, %v532
        %v551 = vsel %vm545, %v538, 920167782
        %v552 = vsel %vm544, %v535, %v551
        %v553 = vsel %vm543, %v550, %v552
        %v554 = vsel %vm542, %v532, %v535
        %v555 = vsel %vm545, %v541, 1326507024
        %v556 = vsel %vm544, %v538, %v555
        %v557 = vsel %vm543, %v554, %v556
        %v558 = vshll.u32 %v518, 8
        %v559 = vmul.u32.u64.compose %v558, %v557
        %v560 = vextract.low.u32 %v559
        %v561 = vextract.high.u32 %v559
        %v562 = vmul.u32.u64.compose %v558, %v553
        %v563 = vextract.low.u32 %v562
        %v564 = vextract.high.u32 %v562
        %v565 = vmul.u32 %v558, %v549
        %v566 = vadd.s32 %v561, %v563
        %vm567 = vc.u32 %v561, %v563
        %v568 = vadd.s32 %v564, 1
        %v569 = vsel %vm567, %v568, %v564
        %v570 = vadd.s32 %v565, %v569
        %v571 = vadd.s32 %v570, 536870912
        %v572 = vshrl.u32 %v571, 30
        %v573 = vshll.u32 %v572, 30
        %v574 = vsub.s32 %v570, %v573
        %vm575 = vcmp.lt.s32.totalorder %v574, 0
        %v576 = vsub.s32 0, %v574
        %v577 = vsel %vm575, %v576, %v574
        %v578 = vclz %v577
        %v579 = vsub.s32 %v578, 2
        %vm580 = vcmp.gt.s32.totalorder 0, %v579
        %v581 = vsel %vm580, 0, %v579
        %v582 = vsub.s32 32, %v581
        %v583 = vshll.u32 %v574, %v581
        %v584 = vshrl.u32 %v566, %v582
        %v585 = vor.u32 %v583, %v584
        %v586 = vsub.s32 4294967266, %v581
        %v587 = vadd.s32 %v586, 127
        %v588 = vshll.u32 %v587, 23
        %v589 = vor.u32 4788187, %v588
        %v590 = vand.u32 2147483647, %v589
        %v592 = vcvt.s32.f32 %v585
        %v593 = vmul.f32 %v592, %v590
        %v594 = vxor.u32 %v593, 2147483648
        %v595 = vsel %vm512, %v594, %v593
        %v596 = vsub.s32 4, %v572
        %v597 = vsel %vm512, %v596, %v572
        %v598 = vsel %vm511, %v297, %v595
        %v599 = vsel %vm511, 0, %v597
        %v600 = vcosq.f32.pop %v598
        %v601 = vsinq.f32.pop %v598
        %vm602 = vweird.f32 %v297
        %v603 = vadd.s32 %v599, 3
        %v604 = vand.u32 %v603, 3
        %vm605 = vcmp.lt.s32.totalorder %v604, 2
        %vm606 = vcmp.eq.s32.totalorder %v604, 0
        %v607 = vxor.u32 %v601, 2147483648
        %v608 = vsel %vm606, %v600, %v607
        %vm609 = vcmp.eq.s32.totalorder %v604, 2
        %v610 = vxor.u32 %v600, 2147483648
        %v611 = vsel %vm609, %v610, %v601
        %v612 = vsel %vm605, %v608, %v611
        %v613 = vsel %vm602, nan, %v612
        %v614 = vand.u32 2147483647, %v384
        %vm615 = vcmp.le.f32.partialorder %v614, 0.7853982
        %vm616 = vcmp.lt.s32.totalorder %v384, 0
        %v617 = vand.u32 %v384, 2139095040
        %v618 = vshrl.u32 %v617, 23
        %v619 = vsub.s32 %v618, 127
        %v620 = vand.u32 2147483647, %v384
        %v621 = vand.u32 %v620, 8388607
        %v622 = vor.u32 %v621, 8388608
        %v623 = vsub.s32 0, %v622
        %v624 = vadd.s32 %v619, 1
        %vm625 = vcmp.gt.s32.totalorder %v624, 0
        %v626 = vsel %vm625, %v624, 0
        %v627 = vshrl.u32 %v626, 5
        %v628 = vand.u32 %v626, 31
        %v629 = vsub.s32 32, %v628
        %v630 = vshrl.u32 683565275, %v629
        %v631 = vshll.u32 683565275, %v628
        %v632 = vshrl.u32 2475754826, %v629
        %v633 = vor.u32 %v631, %v632
        %v634 = vshll.u32 2475754826, %v628
        %v635 = vshrl.u32 2131351028, %v629
        %v636 = vor.u32 %v634, %v635
        %v637 = vshll.u32 2131351028, %v628
        %v638 = vshrl.u32 2102212464, %v629
        %v639 = vor.u32 %v637, %v638
        %v640 = vshll.u32 2102212464, %v628
        %v641 = vshrl.u32 920167782, %v629
        %v642 = vor.u32 %v640, %v641
        %v643 = vshll.u32 920167782, %v628
        %v644 = vshrl.u32 1326507024, %v629
        %v645 = vor.u32 %v643, %v644
        %vm646 = vcmp.lt.s32.totalorder %v627, 1
        %vm647 = vcmp.lt.s32.totalorder %v627, 2
        %vm648 = vcmp.lt.s32.totalorder %v627, 3
        %vm649 = vcmp.lt.s32.totalorder %v627, 4
        %v650 = vsel %vm646, %v630, %v633
        %v651 = vsel %vm649, %v639, 2102212464
        %v652 = vsel %vm648, %v636, %v651
        %v653 = vsel %vm647, %v650, %v652
        %v654 = vsel %vm646, %v633, %v636
        %v655 = vsel %vm649, %v642, 920167782
        %v656 = vsel %vm648, %v639, %v655
        %v657 = vsel %vm647, %v654, %v656
        %v658 = vsel %vm646, %v636, %v639
        %v659 = vsel %vm649, %v645, 1326507024
        %v660 = vsel %vm648, %v642, %v659
        %v661 = vsel %vm647, %v658, %v660
        %v662 = vshll.u32 %v622, 8
        %v663 = vmul.u32.u64.compose %v662, %v661
        %v664 = vextract.low.u32 %v663
        %v665 = vextract.high.u32 %v663
        %v666 = vmul.u32.u64.compose %v662, %v657
        %v667 = vextract.low.u32 %v666
        %v668 = vextract.high.u32 %v666
        %v669 = vmul.u32 %v662, %v653
        %v670 = vadd.s32 %v665, %v667
        %vm671 = vc.u32 %v665, %v667
        %v672 = vadd.s32 %v668, 1
        %v673 = vsel %vm671, %v672, %v668
        %v674 = vadd.s32 %v669, %v673
        %v675 = vadd.s32 %v674, 536870912
        %v676 = vshrl.u32 %v675, 30
        %v677 = vshll.u32 %v676, 30
        %v678 = vsub.s32 %v674, %v677
        %vm679 = vcmp.lt.s32.totalorder %v678, 0
        %v680 = vsub.s32 0, %v678
        %v681 = vsel %vm679, %v680, %v678
        %v682 = vclz %v681
        %v683 = vsub.s32 %v682, 2
        %vm684 = vcmp.gt.s32.totalorder 0, %v683
        %v685 = vsel %vm684, 0, %v683
        %v686 = vsub.s32 32, %v685
        %v687 = vshll.u32 %v678, %v685
        %v688 = vshrl.u32 %v670, %v686
        %v689 = vor.u32 %v687, %v688
        %v690 = vsub.s32 4294967266, %v685
        %v691 = vadd.s32 %v690, 127
        %v692 = vshll.u32 %v691, 23
        %v693 = vor.u32 4788187, %v692
        %v694 = vand.u32 2147483647, %v693
        %v696 = vcvt.s32.f32 %v689
        %v697 = vmul.f32 %v696, %v694
        %v698 = vxor.u32 %v697, 2147483648
        %v699 = vsel %vm616, %v698, %v697
        %v700 = vsub.s32 4, %v676
        %v701 = vsel %vm616, %v700, %v676
        %v702 = vsel %vm615, %v384, %v699
        %v703 = vsel %vm615, 0, %v701
        %v704 = vcosq.f32.pop %v702
        %v705 = vsinq.f32.pop %v702
        %vm706 = vweird.f32 %v384
        %v707 = vadd.s32 %v703, 3
        %v708 = vand.u32 %v707, 3
        %vm709 = vcmp.lt.s32.totalorder %v708, 2
        %vm710 = vcmp.eq.s32.totalorder %v708, 0
        %v711 = vxor.u32 %v705, 2147483648
        %v712 = vsel %vm710, %v704, %v711
        %vm713 = vcmp.eq.s32.totalorder %v708, 2
        %v714 = vxor.u32 %v704, 2147483648
        %v715 = vsel %vm713, %v714, %v705
        %v716 = vsel %vm709, %v712, %v715
        %v717 = vsel %vm706, nan, %v716
        %v718 = vand.u32 2147483647, %v386
        %vm719 = vcmp.le.f32.partialorder %v718, 0.7853982
        %vm720 = vcmp.lt.s32.totalorder %v386, 0
        %v721 = vand.u32 %v386, 2139095040
        %v722 = vshrl.u32 %v721, 23
        %v723 = vsub.s32 %v722, 127
        %v724 = vand.u32 2147483647, %v386
        %v725 = vand.u32 %v724, 8388607
        %v726 = vor.u32 %v725, 8388608
        %v727 = vsub.s32 0, %v726
        %v728 = vadd.s32 %v723, 1
        %vm729 = vcmp.gt.s32.totalorder %v728, 0
        %v730 = vsel %vm729, %v728, 0
        %v731 = vshrl.u32 %v730, 5
        %v732 = vand.u32 %v730, 31
        %v733 = vsub.s32 32, %v732
        %v734 = vshrl.u32 683565275, %v733
        %v735 = vshll.u32 683565275, %v732
        %v736 = vshrl.u32 2475754826, %v733
        %v737 = vor.u32 %v735, %v736
        %v738 = vshll.u32 2475754826, %v732
        %v739 = vshrl.u32 2131351028, %v733
        %v740 = vor.u32 %v738, %v739
        %v741 = vshll.u32 2131351028, %v732
        %v742 = vshrl.u32 2102212464, %v733
        %v743 = vor.u32 %v741, %v742
        %v744 = vshll.u32 2102212464, %v732
        %v745 = vshrl.u32 920167782, %v733
        %v746 = vor.u32 %v744, %v745
        %v747 = vshll.u32 920167782, %v732
        %v748 = vshrl.u32 1326507024, %v733
        %v749 = vor.u32 %v747, %v748
        %vm750 = vcmp.lt.s32.totalorder %v731, 1
        %vm751 = vcmp.lt.s32.totalorder %v731, 2
        %vm752 = vcmp.lt.s32.totalorder %v731, 3
        %vm753 = vcmp.lt.s32.totalorder %v731, 4
        %v754 = vsel %vm750, %v734, %v737
        %v755 = vsel %vm753, %v743, 2102212464
        %v756 = vsel %vm752, %v740, %v755
        %v757 = vsel %vm751, %v754, %v756
        %v758 = vsel %vm750, %v737, %v740
        %v759 = vsel %vm753, %v746, 920167782
        %v760 = vsel %vm752, %v743, %v759
        %v761 = vsel %vm751, %v758, %v760
        %v762 = vsel %vm750, %v740, %v743
        %v763 = vsel %vm753, %v749, 1326507024
        %v764 = vsel %vm752, %v746, %v763
        %v765 = vsel %vm751, %v762, %v764
        %v766 = vshll.u32 %v726, 8
        %v767 = vmul.u32.u64.compose %v766, %v765
        %v768 = vextract.low.u32 %v767
        %v769 = vextract.high.u32 %v767
        %v770 = vmul.u32.u64.compose %v766, %v761
        %v771 = vextract.low.u32 %v770
        %v772 = vextract.high.u32 %v770
        %v773 = vmul.u32 %v766, %v757
        %v774 = vadd.s32 %v769, %v771
        %vm775 = vc.u32 %v769, %v771
        %v776 = vadd.s32 %v772, 1
        %v777 = vsel %vm775, %v776, %v772
        %v778 = vadd.s32 %v773, %v777
        %v779 = vadd.s32 %v778, 536870912
        %v780 = vshrl.u32 %v779, 30
        %v781 = vshll.u32 %v780, 30
        %v782 = vsub.s32 %v778, %v781
        %vm783 = vcmp.lt.s32.totalorder %v782, 0
        %v784 = vsub.s32 0, %v782
        %v785 = vsel %vm783, %v784, %v782
        %v786 = vclz %v785
        %v787 = vsub.s32 %v786, 2
        %vm788 = vcmp.gt.s32.totalorder 0, %v787
        %v789 = vsel %vm788, 0, %v787
        %v790 = vsub.s32 32, %v789
        %v791 = vshll.u32 %v782, %v789
        %v792 = vshrl.u32 %v774, %v790
        %v793 = vor.u32 %v791, %v792
        %v794 = vsub.s32 4294967266, %v789
        %v795 = vadd.s32 %v794, 127
        %v796 = vshll.u32 %v795, 23
        %v797 = vor.u32 4788187, %v796
        %v798 = vand.u32 2147483647, %v797
        %v800 = vcvt.s32.f32 %v793
        %v801 = vmul.f32 %v800, %v798
        %v802 = vxor.u32 %v801, 2147483648
        %v803 = vsel %vm720, %v802, %v801
        %v804 = vsub.s32 4, %v780
        %v805 = vsel %vm720, %v804, %v780
        %v806 = vsel %vm719, %v386, %v803
        %v807 = vsel %vm719, 0, %v805
        %v808 = vcosq.f32.pop %v806
        %v809 = vsinq.f32.pop %v806
        %vm810 = vweird.f32 %v386
        %v811 = vadd.s32 %v807, 3
        %v812 = vand.u32 %v811, 3
        %vm813 = vcmp.lt.s32.totalorder %v812, 2
        %vm814 = vcmp.eq.s32.totalorder %v812, 0
        %v815 = vxor.u32 %v809, 2147483648
        %v816 = vsel %vm814, %v808, %v815
        %vm817 = vcmp.eq.s32.totalorder %v812, 2
        %v818 = vxor.u32 %v808, 2147483648
        %v819 = vsel %vm817, %v818, %v809
        %v820 = vsel %vm813, %v816, %v819
        %v821 = vsel %vm810, nan, %v820
        %v822 = vand.u32 2147483647, %v301
        %vm823 = vcmp.le.f32.partialorder %v822, 0.7853982
        %vm824 = vcmp.lt.s32.totalorder %v301, 0
        %v825 = vand.u32 %v301, 2139095040
        %v826 = vshrl.u32 %v825, 23
        %v827 = vsub.s32 %v826, 127
        %v828 = vand.u32 2147483647, %v301
        %v829 = vand.u32 %v828, 8388607
        %v830 = vor.u32 %v829, 8388608
        %v831 = vsub.s32 0, %v830
        %v832 = vadd.s32 %v827, 1
        %vm833 = vcmp.gt.s32.totalorder %v832, 0
        %v834 = vsel %vm833, %v832, 0
        %v835 = vshrl.u32 %v834, 5
        %v836 = vand.u32 %v834, 31
        %v837 = vsub.s32 32, %v836
        %v838 = vshrl.u32 683565275, %v837
        %v839 = vshll.u32 683565275, %v836
        %v840 = vshrl.u32 2475754826, %v837
        %v841 = vor.u32 %v839, %v840
        %v842 = vshll.u32 2475754826, %v836
        %v843 = vshrl.u32 2131351028, %v837
        %v844 = vor.u32 %v842, %v843
        %v845 = vshll.u32 2131351028, %v836
        %v846 = vshrl.u32 2102212464, %v837
        %v847 = vor.u32 %v845, %v846
        %v848 = vshll.u32 2102212464, %v836
        %v849 = vshrl.u32 920167782, %v837
        %v850 = vor.u32 %v848, %v849
        %v851 = vshll.u32 920167782, %v836
        %v852 = vshrl.u32 1326507024, %v837
        %v853 = vor.u32 %v851, %v852
        %vm854 = vcmp.lt.s32.totalorder %v835, 1
        %vm855 = vcmp.lt.s32.totalorder %v835, 2
        %vm856 = vcmp.lt.s32.totalorder %v835, 3
        %vm857 = vcmp.lt.s32.totalorder %v835, 4
        %v858 = vsel %vm854, %v838, %v841
        %v859 = vsel %vm857, %v847, 2102212464
        %v860 = vsel %vm856, %v844, %v859
        %v861 = vsel %vm855, %v858, %v860
        %v862 = vsel %vm854, %v841, %v844
        %v863 = vsel %vm857, %v850, 920167782
        %v864 = vsel %vm856, %v847, %v863
        %v865 = vsel %vm855, %v862, %v864
        %v866 = vsel %vm854, %v844, %v847
        %v867 = vsel %vm857, %v853, 1326507024
        %v868 = vsel %vm856, %v850, %v867
        %v869 = vsel %vm855, %v866, %v868
        %v870 = vshll.u32 %v830, 8
        %v871 = vmul.u32.u64.compose %v870, %v869
        %v872 = vextract.low.u32 %v871
        %v873 = vextract.high.u32 %v871
        %v874 = vmul.u32.u64.compose %v870, %v865
        %v875 = vextract.low.u32 %v874
        %v876 = vextract.high.u32 %v874
        %v877 = vmul.u32 %v870, %v861
        %v878 = vadd.s32 %v873, %v875
        %vm879 = vc.u32 %v873, %v875
        %v880 = vadd.s32 %v876, 1
        %v881 = vsel %vm879, %v880, %v876
        %v882 = vadd.s32 %v877, %v881
        %v883 = vadd.s32 %v882, 536870912
        %v884 = vshrl.u32 %v883, 30
        %v885 = vshll.u32 %v884, 30
        %v886 = vsub.s32 %v882, %v885
        %vm887 = vcmp.lt.s32.totalorder %v886, 0
        %v888 = vsub.s32 0, %v886
        %v889 = vsel %vm887, %v888, %v886
        %v890 = vclz %v889
        %v891 = vsub.s32 %v890, 2
        %vm892 = vcmp.gt.s32.totalorder 0, %v891
        %v893 = vsel %vm892, 0, %v891
        %v894 = vsub.s32 32, %v893
        %v895 = vshll.u32 %v886, %v893
        %v896 = vshrl.u32 %v878, %v894
        %v897 = vor.u32 %v895, %v896
        %v898 = vsub.s32 4294967266, %v893
        %v899 = vadd.s32 %v898, 127
        %v900 = vshll.u32 %v899, 23
        %v901 = vor.u32 4788187, %v900
        %v902 = vand.u32 2147483647, %v901
        %v904 = vcvt.s32.f32 %v897
        %v905 = vmul.f32 %v904, %v902
        %v906 = vxor.u32 %v905, 2147483648
        %v907 = vsel %vm824, %v906, %v905
        %v908 = vsub.s32 4, %v884
        %v909 = vsel %vm824, %v908, %v884
        %v910 = vsel %vm823, %v301, %v907
        %v911 = vsel %vm823, 0, %v909
        %v912 = vcosq.f32.pop %v910
        %v913 = vsinq.f32.pop %v910
        %vm914 = vweird.f32 %v301
        %v915 = vadd.s32 %v911, 3
        %v916 = vand.u32 %v915, 3
        %vm917 = vcmp.lt.s32.totalorder %v916, 2
        %vm918 = vcmp.eq.s32.totalorder %v916, 0
        %v919 = vxor.u32 %v913, 2147483648
        %v920 = vsel %vm918, %v912, %v919
        %vm921 = vcmp.eq.s32.totalorder %v916, 2
        %v922 = vxor.u32 %v912, 2147483648
        %v923 = vsel %vm921, %v922, %v913
        %v924 = vsel %vm917, %v920, %v923
        %v925 = vsel %vm914, nan, %v924
        %v926 = vand.u32 2147483647, %v303
        %vm927 = vcmp.le.f32.partialorder %v926, 0.7853982
        %vm928 = vcmp.lt.s32.totalorder %v303, 0
        %v929 = vand.u32 %v303, 2139095040
        %v930 = vshrl.u32 %v929, 23
        %v931 = vsub.s32 %v930, 127
        %v932 = vand.u32 2147483647, %v303
        %v933 = vand.u32 %v932, 8388607
        %v934 = vor.u32 %v933, 8388608
        %v935 = vsub.s32 0, %v934
        %v936 = vadd.s32 %v931, 1
        %vm937 = vcmp.gt.s32.totalorder %v936, 0
        %v938 = vsel %vm937, %v936, 0
        %v939 = vshrl.u32 %v938, 5
        %v940 = vand.u32 %v938, 31
        %v941 = vsub.s32 32, %v940
        %v942 = vshrl.u32 683565275, %v941
        %v943 = vshll.u32 683565275, %v940
        %v944 = vshrl.u32 2475754826, %v941
        %v945 = vor.u32 %v943, %v944
        %v946 = vshll.u32 2475754826, %v940
        %v947 = vshrl.u32 2131351028, %v941
        %v948 = vor.u32 %v946, %v947
        %v949 = vshll.u32 2131351028, %v940
        %v950 = vshrl.u32 2102212464, %v941
        %v951 = vor.u32 %v949, %v950
        %v952 = vshll.u32 2102212464, %v940
        %v953 = vshrl.u32 920167782, %v941
        %v954 = vor.u32 %v952, %v953
        %v955 = vshll.u32 920167782, %v940
        %v956 = vshrl.u32 1326507024, %v941
        %v957 = vor.u32 %v955, %v956
        %vm958 = vcmp.lt.s32.totalorder %v939, 1
        %vm959 = vcmp.lt.s32.totalorder %v939, 2
        %vm960 = vcmp.lt.s32.totalorder %v939, 3
        %vm961 = vcmp.lt.s32.totalorder %v939, 4
        %v962 = vsel %vm958, %v942, %v945
        %v963 = vsel %vm961, %v951, 2102212464
        %v964 = vsel %vm960, %v948, %v963
        %v965 = vsel %vm959, %v962, %v964
        %v966 = vsel %vm958, %v945, %v948
        %v967 = vsel %vm961, %v954, 920167782
        %v968 = vsel %vm960, %v951, %v967
        %v969 = vsel %vm959, %v966, %v968
        %v970 = vsel %vm958, %v948, %v951
        %v971 = vsel %vm961, %v957, 1326507024
        %v972 = vsel %vm960, %v954, %v971
        %v973 = vsel %vm959, %v970, %v972
        %v974 = vshll.u32 %v934, 8
        %v975 = vmul.u32.u64.compose %v974, %v973
        %v976 = vextract.low.u32 %v975
        %v977 = vextract.high.u32 %v975
        %v978 = vmul.u32.u64.compose %v974, %v969
        %v979 = vextract.low.u32 %v978
        %v980 = vextract.high.u32 %v978
        %v981 = vmul.u32 %v974, %v965
        %v982 = vadd.s32 %v977, %v979
        %vm983 = vc.u32 %v977, %v979
        %v984 = vadd.s32 %v980, 1
        %v985 = vsel %vm983, %v984, %v980
        %v986 = vadd.s32 %v981, %v985
        %v987 = vadd.s32 %v986, 536870912
        %v988 = vshrl.u32 %v987, 30
        %v989 = vshll.u32 %v988, 30
        %v990 = vsub.s32 %v986, %v989
        %vm991 = vcmp.lt.s32.totalorder %v990, 0
        %v992 = vsub.s32 0, %v990
        %v993 = vsel %vm991, %v992, %v990
        %v994 = vclz %v993
        %v995 = vsub.s32 %v994, 2
        %vm996 = vcmp.gt.s32.totalorder 0, %v995
        %v997 = vsel %vm996, 0, %v995
        %v998 = vsub.s32 32, %v997
        %v999 = vshll.u32 %v990, %v997
        %v1000 = vshrl.u32 %v982, %v998
        %v1001 = vor.u32 %v999, %v1000
        %v1002 = vsub.s32 4294967266, %v997
        %v1003 = vadd.s32 %v1002, 127
        %v1004 = vshll.u32 %v1003, 23
        %v1005 = vor.u32 4788187, %v1004
        %v1006 = vand.u32 2147483647, %v1005
        %v1008 = vcvt.s32.f32 %v1001
        %v1009 = vmul.f32 %v1008, %v1006
        %v1010 = vxor.u32 %v1009, 2147483648
        %v1011 = vsel %vm928, %v1010, %v1009
        %v1012 = vsub.s32 4, %v988
        %v1013 = vsel %vm928, %v1012, %v988
        %v1014 = vsel %vm927, %v303, %v1011
        %v1015 = vsel %vm927, 0, %v1013
        %v1016 = vcosq.f32.pop %v1014
        %v1017 = vsinq.f32.pop %v1014
        %vm1018 = vweird.f32 %v303
        %v1019 = vadd.s32 %v1015, 3
        %v1020 = vand.u32 %v1019, 3
        %vm1021 = vcmp.lt.s32.totalorder %v1020, 2
        %vm1022 = vcmp.eq.s32.totalorder %v1020, 0
        %v1023 = vxor.u32 %v1017, 2147483648
        %v1024 = vsel %vm1022, %v1016, %v1023
        %vm1025 = vcmp.eq.s32.totalorder %v1020, 2
        %v1026 = vxor.u32 %v1016, 2147483648
        %v1027 = vsel %vm1025, %v1026, %v1017
        %v1028 = vsel %vm1021, %v1024, %v1027
        %v1029 = vsel %vm1018, nan, %v1028
        %v1030 = vand.u32 2147483647, %v390
        %vm1031 = vcmp.le.f32.partialorder %v1030, 0.7853982
        %vm1032 = vcmp.lt.s32.totalorder %v390, 0
        %v1033 = vand.u32 %v390, 2139095040
        %v1034 = vshrl.u32 %v1033, 23
        %v1035 = vsub.s32 %v1034, 127
        %v1036 = vand.u32 2147483647, %v390
        %v1037 = vand.u32 %v1036, 8388607
        %v1038 = vor.u32 %v1037, 8388608
        %v1039 = vsub.s32 0, %v1038
        %v1040 = vadd.s32 %v1035, 1
        %vm1041 = vcmp.gt.s32.totalorder %v1040, 0
        %v1042 = vsel %vm1041, %v1040, 0
        %v1043 = vshrl.u32 %v1042, 5
        %v1044 = vand.u32 %v1042, 31
        %v1045 = vsub.s32 32, %v1044
        %v1046 = vshrl.u32 683565275, %v1045
        %v1047 = vshll.u32 683565275, %v1044
        %v1048 = vshrl.u32 2475754826, %v1045
        %v1049 = vor.u32 %v1047, %v1048
        %v1050 = vshll.u32 2475754826, %v1044
        %v1051 = vshrl.u32 2131351028, %v1045
        %v1052 = vor.u32 %v1050, %v1051
        %v1053 = vshll.u32 2131351028, %v1044
        %v1054 = vshrl.u32 2102212464, %v1045
        %v1055 = vor.u32 %v1053, %v1054
        %v1056 = vshll.u32 2102212464, %v1044
        %v1057 = vshrl.u32 920167782, %v1045
        %v1058 = vor.u32 %v1056, %v1057
        %v1059 = vshll.u32 920167782, %v1044
        %v1060 = vshrl.u32 1326507024, %v1045
        %v1061 = vor.u32 %v1059, %v1060
        %vm1062 = vcmp.lt.s32.totalorder %v1043, 1
        %vm1063 = vcmp.lt.s32.totalorder %v1043, 2
        %vm1064 = vcmp.lt.s32.totalorder %v1043, 3
        %vm1065 = vcmp.lt.s32.totalorder %v1043, 4
        %v1066 = vsel %vm1062, %v1046, %v1049
        %v1067 = vsel %vm1065, %v1055, 2102212464
        %v1068 = vsel %vm1064, %v1052, %v1067
        %v1069 = vsel %vm1063, %v1066, %v1068
        %v1070 = vsel %vm1062, %v1049, %v1052
        %v1071 = vsel %vm1065, %v1058, 920167782
        %v1072 = vsel %vm1064, %v1055, %v1071
        %v1073 = vsel %vm1063, %v1070, %v1072
        %v1074 = vsel %vm1062, %v1052, %v1055
        %v1075 = vsel %vm1065, %v1061, 1326507024
        %v1076 = vsel %vm1064, %v1058, %v1075
        %v1077 = vsel %vm1063, %v1074, %v1076
        %v1078 = vshll.u32 %v1038, 8
        %v1079 = vmul.u32.u64.compose %v1078, %v1077
        %v1080 = vextract.low.u32 %v1079
        %v1081 = vextract.high.u32 %v1079
        %v1082 = vmul.u32.u64.compose %v1078, %v1073
        %v1083 = vextract.low.u32 %v1082
        %v1084 = vextract.high.u32 %v1082
        %v1085 = vmul.u32 %v1078, %v1069
        %v1086 = vadd.s32 %v1081, %v1083
        %vm1087 = vc.u32 %v1081, %v1083
        %v1088 = vadd.s32 %v1084, 1
        %v1089 = vsel %vm1087, %v1088, %v1084
        %v1090 = vadd.s32 %v1085, %v1089
        %v1091 = vadd.s32 %v1090, 536870912
        %v1092 = vshrl.u32 %v1091, 30
        %v1093 = vshll.u32 %v1092, 30
        %v1094 = vsub.s32 %v1090, %v1093
        %vm1095 = vcmp.lt.s32.totalorder %v1094, 0
        %v1096 = vsub.s32 0, %v1094
        %v1097 = vsel %vm1095, %v1096, %v1094
        %v1098 = vclz %v1097
        %v1099 = vsub.s32 %v1098, 2
        %vm1100 = vcmp.gt.s32.totalorder 0, %v1099
        %v1101 = vsel %vm1100, 0, %v1099
        %v1102 = vsub.s32 32, %v1101
        %v1103 = vshll.u32 %v1094, %v1101
        %v1104 = vshrl.u32 %v1086, %v1102
        %v1105 = vor.u32 %v1103, %v1104
        %v1106 = vsub.s32 4294967266, %v1101
        %v1107 = vadd.s32 %v1106, 127
        %v1108 = vshll.u32 %v1107, 23
        %v1109 = vor.u32 4788187, %v1108
        %v1110 = vand.u32 2147483647, %v1109
        %v1112 = vcvt.s32.f32 %v1105
        %v1113 = vmul.f32 %v1112, %v1110
        %v1114 = vxor.u32 %v1113, 2147483648
        %v1115 = vsel %vm1032, %v1114, %v1113
        %v1116 = vsub.s32 4, %v1092
        %v1117 = vsel %vm1032, %v1116, %v1092
        %v1118 = vsel %vm1031, %v390, %v1115
        %v1119 = vsel %vm1031, 0, %v1117
        %v1120 = vcosq.f32.pop %v1118
        %v1121 = vsinq.f32.pop %v1118
        %vm1122 = vweird.f32 %v390
        %v1123 = vadd.s32 %v1119, 3
        %v1124 = vand.u32 %v1123, 3
        %vm1125 = vcmp.lt.s32.totalorder %v1124, 2
        %vm1126 = vcmp.eq.s32.totalorder %v1124, 0
        %v1127 = vxor.u32 %v1121, 2147483648
        %v1128 = vsel %vm1126, %v1120, %v1127
        %vm1129 = vcmp.eq.s32.totalorder %v1124, 2
        %v1130 = vxor.u32 %v1120, 2147483648
        %v1131 = vsel %vm1129, %v1130, %v1121
        %v1132 = vsel %vm1125, %v1128, %v1131
        %v1133 = vsel %vm1122, nan, %v1132
        %v1134 = vand.u32 2147483647, %v392
        %vm1135 = vcmp.le.f32.partialorder %v1134, 0.7853982
        %vm1136 = vcmp.lt.s32.totalorder %v392, 0
        %v1137 = vand.u32 %v392, 2139095040
        %v1138 = vshrl.u32 %v1137, 23
        %v1139 = vsub.s32 %v1138, 127
        %v1140 = vand.u32 2147483647, %v392
        %v1141 = vand.u32 %v1140, 8388607
        %v1142 = vor.u32 %v1141, 8388608
        %v1143 = vsub.s32 0, %v1142
        %v1144 = vadd.s32 %v1139, 1
        %vm1145 = vcmp.gt.s32.totalorder %v1144, 0
        %v1146 = vsel %vm1145, %v1144, 0
        %v1147 = vshrl.u32 %v1146, 5
        %v1148 = vand.u32 %v1146, 31
        %v1149 = vsub.s32 32, %v1148
        %v1150 = vshrl.u32 683565275, %v1149
        %v1151 = vshll.u32 683565275, %v1148
        %v1152 = vshrl.u32 2475754826, %v1149
        %v1153 = vor.u32 %v1151, %v1152
        %v1154 = vshll.u32 2475754826, %v1148
        %v1155 = vshrl.u32 2131351028, %v1149
        %v1156 = vor.u32 %v1154, %v1155
        %v1157 = vshll.u32 2131351028, %v1148
        %v1158 = vshrl.u32 2102212464, %v1149
        %v1159 = vor.u32 %v1157, %v1158
        %v1160 = vshll.u32 2102212464, %v1148
        %v1161 = vshrl.u32 920167782, %v1149
        %v1162 = vor.u32 %v1160, %v1161
        %v1163 = vshll.u32 920167782, %v1148
        %v1164 = vshrl.u32 1326507024, %v1149
        %v1165 = vor.u32 %v1163, %v1164
        %vm1166 = vcmp.lt.s32.totalorder %v1147, 1
        %vm1167 = vcmp.lt.s32.totalorder %v1147, 2
        %vm1168 = vcmp.lt.s32.totalorder %v1147, 3
        %vm1169 = vcmp.lt.s32.totalorder %v1147, 4
        %v1170 = vsel %vm1166, %v1150, %v1153
        %v1171 = vsel %vm1169, %v1159, 2102212464
        %v1172 = vsel %vm1168, %v1156, %v1171
        %v1173 = vsel %vm1167, %v1170, %v1172
        %v1174 = vsel %vm1166, %v1153, %v1156
        %v1175 = vsel %vm1169, %v1162, 920167782
        %v1176 = vsel %vm1168, %v1159, %v1175
        %v1177 = vsel %vm1167, %v1174, %v1176
        %v1178 = vsel %vm1166, %v1156, %v1159
        %v1179 = vsel %vm1169, %v1165, 1326507024
        %v1180 = vsel %vm1168, %v1162, %v1179
        %v1181 = vsel %vm1167, %v1178, %v1180
        %v1182 = vshll.u32 %v1142, 8
        %v1183 = vmul.u32.u64.compose %v1182, %v1181
        %v1184 = vextract.low.u32 %v1183
        %v1185 = vextract.high.u32 %v1183
        %v1186 = vmul.u32.u64.compose %v1182, %v1177
        %v1187 = vextract.low.u32 %v1186
        %v1188 = vextract.high.u32 %v1186
        %v1189 = vmul.u32 %v1182, %v1173
        %v1190 = vadd.s32 %v1185, %v1187
        %vm1191 = vc.u32 %v1185, %v1187
        %v1192 = vadd.s32 %v1188, 1
        %v1193 = vsel %vm1191, %v1192, %v1188
        %v1194 = vadd.s32 %v1189, %v1193
        %v1195 = vadd.s32 %v1194, 536870912
        %v1196 = vshrl.u32 %v1195, 30
        %v1197 = vshll.u32 %v1196, 30
        %v1198 = vsub.s32 %v1194, %v1197
        %vm1199 = vcmp.lt.s32.totalorder %v1198, 0
        %v1200 = vsub.s32 0, %v1198
        %v1201 = vsel %vm1199, %v1200, %v1198
        %v1202 = vclz %v1201
        %v1203 = vsub.s32 %v1202, 2
        %vm1204 = vcmp.gt.s32.totalorder 0, %v1203
        %v1205 = vsel %vm1204, 0, %v1203
        %v1206 = vsub.s32 32, %v1205
        %v1207 = vshll.u32 %v1198, %v1205
        %v1208 = vshrl.u32 %v1190, %v1206
        %v1209 = vor.u32 %v1207, %v1208
        %v1210 = vsub.s32 4294967266, %v1205
        %v1211 = vadd.s32 %v1210, 127
        %v1212 = vshll.u32 %v1211, 23
        %v1213 = vor.u32 4788187, %v1212
        %v1214 = vand.u32 2147483647, %v1213
        %v1216 = vcvt.s32.f32 %v1209
        %v1217 = vmul.f32 %v1216, %v1214
        %v1218 = vxor.u32 %v1217, 2147483648
        %v1219 = vsel %vm1136, %v1218, %v1217
        %v1220 = vsub.s32 4, %v1196
        %v1221 = vsel %vm1136, %v1220, %v1196
        %v1222 = vsel %vm1135, %v392, %v1219
        %v1223 = vsel %vm1135, 0, %v1221
        %v1224 = vcosq.f32.pop %v1222
        %v1225 = vsinq.f32.pop %v1222
        %vm1226 = vweird.f32 %v392
        %v1227 = vadd.s32 %v1223, 3
        %v1228 = vand.u32 %v1227, 3
        %vm1229 = vcmp.lt.s32.totalorder %v1228, 2
        %vm1230 = vcmp.eq.s32.totalorder %v1228, 0
        %v1231 = vxor.u32 %v1225, 2147483648
        %v1232 = vsel %vm1230, %v1224, %v1231
        %vm1233 = vcmp.eq.s32.totalorder %v1228, 2
        %v1234 = vxor.u32 %v1224, 2147483648
        %v1235 = vsel %vm1233, %v1234, %v1225
        %v1236 = vsel %vm1229, %v1232, %v1235
        %v1237 = vsel %vm1226, nan, %v1236
        %v1238 = vand.u32 2147483647, %v307
        %vm1239 = vcmp.le.f32.partialorder %v1238, 0.7853982
        %vm1240 = vcmp.lt.s32.totalorder %v307, 0
        %v1241 = vand.u32 %v307, 2139095040
        %v1242 = vshrl.u32 %v1241, 23
        %v1243 = vsub.s32 %v1242, 127
        %v1244 = vand.u32 2147483647, %v307
        %v1245 = vand.u32 %v1244, 8388607
        %v1246 = vor.u32 %v1245, 8388608
        %v1247 = vsub.s32 0, %v1246
        %v1248 = vadd.s32 %v1243, 1
        %vm1249 = vcmp.gt.s32.totalorder %v1248, 0
        %v1250 = vsel %vm1249, %v1248, 0
        %v1251 = vshrl.u32 %v1250, 5
        %v1252 = vand.u32 %v1250, 31
        %v1253 = vsub.s32 32, %v1252
        %v1254 = vshrl.u32 683565275, %v1253
        %v1255 = vshll.u32 683565275, %v1252
        %v1256 = vshrl.u32 2475754826, %v1253
        %v1257 = vor.u32 %v1255, %v1256
        %v1258 = vshll.u32 2475754826, %v1252
        %v1259 = vshrl.u32 2131351028, %v1253
        %v1260 = vor.u32 %v1258, %v1259
        %v1261 = vshll.u32 2131351028, %v1252
        %v1262 = vshrl.u32 2102212464, %v1253
        %v1263 = vor.u32 %v1261, %v1262
        %v1264 = vshll.u32 2102212464, %v1252
        %v1265 = vshrl.u32 920167782, %v1253
        %v1266 = vor.u32 %v1264, %v1265
        %v1267 = vshll.u32 920167782, %v1252
        %v1268 = vshrl.u32 1326507024, %v1253
        %v1269 = vor.u32 %v1267, %v1268
        %vm1270 = vcmp.lt.s32.totalorder %v1251, 1
        %vm1271 = vcmp.lt.s32.totalorder %v1251, 2
        %vm1272 = vcmp.lt.s32.totalorder %v1251, 3
        %vm1273 = vcmp.lt.s32.totalorder %v1251, 4
        %v1274 = vsel %vm1270, %v1254, %v1257
        %v1275 = vsel %vm1273, %v1263, 2102212464
        %v1276 = vsel %vm1272, %v1260, %v1275
        %v1277 = vsel %vm1271, %v1274, %v1276
        %v1278 = vsel %vm1270, %v1257, %v1260
        %v1279 = vsel %vm1273, %v1266, 920167782
        %v1280 = vsel %vm1272, %v1263, %v1279
        %v1281 = vsel %vm1271, %v1278, %v1280
        %v1282 = vsel %vm1270, %v1260, %v1263
        %v1283 = vsel %vm1273, %v1269, 1326507024
        %v1284 = vsel %vm1272, %v1266, %v1283
        %v1285 = vsel %vm1271, %v1282, %v1284
        %v1286 = vshll.u32 %v1246, 8
        %v1287 = vmul.u32.u64.compose %v1286, %v1285
        %v1288 = vextract.low.u32 %v1287
        %v1289 = vextract.high.u32 %v1287
        %v1290 = vmul.u32.u64.compose %v1286, %v1281
        %v1291 = vextract.low.u32 %v1290
        %v1292 = vextract.high.u32 %v1290
        %v1293 = vmul.u32 %v1286, %v1277
        %v1294 = vadd.s32 %v1289, %v1291
        %vm1295 = vc.u32 %v1289, %v1291
        %v1296 = vadd.s32 %v1292, 1
        %v1297 = vsel %vm1295, %v1296, %v1292
        %v1298 = vadd.s32 %v1293, %v1297
        %v1299 = vadd.s32 %v1298, 536870912
        %v1300 = vshrl.u32 %v1299, 30
        %v1301 = vshll.u32 %v1300, 30
        %v1302 = vsub.s32 %v1298, %v1301
        %vm1303 = vcmp.lt.s32.totalorder %v1302, 0
        %v1304 = vsub.s32 0, %v1302
        %v1305 = vsel %vm1303, %v1304, %v1302
        %v1306 = vclz %v1305
        %v1307 = vsub.s32 %v1306, 2
        %vm1308 = vcmp.gt.s32.totalorder 0, %v1307
        %v1309 = vsel %vm1308, 0, %v1307
        %v1310 = vsub.s32 32, %v1309
        %v1311 = vshll.u32 %v1302, %v1309
        %v1312 = vshrl.u32 %v1294, %v1310
        %v1313 = vor.u32 %v1311, %v1312
        %v1314 = vsub.s32 4294967266, %v1309
        %v1315 = vadd.s32 %v1314, 127
        %v1316 = vshll.u32 %v1315, 23
        %v1317 = vor.u32 4788187, %v1316
        %v1318 = vand.u32 2147483647, %v1317
        %v1320 = vcvt.s32.f32 %v1313
        %v1321 = vmul.f32 %v1320, %v1318
        %v1322 = vxor.u32 %v1321, 2147483648
        %v1323 = vsel %vm1240, %v1322, %v1321
        %v1324 = vsub.s32 4, %v1300
        %v1325 = vsel %vm1240, %v1324, %v1300
        %v1326 = vsel %vm1239, %v307, %v1323
        %v1327 = vsel %vm1239, 0, %v1325
        %v1328 = vcosq.f32.pop %v1326
        %v1329 = vsinq.f32.pop %v1326
        %vm1330 = vweird.f32 %v307
        %v1331 = vadd.s32 %v1327, 3
        %v1332 = vand.u32 %v1331, 3
        %vm1333 = vcmp.lt.s32.totalorder %v1332, 2
        %vm1334 = vcmp.eq.s32.totalorder %v1332, 0
        %v1335 = vxor.u32 %v1329, 2147483648
        %v1336 = vsel %vm1334, %v1328, %v1335
        %vm1337 = vcmp.eq.s32.totalorder %v1332, 2
        %v1338 = vxor.u32 %v1328, 2147483648
        %v1339 = vsel %vm1337, %v1338, %v1329
        %v1340 = vsel %vm1333, %v1336, %v1339
        %v1341 = vsel %vm1330, nan, %v1340
        %v1342 = vand.u32 2147483647, %v309
        %vm1343 = vcmp.le.f32.partialorder %v1342, 0.7853982
        %vm1344 = vcmp.lt.s32.totalorder %v309, 0
        %v1345 = vand.u32 %v309, 2139095040
        %v1346 = vshrl.u32 %v1345, 23
        %v1347 = vsub.s32 %v1346, 127
        %v1348 = vand.u32 2147483647, %v309
        %v1349 = vand.u32 %v1348, 8388607
        %v1350 = vor.u32 %v1349, 8388608
        %v1351 = vsub.s32 0, %v1350
        %v1352 = vadd.s32 %v1347, 1
        %vm1353 = vcmp.gt.s32.totalorder %v1352, 0
        %v1354 = vsel %vm1353, %v1352, 0
        %v1355 = vshrl.u32 %v1354, 5
        %v1356 = vand.u32 %v1354, 31
        %v1357 = vsub.s32 32, %v1356
        %v1358 = vshrl.u32 683565275, %v1357
        %v1359 = vshll.u32 683565275, %v1356
        %v1360 = vshrl.u32 2475754826, %v1357
        %v1361 = vor.u32 %v1359, %v1360
        %v1362 = vshll.u32 2475754826, %v1356
        %v1363 = vshrl.u32 2131351028, %v1357
        %v1364 = vor.u32 %v1362, %v1363
        %v1365 = vshll.u32 2131351028, %v1356
        %v1366 = vshrl.u32 2102212464, %v1357
        %v1367 = vor.u32 %v1365, %v1366
        %v1368 = vshll.u32 2102212464, %v1356
        %v1369 = vshrl.u32 920167782, %v1357
        %v1370 = vor.u32 %v1368, %v1369
        %v1371 = vshll.u32 920167782, %v1356
        %v1372 = vshrl.u32 1326507024, %v1357
        %v1373 = vor.u32 %v1371, %v1372
        %vm1374 = vcmp.lt.s32.totalorder %v1355, 1
        %vm1375 = vcmp.lt.s32.totalorder %v1355, 2
        %vm1376 = vcmp.lt.s32.totalorder %v1355, 3
        %vm1377 = vcmp.lt.s32.totalorder %v1355, 4
        %v1378 = vsel %vm1374, %v1358, %v1361
        %v1379 = vsel %vm1377, %v1367, 2102212464
        %v1380 = vsel %vm1376, %v1364, %v1379
        %v1381 = vsel %vm1375, %v1378, %v1380
        %v1382 = vsel %vm1374, %v1361, %v1364
        %v1383 = vsel %vm1377, %v1370, 920167782
        %v1384 = vsel %vm1376, %v1367, %v1383
        %v1385 = vsel %vm1375, %v1382, %v1384
        %v1386 = vsel %vm1374, %v1364, %v1367
        %v1387 = vsel %vm1377, %v1373, 1326507024
        %v1388 = vsel %vm1376, %v1370, %v1387
        %v1389 = vsel %vm1375, %v1386, %v1388
        %v1390 = vshll.u32 %v1350, 8
        %v1391 = vmul.u32.u64.compose %v1390, %v1389
        %v1392 = vextract.low.u32 %v1391
        %v1393 = vextract.high.u32 %v1391
        %v1394 = vmul.u32.u64.compose %v1390, %v1385
        %v1395 = vextract.low.u32 %v1394
        %v1396 = vextract.high.u32 %v1394
        %v1397 = vmul.u32 %v1390, %v1381
        %v1398 = vadd.s32 %v1393, %v1395
        %vm1399 = vc.u32 %v1393, %v1395
        %v1400 = vadd.s32 %v1396, 1
        %v1401 = vsel %vm1399, %v1400, %v1396
        %v1402 = vadd.s32 %v1397, %v1401
        %v1403 = vadd.s32 %v1402, 536870912
        %v1404 = vshrl.u32 %v1403, 30
        %v1405 = vshll.u32 %v1404, 30
        %v1406 = vsub.s32 %v1402, %v1405
        %vm1407 = vcmp.lt.s32.totalorder %v1406, 0
        %v1408 = vsub.s32 0, %v1406
        %v1409 = vsel %vm1407, %v1408, %v1406
        %v1410 = vclz %v1409
        %v1411 = vsub.s32 %v1410, 2
        %vm1412 = vcmp.gt.s32.totalorder 0, %v1411
        %v1413 = vsel %vm1412, 0, %v1411
        %v1414 = vsub.s32 32, %v1413
        %v1415 = vshll.u32 %v1406, %v1413
        %v1416 = vshrl.u32 %v1398, %v1414
        %v1417 = vor.u32 %v1415, %v1416
        %v1418 = vsub.s32 4294967266, %v1413
        %v1419 = vadd.s32 %v1418, 127
        %v1420 = vshll.u32 %v1419, 23
        %v1421 = vor.u32 4788187, %v1420
        %v1422 = vand.u32 2147483647, %v1421
        %v1424 = vcvt.s32.f32 %v1417
        %v1425 = vmul.f32 %v1424, %v1422
        %v1426 = vxor.u32 %v1425, 2147483648
        %v1427 = vsel %vm1344, %v1426, %v1425
        %v1428 = vsub.s32 4, %v1404
        %v1429 = vsel %vm1344, %v1428, %v1404
        %v1430 = vsel %vm1343, %v309, %v1427
        %v1431 = vsel %vm1343, 0, %v1429
        %v1432 = vcosq.f32.pop %v1430
        %v1433 = vsinq.f32.pop %v1430
        %vm1434 = vweird.f32 %v309
        %v1435 = vadd.s32 %v1431, 3
        %v1436 = vand.u32 %v1435, 3
        %vm1437 = vcmp.lt.s32.totalorder %v1436, 2
        %vm1438 = vcmp.eq.s32.totalorder %v1436, 0
        %v1439 = vxor.u32 %v1433, 2147483648
        %v1440 = vsel %vm1438, %v1432, %v1439
        %vm1441 = vcmp.eq.s32.totalorder %v1436, 2
        %v1442 = vxor.u32 %v1432, 2147483648
        %v1443 = vsel %vm1441, %v1442, %v1433
        %v1444 = vsel %vm1437, %v1440, %v1443
        %v1445 = vsel %vm1434, nan, %v1444
        %v1446 = vand.u32 2147483647, %v396
        %vm1447 = vcmp.le.f32.partialorder %v1446, 0.7853982
        %vm1448 = vcmp.lt.s32.totalorder %v396, 0
        %v1449 = vand.u32 %v396, 2139095040
        %v1450 = vshrl.u32 %v1449, 23
        %v1451 = vsub.s32 %v1450, 127
        %v1452 = vand.u32 2147483647, %v396
        %v1453 = vand.u32 %v1452, 8388607
        %v1454 = vor.u32 %v1453, 8388608
        %v1455 = vsub.s32 0, %v1454
        %v1456 = vadd.s32 %v1451, 1
        %vm1457 = vcmp.gt.s32.totalorder %v1456, 0
        %v1458 = vsel %vm1457, %v1456, 0
        %v1459 = vshrl.u32 %v1458, 5
        %v1460 = vand.u32 %v1458, 31
        %v1461 = vsub.s32 32, %v1460
        %v1462 = vshrl.u32 683565275, %v1461
        %v1463 = vshll.u32 683565275, %v1460
        %v1464 = vshrl.u32 2475754826, %v1461
        %v1465 = vor.u32 %v1463, %v1464
        %v1466 = vshll.u32 2475754826, %v1460
        %v1467 = vshrl.u32 2131351028, %v1461
        %v1468 = vor.u32 %v1466, %v1467
        %v1469 = vshll.u32 2131351028, %v1460
        %v1470 = vshrl.u32 2102212464, %v1461
        %v1471 = vor.u32 %v1469, %v1470
        %v1472 = vshll.u32 2102212464, %v1460
        %v1473 = vshrl.u32 920167782, %v1461
        %v1474 = vor.u32 %v1472, %v1473
        %v1475 = vshll.u32 920167782, %v1460
        %v1476 = vshrl.u32 1326507024, %v1461
        %v1477 = vor.u32 %v1475, %v1476
        %vm1478 = vcmp.lt.s32.totalorder %v1459, 1
        %vm1479 = vcmp.lt.s32.totalorder %v1459, 2
        %vm1480 = vcmp.lt.s32.totalorder %v1459, 3
        %vm1481 = vcmp.lt.s32.totalorder %v1459, 4
        %v1482 = vsel %vm1478, %v1462, %v1465
        %v1483 = vsel %vm1481, %v1471, 2102212464
        %v1484 = vsel %vm1480, %v1468, %v1483
        %v1485 = vsel %vm1479, %v1482, %v1484
        %v1486 = vsel %vm1478, %v1465, %v1468
        %v1487 = vsel %vm1481, %v1474, 920167782
        %v1488 = vsel %vm1480, %v1471, %v1487
        %v1489 = vsel %vm1479, %v1486, %v1488
        %v1490 = vsel %vm1478, %v1468, %v1471
        %v1491 = vsel %vm1481, %v1477, 1326507024
        %v1492 = vsel %vm1480, %v1474, %v1491
        %v1493 = vsel %vm1479, %v1490, %v1492
        %v1494 = vshll.u32 %v1454, 8
        %v1495 = vmul.u32.u64.compose %v1494, %v1493
        %v1496 = vextract.low.u32 %v1495
        %v1497 = vextract.high.u32 %v1495
        %v1498 = vmul.u32.u64.compose %v1494, %v1489
        %v1499 = vextract.low.u32 %v1498
        %v1500 = vextract.high.u32 %v1498
        %v1501 = vmul.u32 %v1494, %v1485
        %v1502 = vadd.s32 %v1497, %v1499
        %vm1503 = vc.u32 %v1497, %v1499
        %v1504 = vadd.s32 %v1500, 1
        %v1505 = vsel %vm1503, %v1504, %v1500
        %v1506 = vadd.s32 %v1501, %v1505
        %v1507 = vadd.s32 %v1506, 536870912
        %v1508 = vshrl.u32 %v1507, 30
        %v1509 = vshll.u32 %v1508, 30
        %v1510 = vsub.s32 %v1506, %v1509
        %vm1511 = vcmp.lt.s32.totalorder %v1510, 0
        %v1512 = vsub.s32 0, %v1510
        %v1513 = vsel %vm1511, %v1512, %v1510
        %v1514 = vclz %v1513
        %v1515 = vsub.s32 %v1514, 2
        %vm1516 = vcmp.gt.s32.totalorder 0, %v1515
        %v1517 = vsel %vm1516, 0, %v1515
        %v1518 = vsub.s32 32, %v1517
        %v1519 = vshll.u32 %v1510, %v1517
        %v1520 = vshrl.u32 %v1502, %v1518
        %v1521 = vor.u32 %v1519, %v1520
        %v1522 = vsub.s32 4294967266, %v1517
        %v1523 = vadd.s32 %v1522, 127
        %v1524 = vshll.u32 %v1523, 23
        %v1525 = vor.u32 4788187, %v1524
        %v1526 = vand.u32 2147483647, %v1525
        %v1528 = vcvt.s32.f32 %v1521
        %v1529 = vmul.f32 %v1528, %v1526
        %v1530 = vxor.u32 %v1529, 2147483648
        %v1531 = vsel %vm1448, %v1530, %v1529
        %v1532 = vsub.s32 4, %v1508
        %v1533 = vsel %vm1448, %v1532, %v1508
        %v1534 = vsel %vm1447, %v396, %v1531
        %v1535 = vsel %vm1447, 0, %v1533
        %v1536 = vcosq.f32.pop %v1534
        %v1537 = vsinq.f32.pop %v1534
        %vm1538 = vweird.f32 %v396
        %v1539 = vadd.s32 %v1535, 3
        %v1540 = vand.u32 %v1539, 3
        %vm1541 = vcmp.lt.s32.totalorder %v1540, 2
        %vm1542 = vcmp.eq.s32.totalorder %v1540, 0
        %v1543 = vxor.u32 %v1537, 2147483648
        %v1544 = vsel %vm1542, %v1536, %v1543
        %vm1545 = vcmp.eq.s32.totalorder %v1540, 2
        %v1546 = vxor.u32 %v1536, 2147483648
        %v1547 = vsel %vm1545, %v1546, %v1537
        %v1548 = vsel %vm1541, %v1544, %v1547
        %v1549 = vsel %vm1538, nan, %v1548
        %v1550 = vand.u32 2147483647, %v398
        %vm1551 = vcmp.le.f32.partialorder %v1550, 0.7853982
        %vm1552 = vcmp.lt.s32.totalorder %v398, 0
        %v1553 = vand.u32 %v398, 2139095040
        %v1554 = vshrl.u32 %v1553, 23
        %v1555 = vsub.s32 %v1554, 127
        %v1556 = vand.u32 2147483647, %v398
        %v1557 = vand.u32 %v1556, 8388607
        %v1558 = vor.u32 %v1557, 8388608
        %v1559 = vsub.s32 0, %v1558
        %v1560 = vadd.s32 %v1555, 1
        %vm1561 = vcmp.gt.s32.totalorder %v1560, 0
        %v1562 = vsel %vm1561, %v1560, 0
        %v1563 = vshrl.u32 %v1562, 5
        %v1564 = vand.u32 %v1562, 31
        %v1565 = vsub.s32 32, %v1564
        %v1566 = vshrl.u32 683565275, %v1565
        %v1567 = vshll.u32 683565275, %v1564
        %v1568 = vshrl.u32 2475754826, %v1565
        %v1569 = vor.u32 %v1567, %v1568
        %v1570 = vshll.u32 2475754826, %v1564
        %v1571 = vshrl.u32 2131351028, %v1565
        %v1572 = vor.u32 %v1570, %v1571
        %v1573 = vshll.u32 2131351028, %v1564
        %v1574 = vshrl.u32 2102212464, %v1565
        %v1575 = vor.u32 %v1573, %v1574
        %v1576 = vshll.u32 2102212464, %v1564
        %v1577 = vshrl.u32 920167782, %v1565
        %v1578 = vor.u32 %v1576, %v1577
        %v1579 = vshll.u32 920167782, %v1564
        %v1580 = vshrl.u32 1326507024, %v1565
        %v1581 = vor.u32 %v1579, %v1580
        %vm1582 = vcmp.lt.s32.totalorder %v1563, 1
        %vm1583 = vcmp.lt.s32.totalorder %v1563, 2
        %vm1584 = vcmp.lt.s32.totalorder %v1563, 3
        %vm1585 = vcmp.lt.s32.totalorder %v1563, 4
        %v1586 = vsel %vm1582, %v1566, %v1569
        %v1587 = vsel %vm1585, %v1575, 2102212464
        %v1588 = vsel %vm1584, %v1572, %v1587
        %v1589 = vsel %vm1583, %v1586, %v1588
        %v1590 = vsel %vm1582, %v1569, %v1572
        %v1591 = vsel %vm1585, %v1578, 920167782
        %v1592 = vsel %vm1584, %v1575, %v1591
        %v1593 = vsel %vm1583, %v1590, %v1592
        %v1594 = vsel %vm1582, %v1572, %v1575
        %v1595 = vsel %vm1585, %v1581, 1326507024
        %v1596 = vsel %vm1584, %v1578, %v1595
        %v1597 = vsel %vm1583, %v1594, %v1596
        %v1598 = vshll.u32 %v1558, 8
        %v1599 = vmul.u32.u64.compose %v1598, %v1597
        %v1600 = vextract.low.u32 %v1599
        %v1601 = vextract.high.u32 %v1599
        %v1602 = vmul.u32.u64.compose %v1598, %v1593
        %v1603 = vextract.low.u32 %v1602
        %v1604 = vextract.high.u32 %v1602
        %v1605 = vmul.u32 %v1598, %v1589
        %v1606 = vadd.s32 %v1601, %v1603
        %vm1607 = vc.u32 %v1601, %v1603
        %v1608 = vadd.s32 %v1604, 1
        %v1609 = vsel %vm1607, %v1608, %v1604
        %v1610 = vadd.s32 %v1605, %v1609
        %v1611 = vadd.s32 %v1610, 536870912
        %v1612 = vshrl.u32 %v1611, 30
        %v1613 = vshll.u32 %v1612, 30
        %v1614 = vsub.s32 %v1610, %v1613
        %vm1615 = vcmp.lt.s32.totalorder %v1614, 0
        %v1616 = vsub.s32 0, %v1614
        %v1617 = vsel %vm1615, %v1616, %v1614
        %v1618 = vclz %v1617
        %v1619 = vsub.s32 %v1618, 2
        %vm1620 = vcmp.gt.s32.totalorder 0, %v1619
        %v1621 = vsel %vm1620, 0, %v1619
        %v1622 = vsub.s32 32, %v1621
        %v1623 = vshll.u32 %v1614, %v1621
        %v1624 = vshrl.u32 %v1606, %v1622
        %v1625 = vor.u32 %v1623, %v1624
        %v1626 = vsub.s32 4294967266, %v1621
        %v1627 = vadd.s32 %v1626, 127
        %v1628 = vshll.u32 %v1627, 23
        %v1629 = vor.u32 4788187, %v1628
        %v1630 = vand.u32 2147483647, %v1629
        %v1632 = vcvt.s32.f32 %v1625
        %v1633 = vmul.f32 %v1632, %v1630
        %v1634 = vxor.u32 %v1633, 2147483648
        %v1635 = vsel %vm1552, %v1634, %v1633
        %v1636 = vsub.s32 4, %v1612
        %v1637 = vsel %vm1552, %v1636, %v1612
        %v1638 = vsel %vm1551, %v398, %v1635
        %v1639 = vsel %vm1551, 0, %v1637
        %v1640 = vcosq.f32.pop %v1638
        %v1641 = vsinq.f32.pop %v1638
        %vm1642 = vweird.f32 %v398
        %v1643 = vadd.s32 %v1639, 3
        %v1644 = vand.u32 %v1643, 3
        %vm1645 = vcmp.lt.s32.totalorder %v1644, 2
        %vm1646 = vcmp.eq.s32.totalorder %v1644, 0
        %v1647 = vxor.u32 %v1641, 2147483648
        %v1648 = vsel %vm1646, %v1640, %v1647
        %vm1649 = vcmp.eq.s32.totalorder %v1644, 2
        %v1650 = vxor.u32 %v1640, 2147483648
        %v1651 = vsel %vm1649, %v1650, %v1641
        %v1652 = vsel %vm1645, %v1648, %v1651
        %v1653 = vsel %vm1642, nan, %v1652
        %v1654 = vand.u32 2147483647, %v313
        %vm1655 = vcmp.le.f32.partialorder %v1654, 0.7853982
        %vm1656 = vcmp.lt.s32.totalorder %v313, 0
        %v1657 = vand.u32 %v313, 2139095040
        %v1658 = vshrl.u32 %v1657, 23
        %v1659 = vsub.s32 %v1658, 127
        %v1660 = vand.u32 2147483647, %v313
        %v1661 = vand.u32 %v1660, 8388607
        %v1662 = vor.u32 %v1661, 8388608
        %v1663 = vsub.s32 0, %v1662
        %v1664 = vadd.s32 %v1659, 1
        %vm1665 = vcmp.gt.s32.totalorder %v1664, 0
        %v1666 = vsel %vm1665, %v1664, 0
        %v1667 = vshrl.u32 %v1666, 5
        %v1668 = vand.u32 %v1666, 31
        %v1669 = vsub.s32 32, %v1668
        %v1670 = vshrl.u32 683565275, %v1669
        %v1671 = vshll.u32 683565275, %v1668
        %v1672 = vshrl.u32 2475754826, %v1669
        %v1673 = vor.u32 %v1671, %v1672
        %v1674 = vshll.u32 2475754826, %v1668
        %v1675 = vshrl.u32 2131351028, %v1669
        %v1676 = vor.u32 %v1674, %v1675
        %v1677 = vshll.u32 2131351028, %v1668
        %v1678 = vshrl.u32 2102212464, %v1669
        %v1679 = vor.u32 %v1677, %v1678
        %v1680 = vshll.u32 2102212464, %v1668
        %v1681 = vshrl.u32 920167782, %v1669
        %v1682 = vor.u32 %v1680, %v1681
        %v1683 = vshll.u32 920167782, %v1668
        %v1684 = vshrl.u32 1326507024, %v1669
        %v1685 = vor.u32 %v1683, %v1684
        %vm1686 = vcmp.lt.s32.totalorder %v1667, 1
        %vm1687 = vcmp.lt.s32.totalorder %v1667, 2
        %vm1688 = vcmp.lt.s32.totalorder %v1667, 3
        %vm1689 = vcmp.lt.s32.totalorder %v1667, 4
        %v1690 = vsel %vm1686, %v1670, %v1673
        %v1691 = vsel %vm1689, %v1679, 2102212464
        %v1692 = vsel %vm1688, %v1676, %v1691
        %v1693 = vsel %vm1687, %v1690, %v1692
        %v1694 = vsel %vm1686, %v1673, %v1676
        %v1695 = vsel %vm1689, %v1682, 920167782
        %v1696 = vsel %vm1688, %v1679, %v1695
        %v1697 = vsel %vm1687, %v1694, %v1696
        %v1698 = vsel %vm1686, %v1676, %v1679
        %v1699 = vsel %vm1689, %v1685, 1326507024
        %v1700 = vsel %vm1688, %v1682, %v1699
        %v1701 = vsel %vm1687, %v1698, %v1700
        %v1702 = vshll.u32 %v1662, 8
        %v1703 = vmul.u32.u64.compose %v1702, %v1701
        %v1704 = vextract.low.u32 %v1703
        %v1705 = vextract.high.u32 %v1703
        %v1706 = vmul.u32.u64.compose %v1702, %v1697
        %v1707 = vextract.low.u32 %v1706
        %v1708 = vextract.high.u32 %v1706
        %v1709 = vmul.u32 %v1702, %v1693
        %v1710 = vadd.s32 %v1705, %v1707
        %vm1711 = vc.u32 %v1705, %v1707
        %v1712 = vadd.s32 %v1708, 1
        %v1713 = vsel %vm1711, %v1712, %v1708
        %v1714 = vadd.s32 %v1709, %v1713
        %v1715 = vadd.s32 %v1714, 536870912
        %v1716 = vshrl.u32 %v1715, 30
        %v1717 = vshll.u32 %v1716, 30
        %v1718 = vsub.s32 %v1714, %v1717
        %vm1719 = vcmp.lt.s32.totalorder %v1718, 0
        %v1720 = vsub.s32 0, %v1718
        %v1721 = vsel %vm1719, %v1720, %v1718
        %v1722 = vclz %v1721
        %v1723 = vsub.s32 %v1722, 2
        %vm1724 = vcmp.gt.s32.totalorder 0, %v1723
        %v1725 = vsel %vm1724, 0, %v1723
        %v1726 = vsub.s32 32, %v1725
        %v1727 = vshll.u32 %v1718, %v1725
        %v1728 = vshrl.u32 %v1710, %v1726
        %v1729 = vor.u32 %v1727, %v1728
        %v1730 = vsub.s32 4294967266, %v1725
        %v1731 = vadd.s32 %v1730, 127
        %v1732 = vshll.u32 %v1731, 23
        %v1733 = vor.u32 4788187, %v1732
        %v1734 = vand.u32 2147483647, %v1733
        %v1736 = vcvt.s32.f32 %v1729
        %v1737 = vmul.f32 %v1736, %v1734
        %v1738 = vxor.u32 %v1737, 2147483648
        %v1739 = vsel %vm1656, %v1738, %v1737
        %v1740 = vsub.s32 4, %v1716
        %v1741 = vsel %vm1656, %v1740, %v1716
        %v1742 = vsel %vm1655, %v313, %v1739
        %v1743 = vsel %vm1655, 0, %v1741
        %v1744 = vcosq.f32.pop %v1742
        %v1745 = vsinq.f32.pop %v1742
        %vm1746 = vweird.f32 %v313
        %v1747 = vadd.s32 %v1743, 3
        %v1748 = vand.u32 %v1747, 3
        %vm1749 = vcmp.lt.s32.totalorder %v1748, 2
        %vm1750 = vcmp.eq.s32.totalorder %v1748, 0
        %v1751 = vxor.u32 %v1745, 2147483648
        %v1752 = vsel %vm1750, %v1744, %v1751
        %vm1753 = vcmp.eq.s32.totalorder %v1748, 2
        %v1754 = vxor.u32 %v1744, 2147483648
        %v1755 = vsel %vm1753, %v1754, %v1745
        %v1756 = vsel %vm1749, %v1752, %v1755
        %v1757 = vsel %vm1746, nan, %v1756
        %v1758 = vand.u32 2147483647, %v315
        %vm1759 = vcmp.le.f32.partialorder %v1758, 0.7853982
        %vm1760 = vcmp.lt.s32.totalorder %v315, 0
        %v1761 = vand.u32 %v315, 2139095040
        %v1762 = vshrl.u32 %v1761, 23
        %v1763 = vsub.s32 %v1762, 127
        %v1764 = vand.u32 2147483647, %v315
        %v1765 = vand.u32 %v1764, 8388607
        %v1766 = vor.u32 %v1765, 8388608
        %v1767 = vsub.s32 0, %v1766
        %v1768 = vadd.s32 %v1763, 1
        %vm1769 = vcmp.gt.s32.totalorder %v1768, 0
        %v1770 = vsel %vm1769, %v1768, 0
        %v1771 = vshrl.u32 %v1770, 5
        %v1772 = vand.u32 %v1770, 31
        %v1773 = vsub.s32 32, %v1772
        %v1774 = vshrl.u32 683565275, %v1773
        %v1775 = vshll.u32 683565275, %v1772
        %v1776 = vshrl.u32 2475754826, %v1773
        %v1777 = vor.u32 %v1775, %v1776
        %v1778 = vshll.u32 2475754826, %v1772
        %v1779 = vshrl.u32 2131351028, %v1773
        %v1780 = vor.u32 %v1778, %v1779
        %v1781 = vshll.u32 2131351028, %v1772
        %v1782 = vshrl.u32 2102212464, %v1773
        %v1783 = vor.u32 %v1781, %v1782
        %v1784 = vshll.u32 2102212464, %v1772
        %v1785 = vshrl.u32 920167782, %v1773
        %v1786 = vor.u32 %v1784, %v1785
        %v1787 = vshll.u32 920167782, %v1772
        %v1788 = vshrl.u32 1326507024, %v1773
        %v1789 = vor.u32 %v1787, %v1788
        %vm1790 = vcmp.lt.s32.totalorder %v1771, 1
        %vm1791 = vcmp.lt.s32.totalorder %v1771, 2
        %vm1792 = vcmp.lt.s32.totalorder %v1771, 3
        %vm1793 = vcmp.lt.s32.totalorder %v1771, 4
        %v1794 = vsel %vm1790, %v1774, %v1777
        %v1795 = vsel %vm1793, %v1783, 2102212464
        %v1796 = vsel %vm1792, %v1780, %v1795
        %v1797 = vsel %vm1791, %v1794, %v1796
        %v1798 = vsel %vm1790, %v1777, %v1780
        %v1799 = vsel %vm1793, %v1786, 920167782
        %v1800 = vsel %vm1792, %v1783, %v1799
        %v1801 = vsel %vm1791, %v1798, %v1800
        %v1802 = vsel %vm1790, %v1780, %v1783
        %v1803 = vsel %vm1793, %v1789, 1326507024
        %v1804 = vsel %vm1792, %v1786, %v1803
        %v1805 = vsel %vm1791, %v1802, %v1804
        %v1806 = vshll.u32 %v1766, 8
        %v1807 = vmul.u32.u64.compose %v1806, %v1805
        %v1808 = vextract.low.u32 %v1807
        %v1809 = vextract.high.u32 %v1807
        %v1810 = vmul.u32.u64.compose %v1806, %v1801
        %v1811 = vextract.low.u32 %v1810
        %v1812 = vextract.high.u32 %v1810
        %v1813 = vmul.u32 %v1806, %v1797
        %v1814 = vadd.s32 %v1809, %v1811
        %vm1815 = vc.u32 %v1809, %v1811
        %v1816 = vadd.s32 %v1812, 1
        %v1817 = vsel %vm1815, %v1816, %v1812
        %v1818 = vadd.s32 %v1813, %v1817
        %v1819 = vadd.s32 %v1818, 536870912
        %v1820 = vshrl.u32 %v1819, 30
        %v1821 = vshll.u32 %v1820, 30
        %v1822 = vsub.s32 %v1818, %v1821
        %vm1823 = vcmp.lt.s32.totalorder %v1822, 0
        %v1824 = vsub.s32 0, %v1822
        %v1825 = vsel %vm1823, %v1824, %v1822
        %v1826 = vclz %v1825
        %v1827 = vsub.s32 %v1826, 2
        %vm1828 = vcmp.gt.s32.totalorder 0, %v1827
        %v1829 = vsel %vm1828, 0, %v1827
        %v1830 = vsub.s32 32, %v1829
        %v1831 = vshll.u32 %v1822, %v1829
        %v1832 = vshrl.u32 %v1814, %v1830
        %v1833 = vor.u32 %v1831, %v1832
        %v1834 = vsub.s32 4294967266, %v1829
        %v1835 = vadd.s32 %v1834, 127
        %v1836 = vshll.u32 %v1835, 23
        %v1837 = vor.u32 4788187, %v1836
        %v1838 = vand.u32 2147483647, %v1837
        %v1840 = vcvt.s32.f32 %v1833
        %v1841 = vmul.f32 %v1840, %v1838
        %v1842 = vxor.u32 %v1841, 2147483648
        %v1843 = vsel %vm1760, %v1842, %v1841
        %v1844 = vsub.s32 4, %v1820
        %v1845 = vsel %vm1760, %v1844, %v1820
        %v1846 = vsel %vm1759, %v315, %v1843
        %v1847 = vsel %vm1759, 0, %v1845
        %v1848 = vcosq.f32.pop %v1846
        %v1849 = vsinq.f32.pop %v1846
        %vm1850 = vweird.f32 %v315
        %v1851 = vadd.s32 %v1847, 3
        %v1852 = vand.u32 %v1851, 3
        %vm1853 = vcmp.lt.s32.totalorder %v1852, 2
        %vm1854 = vcmp.eq.s32.totalorder %v1852, 0
        %v1855 = vxor.u32 %v1849, 2147483648
        %v1856 = vsel %vm1854, %v1848, %v1855
        %vm1857 = vcmp.eq.s32.totalorder %v1852, 2
        %v1858 = vxor.u32 %v1848, 2147483648
        %v1859 = vsel %vm1857, %v1858, %v1849
        %v1860 = vsel %vm1853, %v1856, %v1859
        %v1861 = vsel %vm1850, nan, %v1860
        %v1862 = vand.u32 2147483647, %v402
        %vm1863 = vcmp.le.f32.partialorder %v1862, 0.7853982
        %vm1864 = vcmp.lt.s32.totalorder %v402, 0
        %v1865 = vand.u32 %v402, 2139095040
        %v1866 = vshrl.u32 %v1865, 23
        %v1867 = vsub.s32 %v1866, 127
        %v1868 = vand.u32 2147483647, %v402
        %v1869 = vand.u32 %v1868, 8388607
        %v1870 = vor.u32 %v1869, 8388608
        %v1871 = vsub.s32 0, %v1870
        %v1872 = vadd.s32 %v1867, 1
        %vm1873 = vcmp.gt.s32.totalorder %v1872, 0
        %v1874 = vsel %vm1873, %v1872, 0
        %v1875 = vshrl.u32 %v1874, 5
        %v1876 = vand.u32 %v1874, 31
        %v1877 = vsub.s32 32, %v1876
        %v1878 = vshrl.u32 683565275, %v1877
        %v1879 = vshll.u32 683565275, %v1876
        %v1880 = vshrl.u32 2475754826, %v1877
        %v1881 = vor.u32 %v1879, %v1880
        %v1882 = vshll.u32 2475754826, %v1876
        %v1883 = vshrl.u32 2131351028, %v1877
        %v1884 = vor.u32 %v1882, %v1883
        %v1885 = vshll.u32 2131351028, %v1876
        %v1886 = vshrl.u32 2102212464, %v1877
        %v1887 = vor.u32 %v1885, %v1886
        %v1888 = vshll.u32 2102212464, %v1876
        %v1889 = vshrl.u32 920167782, %v1877
        %v1890 = vor.u32 %v1888, %v1889
        %v1891 = vshll.u32 920167782, %v1876
        %v1892 = vshrl.u32 1326507024, %v1877
        %v1893 = vor.u32 %v1891, %v1892
        %vm1894 = vcmp.lt.s32.totalorder %v1875, 1
        %vm1895 = vcmp.lt.s32.totalorder %v1875, 2
        %vm1896 = vcmp.lt.s32.totalorder %v1875, 3
        %vm1897 = vcmp.lt.s32.totalorder %v1875, 4
        %v1898 = vsel %vm1894, %v1878, %v1881
        %v1899 = vsel %vm1897, %v1887, 2102212464
        %v1900 = vsel %vm1896, %v1884, %v1899
        %v1901 = vsel %vm1895, %v1898, %v1900
        %v1902 = vsel %vm1894, %v1881, %v1884
        %v1903 = vsel %vm1897, %v1890, 920167782
        %v1904 = vsel %vm1896, %v1887, %v1903
        %v1905 = vsel %vm1895, %v1902, %v1904
        %v1906 = vsel %vm1894, %v1884, %v1887
        %v1907 = vsel %vm1897, %v1893, 1326507024
        %v1908 = vsel %vm1896, %v1890, %v1907
        %v1909 = vsel %vm1895, %v1906, %v1908
        %v1910 = vshll.u32 %v1870, 8
        %v1911 = vmul.u32.u64.compose %v1910, %v1909
        %v1912 = vextract.low.u32 %v1911
        %v1913 = vextract.high.u32 %v1911
        %v1914 = vmul.u32.u64.compose %v1910, %v1905
        %v1915 = vextract.low.u32 %v1914
        %v1916 = vextract.high.u32 %v1914
        %v1917 = vmul.u32 %v1910, %v1901
        %v1918 = vadd.s32 %v1913, %v1915
        %vm1919 = vc.u32 %v1913, %v1915
        %v1920 = vadd.s32 %v1916, 1
        %v1921 = vsel %vm1919, %v1920, %v1916
        %v1922 = vadd.s32 %v1917, %v1921
        %v1923 = vadd.s32 %v1922, 536870912
        %v1924 = vshrl.u32 %v1923, 30
        %v1925 = vshll.u32 %v1924, 30
        %v1926 = vsub.s32 %v1922, %v1925
        %vm1927 = vcmp.lt.s32.totalorder %v1926, 0
        %v1928 = vsub.s32 0, %v1926
        %v1929 = vsel %vm1927, %v1928, %v1926
        %v1930 = vclz %v1929
        %v1931 = vsub.s32 %v1930, 2
        %vm1932 = vcmp.gt.s32.totalorder 0, %v1931
        %v1933 = vsel %vm1932, 0, %v1931
        %v1934 = vsub.s32 32, %v1933
        %v1935 = vshll.u32 %v1926, %v1933
        %v1936 = vshrl.u32 %v1918, %v1934
        %v1937 = vor.u32 %v1935, %v1936
        %v1938 = vsub.s32 4294967266, %v1933
        %v1939 = vadd.s32 %v1938, 127
        %v1940 = vshll.u32 %v1939, 23
        %v1941 = vor.u32 4788187, %v1940
        %v1942 = vand.u32 2147483647, %v1941
        %v1944 = vcvt.s32.f32 %v1937
        %v1945 = vmul.f32 %v1944, %v1942
        %v1946 = vxor.u32 %v1945, 2147483648
        %v1947 = vsel %vm1864, %v1946, %v1945
        %v1948 = vsub.s32 4, %v1924
        %v1949 = vsel %vm1864, %v1948, %v1924
        %v1950 = vsel %vm1863, %v402, %v1947
        %v1951 = vsel %vm1863, 0, %v1949
        %v1952 = vcosq.f32.pop %v1950
        %v1953 = vsinq.f32.pop %v1950
        %vm1954 = vweird.f32 %v402
        %v1955 = vadd.s32 %v1951, 3
        %v1956 = vand.u32 %v1955, 3
        %vm1957 = vcmp.lt.s32.totalorder %v1956, 2
        %vm1958 = vcmp.eq.s32.totalorder %v1956, 0
        %v1959 = vxor.u32 %v1953, 2147483648
        %v1960 = vsel %vm1958, %v1952, %v1959
        %vm1961 = vcmp.eq.s32.totalorder %v1956, 2
        %v1962 = vxor.u32 %v1952, 2147483648
        %v1963 = vsel %vm1961, %v1962, %v1953
        %v1964 = vsel %vm1957, %v1960, %v1963
        %v1965 = vsel %vm1954, nan, %v1964
        %v1966 = vand.u32 2147483647, %v404
        %vm1967 = vcmp.le.f32.partialorder %v1966, 0.7853982
        %vm1968 = vcmp.lt.s32.totalorder %v404, 0
        %v1969 = vand.u32 %v404, 2139095040
        %v1970 = vshrl.u32 %v1969, 23
        %v1971 = vsub.s32 %v1970, 127
        %v1972 = vand.u32 2147483647, %v404
        %v1973 = vand.u32 %v1972, 8388607
        %v1974 = vor.u32 %v1973, 8388608
        %v1975 = vsub.s32 0, %v1974
        %v1976 = vadd.s32 %v1971, 1
        %vm1977 = vcmp.gt.s32.totalorder %v1976, 0
        %v1978 = vsel %vm1977, %v1976, 0
        %v1979 = vshrl.u32 %v1978, 5
        %v1980 = vand.u32 %v1978, 31
        %v1981 = vsub.s32 32, %v1980
        %v1982 = vshrl.u32 683565275, %v1981
        %v1983 = vshll.u32 683565275, %v1980
        %v1984 = vshrl.u32 2475754826, %v1981
        %v1985 = vor.u32 %v1983, %v1984
        %v1986 = vshll.u32 2475754826, %v1980
        %v1987 = vshrl.u32 2131351028, %v1981
        %v1988 = vor.u32 %v1986, %v1987
        %v1989 = vshll.u32 2131351028, %v1980
        %v1990 = vshrl.u32 2102212464, %v1981
        %v1991 = vor.u32 %v1989, %v1990
        %v1992 = vshll.u32 2102212464, %v1980
        %v1993 = vshrl.u32 920167782, %v1981
        %v1994 = vor.u32 %v1992, %v1993
        %v1995 = vshll.u32 920167782, %v1980
        %v1996 = vshrl.u32 1326507024, %v1981
        %v1997 = vor.u32 %v1995, %v1996
        %vm1998 = vcmp.lt.s32.totalorder %v1979, 1
        %vm1999 = vcmp.lt.s32.totalorder %v1979, 2
        %vm2000 = vcmp.lt.s32.totalorder %v1979, 3
        %vm2001 = vcmp.lt.s32.totalorder %v1979, 4
        %v2002 = vsel %vm1998, %v1982, %v1985
        %v2003 = vsel %vm2001, %v1991, 2102212464
        %v2004 = vsel %vm2000, %v1988, %v2003
        %v2005 = vsel %vm1999, %v2002, %v2004
        %v2006 = vsel %vm1998, %v1985, %v1988
        %v2007 = vsel %vm2001, %v1994, 920167782
        %v2008 = vsel %vm2000, %v1991, %v2007
        %v2009 = vsel %vm1999, %v2006, %v2008
        %v2010 = vsel %vm1998, %v1988, %v1991
        %v2011 = vsel %vm2001, %v1997, 1326507024
        %v2012 = vsel %vm2000, %v1994, %v2011
        %v2013 = vsel %vm1999, %v2010, %v2012
        %v2014 = vshll.u32 %v1974, 8
        %v2015 = vmul.u32.u64.compose %v2014, %v2013
        %v2016 = vextract.low.u32 %v2015
        %v2017 = vextract.high.u32 %v2015
        %v2018 = vmul.u32.u64.compose %v2014, %v2009
        %v2019 = vextract.low.u32 %v2018
        %v2020 = vextract.high.u32 %v2018
        %v2021 = vmul.u32 %v2014, %v2005
        %v2022 = vadd.s32 %v2017, %v2019
        %vm2023 = vc.u32 %v2017, %v2019
        %v2024 = vadd.s32 %v2020, 1
        %v2025 = vsel %vm2023, %v2024, %v2020
        %v2026 = vadd.s32 %v2021, %v2025
        %v2027 = vadd.s32 %v2026, 536870912
        %v2028 = vshrl.u32 %v2027, 30
        %v2029 = vshll.u32 %v2028, 30
        %v2030 = vsub.s32 %v2026, %v2029
        %vm2031 = vcmp.lt.s32.totalorder %v2030, 0
        %v2032 = vsub.s32 0, %v2030
        %v2033 = vsel %vm2031, %v2032, %v2030
        %v2034 = vclz %v2033
        %v2035 = vsub.s32 %v2034, 2
        %vm2036 = vcmp.gt.s32.totalorder 0, %v2035
        %v2037 = vsel %vm2036, 0, %v2035
        %v2038 = vsub.s32 32, %v2037
        %v2039 = vshll.u32 %v2030, %v2037
        %v2040 = vshrl.u32 %v2022, %v2038
        %v2041 = vor.u32 %v2039, %v2040
        %v2042 = vsub.s32 4294967266, %v2037
        %v2043 = vadd.s32 %v2042, 127
        %v2044 = vshll.u32 %v2043, 23
        %v2045 = vor.u32 4788187, %v2044
        %v2046 = vand.u32 2147483647, %v2045
        %v2048 = vcvt.s32.f32 %v2041
        %v2049 = vmul.f32 %v2048, %v2046
        %v2050 = vxor.u32 %v2049, 2147483648
        %v2051 = vsel %vm1968, %v2050, %v2049
        %v2052 = vsub.s32 4, %v2028
        %v2053 = vsel %vm1968, %v2052, %v2028
        %v2054 = vsel %vm1967, %v404, %v2051
        %v2055 = vsel %vm1967, 0, %v2053
        %v2056 = vcosq.f32.pop %v2054
        %v2057 = vsinq.f32.pop %v2054
        %vm2058 = vweird.f32 %v404
        %v2059 = vadd.s32 %v2055, 3
        %v2060 = vand.u32 %v2059, 3
        %vm2061 = vcmp.lt.s32.totalorder %v2060, 2
        %vm2062 = vcmp.eq.s32.totalorder %v2060, 0
        %v2063 = vxor.u32 %v2057, 2147483648
        %v2064 = vsel %vm2062, %v2056, %v2063
        %vm2065 = vcmp.eq.s32.totalorder %v2060, 2
        %v2066 = vxor.u32 %v2056, 2147483648
        %v2067 = vsel %vm2065, %v2066, %v2057
        %v2068 = vsel %vm2061, %v2064, %v2067
        %v2069 = vsel %vm2058, nan, %v2068
        %v2070 = vld [vmem:[%s204] sm:$0xff]
        %v2071 = vld [vmem:[%s204 + $0x8] sm:$0xff]
        %v2072 = vld [vmem:[%s204 + $0x10] sm:$0xff]
        %v2073 = vld [vmem:[%s204 + $0x18] sm:$0xff]
        %2074 = vset.pattern.permute.xlu0 8
        %2075 = vperm.xlu0 %2074, %v207
        %v2076 = vpop.permute.xlu0 %2075
        %2078 = vset.pattern.permute.xlu0 8
        %2079 = vperm.xlu0 %2078, %v208
        %v2080 = vpop.permute.xlu0 %2079
        %2082 = vset.pattern.permute.xlu0 8
        %2083 = vperm.xlu0 %2082, %v209
        %v2084 = vpop.permute.xlu0 %2083
        %2086 = vset.pattern.permute.xlu0 8
        %2087 = vperm.xlu0 %2086, %v210
        %v2088 = vpop.permute.xlu0 %2087
        %vm2090 = vcmask 261120
        %v2092 = vsel %vm2090, %v2070, 0
        %v2095 = vsel %vm2090, %v2071, 0
        %v2098 = vsel %vm2090, %v2072, 0
        %v2101 = vsel %vm2090, %v2073, 0
        %2103 = vmatprep.subr.mxu0 %v613
        %2104 = vmatpush1.msra.mxu0 %v509
        %2105 = vmatprep.subr.mxu0 %v1029
        %2106 = vmatpush1.msra.mxu0 %v925
        %2107 = vmatprep.subr.mxu0 %v1445
        %2108 = vmatpush1.msra.mxu0 %v1341
        %2109 = vmatprep.subr.mxu0 %v1861
        %2110 = vmatpush1.msra.mxu0 %v1757
        %2111 = vmatprep.subr.mxu0 0.0
        %2112 = vmatpush1.msra.mxu0 0.0
        %2113 = vmatprep.subr.mxu0 0.0
        %2114 = vmatpush1.msra.mxu0 0.0
        %2115 = vmatprep.subr.mxu0 0.0
        %2116 = vmatpush1.msra.mxu0 0.0
        %2117 = vmatprep.subr.mxu0 0.0
        %2118 = vmatpush1.msra.mxu0 0.0
        %2119 = vmatprep.subr.mxu0 0.0
        %2120 = vmatpush1.msra.mxu0 0.0
        %2121 = vmatprep.subr.mxu0 0.0
        %2122 = vmatpush1.msra.mxu0 0.0
        %2123 = vmatprep.subr.mxu0 0.0
        %2124 = vmatpush1.msra.mxu0 0.0
        %2125 = vmatprep.subr.mxu0 0.0
        %2126 = vmatpush1.msra.mxu0 0.0
        %2127 = vmatprep.subr.mxu0 0.0
        %2128 = vmatpush1.msra.mxu0 0.0
        %2129 = vmatprep.subr.mxu0 0.0
        %2130 = vmatpush1.msra.mxu0 0.0
        %2131 = vmatprep.subr.mxu0 0.0
        %2132 = vmatpush1.msra.mxu0 0.0
        %2133 = vmatprep.subr.mxu0 0.0
        %2134 = vmatpush1.msra.mxu0 0.0
        %2135 = vmatprep.subr.mxu0 0.0
        %2136 = vmatpush1.msra.mxu0 0.0
        %2137 = vmatprep.subr.mxu0 0.0
        %2138 = vmatpush1.msra.mxu0 0.0
        %2139 = vmatprep.subr.mxu0 0.0
        %2140 = vmatpush1.msra.mxu0 0.0
        %2141 = vmatprep.subr.mxu0 0.0
        %2142 = vmatpush1.msra.mxu0 0.0
        %2143 = vmatprep.subr.mxu0 0.0
        %2144 = vmatpush1.msra.mxu0 0.0
        %2145 = vmatprep.subr.mxu0 0.0
        %2146 = vmatpush1.msra.mxu0 0.0
        %2147 = vmatprep.subr.mxu0 0.0
        %2148 = vmatpush1.msra.mxu0 0.0
        %2149 = vmatprep.subr.mxu0 0.0
        %2150 = vmatpush1.msra.mxu0 0.0
        %2151 = vmatprep.subr.mxu0 0.0
        %2152 = vmatpush1.msra.mxu0 0.0
        %2153 = vmatprep.subr.mxu0 0.0
        %2154 = vmatpush1.msra.mxu0 0.0
        %2155 = vmatprep.subr.mxu0 0.0
        %2156 = vmatpush1.msra.mxu0 0.0
        %2157 = vmatprep.subr.mxu0 0.0
        %2158 = vmatpush1.msra.mxu0 0.0
        %2159 = vmatprep.subr.mxu0 0.0
        %2160 = vmatpush1.msra.mxu0 0.0
        %2161 = vmatprep.subr.mxu0 0.0
        %2162 = vmatpush1.msra.mxu0 0.0
        %2163 = vmatprep.subr.mxu0 0.0
        %2164 = vmatpush1.msra.mxu0 0.0
        %2165 = vmatprep.subr.mxu0 0.0
        %2166 = vmatpush1.msra.mxu0 0.0
        %2167 = vmatprep.mubr.f32.mxu0 0.0
        %2168 = vmatmul.mubr.f32.gmra.mrb[0].mxu0 %v2092
        %v2169 = vpop.f32.mrb[0].mxu0
        %v2170 = vadd.f32 %v2076, %v2169
        %v2171 = vpop.f32.mrb[0].mxu0
        %v2172 = vadd.f32 %v2076, %v2171
        %2173 = vmatprep.mubr.f32.mxu0 0.0
        %2174 = vmatmul.mubr.f32.gmra.mrb[0].mxu0 %v2095
        %v2175 = vpop.f32.mrb[0].mxu0
        %v2176 = vadd.f32 %v2080, %v2175
        %v2177 = vpop.f32.mrb[0].mxu0
        %v2178 = vadd.f32 %v2080, %v2177
        %2179 = vmatprep.mubr.f32.mxu0 0.0
        %2180 = vmatmul.mubr.f32.gmra.mrb[0].mxu0 %v2098
        %v2181 = vpop.f32.mrb[0].mxu0
        %v2182 = vadd.f32 %v2084, %v2181
        %v2183 = vpop.f32.mrb[0].mxu0
        %v2184 = vadd.f32 %v2084, %v2183
        %2185 = vmatprep.mubr.f32.mxu0 0.0
        %2186 = vmatmul.mubr.f32.gmra.mrb[0].mxu0 %v2101
        %v2187 = vpop.f32.mrb[0].mxu0
        %v2188 = vadd.f32 %v2088, %v2187
        %v2189 = vpop.f32.mrb[0].mxu0
        %v2190 = vadd.f32 %v2088, %v2189
        %2191 = vdwg.mxu0
        %2192 = vmatprep.subr.mxu0 %v821
        %2193 = vmatpush1.msra.mxu0 %v717
        %2194 = vmatprep.subr.mxu0 %v1237
        %2195 = vmatpush1.msra.mxu0 %v1133
        %2196 = vmatprep.subr.mxu0 %v1653
        %2197 = vmatpush1.msra.mxu0 %v1549
        %2198 = vmatprep.subr.mxu0 %v2069
        %2199 = vmatpush1.msra.mxu0 %v1965
        %2200 = vmatprep.subr.mxu0 0.0
        %2201 = vmatpush1.msra.mxu0 0.0
        %2202 = vmatprep.subr.mxu0 0.0
        %2203 = vmatpush1.msra.mxu0 0.0
        %2204 = vmatprep.subr.mxu0 0.0
        %2205 = vmatpush1.msra.mxu0 0.0
        %2206 = vmatprep.subr.mxu0 0.0
        %2207 = vmatpush1.msra.mxu0 0.0
        %2208 = vmatprep.subr.mxu0 0.0
        %2209 = vmatpush1.msra.mxu0 0.0
        %2210 = vmatprep.subr.mxu0 0.0
        %2211 = vmatpush1.msra.mxu0 0.0
        %2212 = vmatprep.subr.mxu0 0.0
        %2213 = vmatpush1.msra.mxu0 0.0
        %2214 = vmatprep.subr.mxu0 0.0
        %2215 = vmatpush1.msra.mxu0 0.0
        %2216 = vmatprep.subr.mxu0 0.0
        %2217 = vmatpush1.msra.mxu0 0.0
        %2218 = vmatprep.subr.mxu0 0.0
        %2219 = vmatpush1.msra.mxu0 0.0
        %2220 = vmatprep.subr.mxu0 0.0
        %2221 = vmatpush1.msra.mxu0 0.0
        %2222 = vmatprep.subr.mxu0 0.0
        %2223 = vmatpush1.msra.mxu0 0.0
        %2224 = vmatprep.subr.mxu0 0.0
        %2225 = vmatpush1.msra.mxu0 0.0
        %2226 = vmatprep.subr.mxu0 0.0
        %2227 = vmatpush1.msra.mxu0 0.0
        %2228 = vmatprep.subr.mxu0 0.0
        %2229 = vmatpush1.msra.mxu0 0.0
        %2230 = vmatprep.subr.mxu0 0.0
        %2231 = vmatpush1.msra.mxu0 0.0
        %2232 = vmatprep.subr.mxu0 0.0
        %2233 = vmatpush1.msra.mxu0 0.0
        %2234 = vmatprep.subr.mxu0 0.0
        %2235 = vmatpush1.msra.mxu0 0.0
        %2236 = vmatprep.subr.mxu0 0.0
        %2237 = vmatpush1.msra.mxu0 0.0
        %2238 = vmatprep.subr.mxu0 0.0
        %2239 = vmatpush1.msra.mxu0 0.0
        %2240 = vmatprep.subr.mxu0 0.0
        %2241 = vmatpush1.msra.mxu0 0.0
        %2242 = vmatprep.subr.mxu0 0.0
        %2243 = vmatpush1.msra.mxu0 0.0
        %2244 = vmatprep.subr.mxu0 0.0
        %2245 = vmatpush1.msra.mxu0 0.0
        %2246 = vmatprep.subr.mxu0 0.0
        %2247 = vmatpush1.msra.mxu0 0.0
        %2248 = vmatprep.subr.mxu0 0.0
        %2249 = vmatpush1.msra.mxu0 0.0
        %2250 = vmatprep.subr.mxu0 0.0
        %2251 = vmatpush1.msra.mxu0 0.0
        %2252 = vmatprep.subr.mxu0 0.0
        %2253 = vmatpush1.msra.mxu0 0.0
        %2254 = vmatprep.subr.mxu0 0.0
        %2255 = vmatpush1.msra.mxu0 0.0
        %2256 = vmatprep.mubr.f32.mxu0 0.0
        %2257 = vmatmul.mubr.f32.gmra.mrb[0].mxu0 %v2092
        %v2258 = vpop.f32.mrb[0].mxu0
        %v2259 = vadd.f32 %v2076, %v2258
        %v2260 = vpop.f32.mrb[0].mxu0
        %v2261 = vadd.f32 %v2076, %v2260
        %2262 = vmatprep.mubr.f32.mxu0 0.0
        %2263 = vmatmul.mubr.f32.gmra.mrb[0].mxu0 %v2095
        %v2264 = vpop.f32.mrb[0].mxu0
        %v2265 = vadd.f32 %v2080, %v2264
        %v2266 = vpop.f32.mrb[0].mxu0
        %v2267 = vadd.f32 %v2080, %v2266
        %2268 = vmatprep.mubr.f32.mxu0 0.0
        %2269 = vmatmul.mubr.f32.gmra.mrb[0].mxu0 %v2098
        %v2270 = vpop.f32.mrb[0].mxu0
        %v2271 = vadd.f32 %v2084, %v2270
        %v2272 = vpop.f32.mrb[0].mxu0
        %v2273 = vadd.f32 %v2084, %v2272
        %2274 = vmatprep.mubr.f32.mxu0 0.0
        %2275 = vmatmul.mubr.f32.gmra.mrb[0].mxu0 %v2101
        %v2276 = vpop.f32.mrb[0].mxu0
        %v2277 = vadd.f32 %v2088, %v2276
        %v2278 = vpop.f32.mrb[0].mxu0
        %v2279 = vadd.f32 %v2088, %v2278
        %2280 = vdwg.mxu0
        %v2281 = vand.u32 2147483647, %v2170
        %vm2282 = vcmp.le.f32.partialorder %v2281, 0.7853982
        %vm2283 = vcmp.lt.s32.totalorder %v2170, 0
        %v2284 = vand.u32 %v2170, 2139095040
        %v2285 = vshrl.u32 %v2284, 23
        %v2286 = vsub.s32 %v2285, 127
        %v2287 = vand.u32 2147483647, %v2170
        %v2288 = vand.u32 %v2287, 8388607
        %v2289 = vor.u32 %v2288, 8388608
        %v2290 = vsub.s32 0, %v2289
        %v2291 = vadd.s32 %v2286, 1
        %vm2292 = vcmp.gt.s32.totalorder %v2291, 0
        %v2293 = vsel %vm2292, %v2291, 0
        %v2294 = vshrl.u32 %v2293, 5
        %v2295 = vand.u32 %v2293, 31
        %v2296 = vsub.s32 32, %v2295
        %v2297 = vshrl.u32 683565275, %v2296
        %v2298 = vshll.u32 683565275, %v2295
        %v2299 = vshrl.u32 2475754826, %v2296
        %v2300 = vor.u32 %v2298, %v2299
        %v2301 = vshll.u32 2475754826, %v2295
        %v2302 = vshrl.u32 2131351028, %v2296
        %v2303 = vor.u32 %v2301, %v2302
        %v2304 = vshll.u32 2131351028, %v2295
        %v2305 = vshrl.u32 2102212464, %v2296
        %v2306 = vor.u32 %v2304, %v2305
        %v2307 = vshll.u32 2102212464, %v2295
        %v2308 = vshrl.u32 920167782, %v2296
        %v2309 = vor.u32 %v2307, %v2308
        %v2310 = vshll.u32 920167782, %v2295
        %v2311 = vshrl.u32 1326507024, %v2296
        %v2312 = vor.u32 %v2310, %v2311
        %vm2313 = vcmp.lt.s32.totalorder %v2294, 1
        %vm2314 = vcmp.lt.s32.totalorder %v2294, 2
        %vm2315 = vcmp.lt.s32.totalorder %v2294, 3
        %vm2316 = vcmp.lt.s32.totalorder %v2294, 4
        %v2317 = vsel %vm2313, %v2297, %v2300
        %v2318 = vsel %vm2316, %v2306, 2102212464
        %v2319 = vsel %vm2315, %v2303, %v2318
        %v2320 = vsel %vm2314, %v2317, %v2319
        %v2321 = vsel %vm2313, %v2300, %v2303
        %v2322 = vsel %vm2316, %v2309, 920167782
        %v2323 = vsel %vm2315, %v2306, %v2322
        %v2324 = vsel %vm2314, %v2321, %v2323
        %v2325 = vsel %vm2313, %v2303, %v2306
        %v2326 = vsel %vm2316, %v2312, 1326507024
        %v2327 = vsel %vm2315, %v2309, %v2326
        %v2328 = vsel %vm2314, %v2325, %v2327
        %v2329 = vshll.u32 %v2289, 8
        %v2330 = vmul.u32.u64.compose %v2329, %v2328
        %v2331 = vextract.low.u32 %v2330
        %v2332 = vextract.high.u32 %v2330
        %v2333 = vmul.u32.u64.compose %v2329, %v2324
        %v2334 = vextract.low.u32 %v2333
        %v2335 = vextract.high.u32 %v2333
        %v2336 = vmul.u32 %v2329, %v2320
        %v2337 = vadd.s32 %v2332, %v2334
        %vm2338 = vc.u32 %v2332, %v2334
        %v2339 = vadd.s32 %v2335, 1
        %v2340 = vsel %vm2338, %v2339, %v2335
        %v2341 = vadd.s32 %v2336, %v2340
        %v2342 = vadd.s32 %v2341, 536870912
        %v2343 = vshrl.u32 %v2342, 30
        %v2344 = vshll.u32 %v2343, 30
        %v2345 = vsub.s32 %v2341, %v2344
        %vm2346 = vcmp.lt.s32.totalorder %v2345, 0
        %v2347 = vsub.s32 0, %v2345
        %v2348 = vsel %vm2346, %v2347, %v2345
        %v2349 = vclz %v2348
        %v2350 = vsub.s32 %v2349, 2
        %vm2351 = vcmp.gt.s32.totalorder 0, %v2350
        %v2352 = vsel %vm2351, 0, %v2350
        %v2353 = vsub.s32 32, %v2352
        %v2354 = vshll.u32 %v2345, %v2352
        %v2355 = vshrl.u32 %v2337, %v2353
        %v2356 = vor.u32 %v2354, %v2355
        %v2357 = vsub.s32 4294967266, %v2352
        %v2358 = vadd.s32 %v2357, 127
        %v2359 = vshll.u32 %v2358, 23
        %v2360 = vor.u32 4788187, %v2359
        %v2361 = vand.u32 2147483647, %v2360
        %v2363 = vcvt.s32.f32 %v2356
        %v2364 = vmul.f32 %v2363, %v2361
        %v2365 = vxor.u32 %v2364, 2147483648
        %v2366 = vsel %vm2283, %v2365, %v2364
        %v2367 = vsub.s32 4, %v2343
        %v2368 = vsel %vm2283, %v2367, %v2343
        %v2369 = vsel %vm2282, %v2170, %v2366
        %v2370 = vsel %vm2282, 0, %v2368
        %v2371 = vcosq.f32.pop %v2369
        %v2372 = vsinq.f32.pop %v2369
        %vm2373 = vweird.f32 %v2170
        %v2374 = vadd.s32 %v2370, 3
        %v2375 = vand.u32 %v2374, 3
        %vm2376 = vcmp.lt.s32.totalorder %v2375, 2
        %vm2377 = vcmp.eq.s32.totalorder %v2375, 0
        %v2378 = vxor.u32 %v2372, 2147483648
        %v2379 = vsel %vm2377, %v2371, %v2378
        %vm2380 = vcmp.eq.s32.totalorder %v2375, 2
        %v2381 = vxor.u32 %v2371, 2147483648
        %v2382 = vsel %vm2380, %v2381, %v2372
        %v2383 = vsel %vm2376, %v2379, %v2382
        %v2384 = vsel %vm2373, nan, %v2383
        %v2385 = vand.u32 2147483647, %v2172
        %vm2386 = vcmp.le.f32.partialorder %v2385, 0.7853982
        %vm2387 = vcmp.lt.s32.totalorder %v2172, 0
        %v2388 = vand.u32 %v2172, 2139095040
        %v2389 = vshrl.u32 %v2388, 23
        %v2390 = vsub.s32 %v2389, 127
        %v2391 = vand.u32 2147483647, %v2172
        %v2392 = vand.u32 %v2391, 8388607
        %v2393 = vor.u32 %v2392, 8388608
        %v2394 = vsub.s32 0, %v2393
        %v2395 = vadd.s32 %v2390, 1
        %vm2396 = vcmp.gt.s32.totalorder %v2395, 0
        %v2397 = vsel %vm2396, %v2395, 0
        %v2398 = vshrl.u32 %v2397, 5
        %v2399 = vand.u32 %v2397, 31
        %v2400 = vsub.s32 32, %v2399
        %v2401 = vshrl.u32 683565275, %v2400
        %v2402 = vshll.u32 683565275, %v2399
        %v2403 = vshrl.u32 2475754826, %v2400
        %v2404 = vor.u32 %v2402, %v2403
        %v2405 = vshll.u32 2475754826, %v2399
        %v2406 = vshrl.u32 2131351028, %v2400
        %v2407 = vor.u32 %v2405, %v2406
        %v2408 = vshll.u32 2131351028, %v2399
        %v2409 = vshrl.u32 2102212464, %v2400
        %v2410 = vor.u32 %v2408, %v2409
        %v2411 = vshll.u32 2102212464, %v2399
        %v2412 = vshrl.u32 920167782, %v2400
        %v2413 = vor.u32 %v2411, %v2412
        %v2414 = vshll.u32 920167782, %v2399
        %v2415 = vshrl.u32 1326507024, %v2400
        %v2416 = vor.u32 %v2414, %v2415
        %vm2417 = vcmp.lt.s32.totalorder %v2398, 1
        %vm2418 = vcmp.lt.s32.totalorder %v2398, 2
        %vm2419 = vcmp.lt.s32.totalorder %v2398, 3
        %vm2420 = vcmp.lt.s32.totalorder %v2398, 4
        %v2421 = vsel %vm2417, %v2401, %v2404
        %v2422 = vsel %vm2420, %v2410, 2102212464
        %v2423 = vsel %vm2419, %v2407, %v2422
        %v2424 = vsel %vm2418, %v2421, %v2423
        %v2425 = vsel %vm2417, %v2404, %v2407
        %v2426 = vsel %vm2420, %v2413, 920167782
        %v2427 = vsel %vm2419, %v2410, %v2426
        %v2428 = vsel %vm2418, %v2425, %v2427
        %v2429 = vsel %vm2417, %v2407, %v2410
        %v2430 = vsel %vm2420, %v2416, 1326507024
        %v2431 = vsel %vm2419, %v2413, %v2430
        %v2432 = vsel %vm2418, %v2429, %v2431
        %v2433 = vshll.u32 %v2393, 8
        %v2434 = vmul.u32.u64.compose %v2433, %v2432
        %v2435 = vextract.low.u32 %v2434
        %v2436 = vextract.high.u32 %v2434
        %v2437 = vmul.u32.u64.compose %v2433, %v2428
        %v2438 = vextract.low.u32 %v2437
        %v2439 = vextract.high.u32 %v2437
        %v2440 = vmul.u32 %v2433, %v2424
        %v2441 = vadd.s32 %v2436, %v2438
        %vm2442 = vc.u32 %v2436, %v2438
        %v2443 = vadd.s32 %v2439, 1
        %v2444 = vsel %vm2442, %v2443, %v2439
        %v2445 = vadd.s32 %v2440, %v2444
        %v2446 = vadd.s32 %v2445, 536870912
        %v2447 = vshrl.u32 %v2446, 30
        %v2448 = vshll.u32 %v2447, 30
        %v2449 = vsub.s32 %v2445, %v2448
        %vm2450 = vcmp.lt.s32.totalorder %v2449, 0
        %v2451 = vsub.s32 0, %v2449
        %v2452 = vsel %vm2450, %v2451, %v2449
        %v2453 = vclz %v2452
        %v2454 = vsub.s32 %v2453, 2
        %vm2455 = vcmp.gt.s32.totalorder 0, %v2454
        %v2456 = vsel %vm2455, 0, %v2454
        %v2457 = vsub.s32 32, %v2456
        %v2458 = vshll.u32 %v2449, %v2456
        %v2459 = vshrl.u32 %v2441, %v2457
        %v2460 = vor.u32 %v2458, %v2459
        %v2461 = vsub.s32 4294967266, %v2456
        %v2462 = vadd.s32 %v2461, 127
        %v2463 = vshll.u32 %v2462, 23
        %v2464 = vor.u32 4788187, %v2463
        %v2465 = vand.u32 2147483647, %v2464
        %v2467 = vcvt.s32.f32 %v2460
        %v2468 = vmul.f32 %v2467, %v2465
        %v2469 = vxor.u32 %v2468, 2147483648
        %v2470 = vsel %vm2387, %v2469, %v2468
        %v2471 = vsub.s32 4, %v2447
        %v2472 = vsel %vm2387, %v2471, %v2447
        %v2473 = vsel %vm2386, %v2172, %v2470
        %v2474 = vsel %vm2386, 0, %v2472
        %v2475 = vcosq.f32.pop %v2473
        %v2476 = vsinq.f32.pop %v2473
        %vm2477 = vweird.f32 %v2172
        %v2478 = vadd.s32 %v2474, 3
        %v2479 = vand.u32 %v2478, 3
        %vm2480 = vcmp.lt.s32.totalorder %v2479, 2
        %vm2481 = vcmp.eq.s32.totalorder %v2479, 0
        %v2482 = vxor.u32 %v2476, 2147483648
        %v2483 = vsel %vm2481, %v2475, %v2482
        %vm2484 = vcmp.eq.s32.totalorder %v2479, 2
        %v2485 = vxor.u32 %v2475, 2147483648
        %v2486 = vsel %vm2484, %v2485, %v2476
        %v2487 = vsel %vm2480, %v2483, %v2486
        %v2488 = vsel %vm2477, nan, %v2487
        %v2489 = vand.u32 2147483647, %v2259
        %vm2490 = vcmp.le.f32.partialorder %v2489, 0.7853982
        %vm2491 = vcmp.lt.s32.totalorder %v2259, 0
        %v2492 = vand.u32 %v2259, 2139095040
        %v2493 = vshrl.u32 %v2492, 23
        %v2494 = vsub.s32 %v2493, 127
        %v2495 = vand.u32 2147483647, %v2259
        %v2496 = vand.u32 %v2495, 8388607
        %v2497 = vor.u32 %v2496, 8388608
        %v2498 = vsub.s32 0, %v2497
        %v2499 = vadd.s32 %v2494, 1
        %vm2500 = vcmp.gt.s32.totalorder %v2499, 0
        %v2501 = vsel %vm2500, %v2499, 0
        %v2502 = vshrl.u32 %v2501, 5
        %v2503 = vand.u32 %v2501, 31
        %v2504 = vsub.s32 32, %v2503
        %v2505 = vshrl.u32 683565275, %v2504
        %v2506 = vshll.u32 683565275, %v2503
        %v2507 = vshrl.u32 2475754826, %v2504
        %v2508 = vor.u32 %v2506, %v2507
        %v2509 = vshll.u32 2475754826, %v2503
        %v2510 = vshrl.u32 2131351028, %v2504
        %v2511 = vor.u32 %v2509, %v2510
        %v2512 = vshll.u32 2131351028, %v2503
        %v2513 = vshrl.u32 2102212464, %v2504
        %v2514 = vor.u32 %v2512, %v2513
        %v2515 = vshll.u32 2102212464, %v2503
        %v2516 = vshrl.u32 920167782, %v2504
        %v2517 = vor.u32 %v2515, %v2516
        %v2518 = vshll.u32 920167782, %v2503
        %v2519 = vshrl.u32 1326507024, %v2504
        %v2520 = vor.u32 %v2518, %v2519
        %vm2521 = vcmp.lt.s32.totalorder %v2502, 1
        %vm2522 = vcmp.lt.s32.totalorder %v2502, 2
        %vm2523 = vcmp.lt.s32.totalorder %v2502, 3
        %vm2524 = vcmp.lt.s32.totalorder %v2502, 4
        %v2525 = vsel %vm2521, %v2505, %v2508
        %v2526 = vsel %vm2524, %v2514, 2102212464
        %v2527 = vsel %vm2523, %v2511, %v2526
        %v2528 = vsel %vm2522, %v2525, %v2527
        %v2529 = vsel %vm2521, %v2508, %v2511
        %v2530 = vsel %vm2524, %v2517, 920167782
        %v2531 = vsel %vm2523, %v2514, %v2530
        %v2532 = vsel %vm2522, %v2529, %v2531
        %v2533 = vsel %vm2521, %v2511, %v2514
        %v2534 = vsel %vm2524, %v2520, 1326507024
        %v2535 = vsel %vm2523, %v2517, %v2534
        %v2536 = vsel %vm2522, %v2533, %v2535
        %v2537 = vshll.u32 %v2497, 8
        %v2538 = vmul.u32.u64.compose %v2537, %v2536
        %v2539 = vextract.low.u32 %v2538
        %v2540 = vextract.high.u32 %v2538
        %v2541 = vmul.u32.u64.compose %v2537, %v2532
        %v2542 = vextract.low.u32 %v2541
        %v2543 = vextract.high.u32 %v2541
        %v2544 = vmul.u32 %v2537, %v2528
        %v2545 = vadd.s32 %v2540, %v2542
        %vm2546 = vc.u32 %v2540, %v2542
        %v2547 = vadd.s32 %v2543, 1
        %v2548 = vsel %vm2546, %v2547, %v2543
        %v2549 = vadd.s32 %v2544, %v2548
        %v2550 = vadd.s32 %v2549, 536870912
        %v2551 = vshrl.u32 %v2550, 30
        %v2552 = vshll.u32 %v2551, 30
        %v2553 = vsub.s32 %v2549, %v2552
        %vm2554 = vcmp.lt.s32.totalorder %v2553, 0
        %v2555 = vsub.s32 0, %v2553
        %v2556 = vsel %vm2554, %v2555, %v2553
        %v2557 = vclz %v2556
        %v2558 = vsub.s32 %v2557, 2
        %vm2559 = vcmp.gt.s32.totalorder 0, %v2558
        %v2560 = vsel %vm2559, 0, %v2558
        %v2561 = vsub.s32 32, %v2560
        %v2562 = vshll.u32 %v2553, %v2560
        %v2563 = vshrl.u32 %v2545, %v2561
        %v2564 = vor.u32 %v2562, %v2563
        %v2565 = vsub.s32 4294967266, %v2560
        %v2566 = vadd.s32 %v2565, 127
        %v2567 = vshll.u32 %v2566, 23
        %v2568 = vor.u32 4788187, %v2567
        %v2569 = vand.u32 2147483647, %v2568
        %v2571 = vcvt.s32.f32 %v2564
        %v2572 = vmul.f32 %v2571, %v2569
        %v2573 = vxor.u32 %v2572, 2147483648
        %v2574 = vsel %vm2491, %v2573, %v2572
        %v2575 = vsub.s32 4, %v2551
        %v2576 = vsel %vm2491, %v2575, %v2551
        %v2577 = vsel %vm2490, %v2259, %v2574
        %v2578 = vsel %vm2490, 0, %v2576
        %v2579 = vcosq.f32.pop %v2577
        %v2580 = vsinq.f32.pop %v2577
        %vm2581 = vweird.f32 %v2259
        %v2582 = vadd.s32 %v2578, 3
        %v2583 = vand.u32 %v2582, 3
        %vm2584 = vcmp.lt.s32.totalorder %v2583, 2
        %vm2585 = vcmp.eq.s32.totalorder %v2583, 0
        %v2586 = vxor.u32 %v2580, 2147483648
        %v2587 = vsel %vm2585, %v2579, %v2586
        %vm2588 = vcmp.eq.s32.totalorder %v2583, 2
        %v2589 = vxor.u32 %v2579, 2147483648
        %v2590 = vsel %vm2588, %v2589, %v2580
        %v2591 = vsel %vm2584, %v2587, %v2590
        %v2592 = vsel %vm2581, nan, %v2591
        %v2593 = vand.u32 2147483647, %v2261
        %vm2594 = vcmp.le.f32.partialorder %v2593, 0.7853982
        %vm2595 = vcmp.lt.s32.totalorder %v2261, 0
        %v2596 = vand.u32 %v2261, 2139095040
        %v2597 = vshrl.u32 %v2596, 23
        %v2598 = vsub.s32 %v2597, 127
        %v2599 = vand.u32 2147483647, %v2261
        %v2600 = vand.u32 %v2599, 8388607
        %v2601 = vor.u32 %v2600, 8388608
        %v2602 = vsub.s32 0, %v2601
        %v2603 = vadd.s32 %v2598, 1
        %vm2604 = vcmp.gt.s32.totalorder %v2603, 0
        %v2605 = vsel %vm2604, %v2603, 0
        %v2606 = vshrl.u32 %v2605, 5
        %v2607 = vand.u32 %v2605, 31
        %v2608 = vsub.s32 32, %v2607
        %v2609 = vshrl.u32 683565275, %v2608
        %v2610 = vshll.u32 683565275, %v2607
        %v2611 = vshrl.u32 2475754826, %v2608
        %v2612 = vor.u32 %v2610, %v2611
        %v2613 = vshll.u32 2475754826, %v2607
        %v2614 = vshrl.u32 2131351028, %v2608
        %v2615 = vor.u32 %v2613, %v2614
        %v2616 = vshll.u32 2131351028, %v2607
        %v2617 = vshrl.u32 2102212464, %v2608
        %v2618 = vor.u32 %v2616, %v2617
        %v2619 = vshll.u32 2102212464, %v2607
        %v2620 = vshrl.u32 920167782, %v2608
        %v2621 = vor.u32 %v2619, %v2620
        %v2622 = vshll.u32 920167782, %v2607
        %v2623 = vshrl.u32 1326507024, %v2608
        %v2624 = vor.u32 %v2622, %v2623
        %vm2625 = vcmp.lt.s32.totalorder %v2606, 1
        %vm2626 = vcmp.lt.s32.totalorder %v2606, 2
        %vm2627 = vcmp.lt.s32.totalorder %v2606, 3
        %vm2628 = vcmp.lt.s32.totalorder %v2606, 4
        %v2629 = vsel %vm2625, %v2609, %v2612
        %v2630 = vsel %vm2628, %v2618, 2102212464
        %v2631 = vsel %vm2627, %v2615, %v2630
        %v2632 = vsel %vm2626, %v2629, %v2631
        %v2633 = vsel %vm2625, %v2612, %v2615
        %v2634 = vsel %vm2628, %v2621, 920167782
        %v2635 = vsel %vm2627, %v2618, %v2634
        %v2636 = vsel %vm2626, %v2633, %v2635
        %v2637 = vsel %vm2625, %v2615, %v2618
        %v2638 = vsel %vm2628, %v2624, 1326507024
        %v2639 = vsel %vm2627, %v2621, %v2638
        %v2640 = vsel %vm2626, %v2637, %v2639
        %v2641 = vshll.u32 %v2601, 8
        %v2642 = vmul.u32.u64.compose %v2641, %v2640
        %v2643 = vextract.low.u32 %v2642
        %v2644 = vextract.high.u32 %v2642
        %v2645 = vmul.u32.u64.compose %v2641, %v2636
        %v2646 = vextract.low.u32 %v2645
        %v2647 = vextract.high.u32 %v2645
        %v2648 = vmul.u32 %v2641, %v2632
        %v2649 = vadd.s32 %v2644, %v2646
        %vm2650 = vc.u32 %v2644, %v2646
        %v2651 = vadd.s32 %v2647, 1
        %v2652 = vsel %vm2650, %v2651, %v2647
        %v2653 = vadd.s32 %v2648, %v2652
        %v2654 = vadd.s32 %v2653, 536870912
        %v2655 = vshrl.u32 %v2654, 30
        %v2656 = vshll.u32 %v2655, 30
        %v2657 = vsub.s32 %v2653, %v2656
        %vm2658 = vcmp.lt.s32.totalorder %v2657, 0
        %v2659 = vsub.s32 0, %v2657
        %v2660 = vsel %vm2658, %v2659, %v2657
        %v2661 = vclz %v2660
        %v2662 = vsub.s32 %v2661, 2
        %vm2663 = vcmp.gt.s32.totalorder 0, %v2662
        %v2664 = vsel %vm2663, 0, %v2662
        %v2665 = vsub.s32 32, %v2664
        %v2666 = vshll.u32 %v2657, %v2664
        %v2667 = vshrl.u32 %v2649, %v2665
        %v2668 = vor.u32 %v2666, %v2667
        %v2669 = vsub.s32 4294967266, %v2664
        %v2670 = vadd.s32 %v2669, 127
        %v2671 = vshll.u32 %v2670, 23
        %v2672 = vor.u32 4788187, %v2671
        %v2673 = vand.u32 2147483647, %v2672
        %v2675 = vcvt.s32.f32 %v2668
        %v2676 = vmul.f32 %v2675, %v2673
        %v2677 = vxor.u32 %v2676, 2147483648
        %v2678 = vsel %vm2595, %v2677, %v2676
        %v2679 = vsub.s32 4, %v2655
        %v2680 = vsel %vm2595, %v2679, %v2655
        %v2681 = vsel %vm2594, %v2261, %v2678
        %v2682 = vsel %vm2594, 0, %v2680
        %v2683 = vcosq.f32.pop %v2681
        %v2684 = vsinq.f32.pop %v2681
        %vm2685 = vweird.f32 %v2261
        %v2686 = vadd.s32 %v2682, 3
        %v2687 = vand.u32 %v2686, 3
        %vm2688 = vcmp.lt.s32.totalorder %v2687, 2
        %vm2689 = vcmp.eq.s32.totalorder %v2687, 0
        %v2690 = vxor.u32 %v2684, 2147483648
        %v2691 = vsel %vm2689, %v2683, %v2690
        %vm2692 = vcmp.eq.s32.totalorder %v2687, 2
        %v2693 = vxor.u32 %v2683, 2147483648
        %v2694 = vsel %vm2692, %v2693, %v2684
        %v2695 = vsel %vm2688, %v2691, %v2694
        %v2696 = vsel %vm2685, nan, %v2695
        %v2697 = vand.u32 2147483647, %v2176
        %vm2698 = vcmp.le.f32.partialorder %v2697, 0.7853982
        %vm2699 = vcmp.lt.s32.totalorder %v2176, 0
        %v2700 = vand.u32 %v2176, 2139095040
        %v2701 = vshrl.u32 %v2700, 23
        %v2702 = vsub.s32 %v2701, 127
        %v2703 = vand.u32 2147483647, %v2176
        %v2704 = vand.u32 %v2703, 8388607
        %v2705 = vor.u32 %v2704, 8388608
        %v2706 = vsub.s32 0, %v2705
        %v2707 = vadd.s32 %v2702, 1
        %vm2708 = vcmp.gt.s32.totalorder %v2707, 0
        %v2709 = vsel %vm2708, %v2707, 0
        %v2710 = vshrl.u32 %v2709, 5
        %v2711 = vand.u32 %v2709, 31
        %v2712 = vsub.s32 32, %v2711
        %v2713 = vshrl.u32 683565275, %v2712
        %v2714 = vshll.u32 683565275, %v2711
        %v2715 = vshrl.u32 2475754826, %v2712
        %v2716 = vor.u32 %v2714, %v2715
        %v2717 = vshll.u32 2475754826, %v2711
        %v2718 = vshrl.u32 2131351028, %v2712
        %v2719 = vor.u32 %v2717, %v2718
        %v2720 = vshll.u32 2131351028, %v2711
        %v2721 = vshrl.u32 2102212464, %v2712
        %v2722 = vor.u32 %v2720, %v2721
        %v2723 = vshll.u32 2102212464, %v2711
        %v2724 = vshrl.u32 920167782, %v2712
        %v2725 = vor.u32 %v2723, %v2724
        %v2726 = vshll.u32 920167782, %v2711
        %v2727 = vshrl.u32 1326507024, %v2712
        %v2728 = vor.u32 %v2726, %v2727
        %vm2729 = vcmp.lt.s32.totalorder %v2710, 1
        %vm2730 = vcmp.lt.s32.totalorder %v2710, 2
        %vm2731 = vcmp.lt.s32.totalorder %v2710, 3
        %vm2732 = vcmp.lt.s32.totalorder %v2710, 4
        %v2733 = vsel %vm2729, %v2713, %v2716
        %v2734 = vsel %vm2732, %v2722, 2102212464
        %v2735 = vsel %vm2731, %v2719, %v2734
        %v2736 = vsel %vm2730, %v2733, %v2735
        %v2737 = vsel %vm2729, %v2716, %v2719
        %v2738 = vsel %vm2732, %v2725, 920167782
        %v2739 = vsel %vm2731, %v2722, %v2738
        %v2740 = vsel %vm2730, %v2737, %v2739
        %v2741 = vsel %vm2729, %v2719, %v2722
        %v2742 = vsel %vm2732, %v2728, 1326507024
        %v2743 = vsel %vm2731, %v2725, %v2742
        %v2744 = vsel %vm2730, %v2741, %v2743
        %v2745 = vshll.u32 %v2705, 8
        %v2746 = vmul.u32.u64.compose %v2745, %v2744
        %v2747 = vextract.low.u32 %v2746
        %v2748 = vextract.high.u32 %v2746
        %v2749 = vmul.u32.u64.compose %v2745, %v2740
        %v2750 = vextract.low.u32 %v2749
        %v2751 = vextract.high.u32 %v2749
        %v2752 = vmul.u32 %v2745, %v2736
        %v2753 = vadd.s32 %v2748, %v2750
        %vm2754 = vc.u32 %v2748, %v2750
        %v2755 = vadd.s32 %v2751, 1
        %v2756 = vsel %vm2754, %v2755, %v2751
        %v2757 = vadd.s32 %v2752, %v2756
        %v2758 = vadd.s32 %v2757, 536870912
        %v2759 = vshrl.u32 %v2758, 30
        %v2760 = vshll.u32 %v2759, 30
        %v2761 = vsub.s32 %v2757, %v2760
        %vm2762 = vcmp.lt.s32.totalorder %v2761, 0
        %v2763 = vsub.s32 0, %v2761
        %v2764 = vsel %vm2762, %v2763, %v2761
        %v2765 = vclz %v2764
        %v2766 = vsub.s32 %v2765, 2
        %vm2767 = vcmp.gt.s32.totalorder 0, %v2766
        %v2768 = vsel %vm2767, 0, %v2766
        %v2769 = vsub.s32 32, %v2768
        %v2770 = vshll.u32 %v2761, %v2768
        %v2771 = vshrl.u32 %v2753, %v2769
        %v2772 = vor.u32 %v2770, %v2771
        %v2773 = vsub.s32 4294967266, %v2768
        %v2774 = vadd.s32 %v2773, 127
        %v2775 = vshll.u32 %v2774, 23
        %v2776 = vor.u32 4788187, %v2775
        %v2777 = vand.u32 2147483647, %v2776
        %v2779 = vcvt.s32.f32 %v2772
        %v2780 = vmul.f32 %v2779, %v2777
        %v2781 = vxor.u32 %v2780, 2147483648
        %v2782 = vsel %vm2699, %v2781, %v2780
        %v2783 = vsub.s32 4, %v2759
        %v2784 = vsel %vm2699, %v2783, %v2759
        %v2785 = vsel %vm2698, %v2176, %v2782
        %v2786 = vsel %vm2698, 0, %v2784
        %v2787 = vcosq.f32.pop %v2785
        %v2788 = vsinq.f32.pop %v2785
        %vm2789 = vweird.f32 %v2176
        %v2790 = vadd.s32 %v2786, 3
        %v2791 = vand.u32 %v2790, 3
        %vm2792 = vcmp.lt.s32.totalorder %v2791, 2
        %vm2793 = vcmp.eq.s32.totalorder %v2791, 0
        %v2794 = vxor.u32 %v2788, 2147483648
        %v2795 = vsel %vm2793, %v2787, %v2794
        %vm2796 = vcmp.eq.s32.totalorder %v2791, 2
        %v2797 = vxor.u32 %v2787, 2147483648
        %v2798 = vsel %vm2796, %v2797, %v2788
        %v2799 = vsel %vm2792, %v2795, %v2798
        %v2800 = vsel %vm2789, nan, %v2799
        %v2801 = vand.u32 2147483647, %v2178
        %vm2802 = vcmp.le.f32.partialorder %v2801, 0.7853982
        %vm2803 = vcmp.lt.s32.totalorder %v2178, 0
        %v2804 = vand.u32 %v2178, 2139095040
        %v2805 = vshrl.u32 %v2804, 23
        %v2806 = vsub.s32 %v2805, 127
        %v2807 = vand.u32 2147483647, %v2178
        %v2808 = vand.u32 %v2807, 8388607
        %v2809 = vor.u32 %v2808, 8388608
        %v2810 = vsub.s32 0, %v2809
        %v2811 = vadd.s32 %v2806, 1
        %vm2812 = vcmp.gt.s32.totalorder %v2811, 0
        %v2813 = vsel %vm2812, %v2811, 0
        %v2814 = vshrl.u32 %v2813, 5
        %v2815 = vand.u32 %v2813, 31
        %v2816 = vsub.s32 32, %v2815
        %v2817 = vshrl.u32 683565275, %v2816
        %v2818 = vshll.u32 683565275, %v2815
        %v2819 = vshrl.u32 2475754826, %v2816
        %v2820 = vor.u32 %v2818, %v2819
        %v2821 = vshll.u32 2475754826, %v2815
        %v2822 = vshrl.u32 2131351028, %v2816
        %v2823 = vor.u32 %v2821, %v2822
        %v2824 = vshll.u32 2131351028, %v2815
        %v2825 = vshrl.u32 2102212464, %v2816
        %v2826 = vor.u32 %v2824, %v2825
        %v2827 = vshll.u32 2102212464, %v2815
        %v2828 = vshrl.u32 920167782, %v2816
        %v2829 = vor.u32 %v2827, %v2828
        %v2830 = vshll.u32 920167782, %v2815
        %v2831 = vshrl.u32 1326507024, %v2816
        %v2832 = vor.u32 %v2830, %v2831
        %vm2833 = vcmp.lt.s32.totalorder %v2814, 1
        %vm2834 = vcmp.lt.s32.totalorder %v2814, 2
        %vm2835 = vcmp.lt.s32.totalorder %v2814, 3
        %vm2836 = vcmp.lt.s32.totalorder %v2814, 4
        %v2837 = vsel %vm2833, %v2817, %v2820
        %v2838 = vsel %vm2836, %v2826, 2102212464
        %v2839 = vsel %vm2835, %v2823, %v2838
        %v2840 = vsel %vm2834, %v2837, %v2839
        %v2841 = vsel %vm2833, %v2820, %v2823
        %v2842 = vsel %vm2836, %v2829, 920167782
        %v2843 = vsel %vm2835, %v2826, %v2842
        %v2844 = vsel %vm2834, %v2841, %v2843
        %v2845 = vsel %vm2833, %v2823, %v2826
        %v2846 = vsel %vm2836, %v2832, 1326507024
        %v2847 = vsel %vm2835, %v2829, %v2846
        %v2848 = vsel %vm2834, %v2845, %v2847
        %v2849 = vshll.u32 %v2809, 8
        %v2850 = vmul.u32.u64.compose %v2849, %v2848
        %v2851 = vextract.low.u32 %v2850
        %v2852 = vextract.high.u32 %v2850
        %v2853 = vmul.u32.u64.compose %v2849, %v2844
        %v2854 = vextract.low.u32 %v2853
        %v2855 = vextract.high.u32 %v2853
        %v2856 = vmul.u32 %v2849, %v2840
        %v2857 = vadd.s32 %v2852, %v2854
        %vm2858 = vc.u32 %v2852, %v2854
        %v2859 = vadd.s32 %v2855, 1
        %v2860 = vsel %vm2858, %v2859, %v2855
        %v2861 = vadd.s32 %v2856, %v2860
        %v2862 = vadd.s32 %v2861, 536870912
        %v2863 = vshrl.u32 %v2862, 30
        %v2864 = vshll.u32 %v2863, 30
        %v2865 = vsub.s32 %v2861, %v2864
        %vm2866 = vcmp.lt.s32.totalorder %v2865, 0
        %v2867 = vsub.s32 0, %v2865
        %v2868 = vsel %vm2866, %v2867, %v2865
        %v2869 = vclz %v2868
        %v2870 = vsub.s32 %v2869, 2
        %vm2871 = vcmp.gt.s32.totalorder 0, %v2870
        %v2872 = vsel %vm2871, 0, %v2870
        %v2873 = vsub.s32 32, %v2872
        %v2874 = vshll.u32 %v2865, %v2872
        %v2875 = vshrl.u32 %v2857, %v2873
        %v2876 = vor.u32 %v2874, %v2875
        %v2877 = vsub.s32 4294967266, %v2872
        %v2878 = vadd.s32 %v2877, 127
        %v2879 = vshll.u32 %v2878, 23
        %v2880 = vor.u32 4788187, %v2879
        %v2881 = vand.u32 2147483647, %v2880
        %v2883 = vcvt.s32.f32 %v2876
        %v2884 = vmul.f32 %v2883, %v2881
        %v2885 = vxor.u32 %v2884, 2147483648
        %v2886 = vsel %vm2803, %v2885, %v2884
        %v2887 = vsub.s32 4, %v2863
        %v2888 = vsel %vm2803, %v2887, %v2863
        %v2889 = vsel %vm2802, %v2178, %v2886
        %v2890 = vsel %vm2802, 0, %v2888
        %v2891 = vcosq.f32.pop %v2889
        %v2892 = vsinq.f32.pop %v2889
        %vm2893 = vweird.f32 %v2178
        %v2894 = vadd.s32 %v2890, 3
        %v2895 = vand.u32 %v2894, 3
        %vm2896 = vcmp.lt.s32.totalorder %v2895, 2
        %vm2897 = vcmp.eq.s32.totalorder %v2895, 0
        %v2898 = vxor.u32 %v2892, 2147483648
        %v2899 = vsel %vm2897, %v2891, %v2898
        %vm2900 = vcmp.eq.s32.totalorder %v2895, 2
        %v2901 = vxor.u32 %v2891, 2147483648
        %v2902 = vsel %vm2900, %v2901, %v2892
        %v2903 = vsel %vm2896, %v2899, %v2902
        %v2904 = vsel %vm2893, nan, %v2903
        %v2905 = vand.u32 2147483647, %v2265
        %vm2906 = vcmp.le.f32.partialorder %v2905, 0.7853982
        %vm2907 = vcmp.lt.s32.totalorder %v2265, 0
        %v2908 = vand.u32 %v2265, 2139095040
        %v2909 = vshrl.u32 %v2908, 23
        %v2910 = vsub.s32 %v2909, 127
        %v2911 = vand.u32 2147483647, %v2265
        %v2912 = vand.u32 %v2911, 8388607
        %v2913 = vor.u32 %v2912, 8388608
        %v2914 = vsub.s32 0, %v2913
        %v2915 = vadd.s32 %v2910, 1
        %vm2916 = vcmp.gt.s32.totalorder %v2915, 0
        %v2917 = vsel %vm2916, %v2915, 0
        %v2918 = vshrl.u32 %v2917, 5
        %v2919 = vand.u32 %v2917, 31
        %v2920 = vsub.s32 32, %v2919
        %v2921 = vshrl.u32 683565275, %v2920
        %v2922 = vshll.u32 683565275, %v2919
        %v2923 = vshrl.u32 2475754826, %v2920
        %v2924 = vor.u32 %v2922, %v2923
        %v2925 = vshll.u32 2475754826, %v2919
        %v2926 = vshrl.u32 2131351028, %v2920
        %v2927 = vor.u32 %v2925, %v2926
        %v2928 = vshll.u32 2131351028, %v2919
        %v2929 = vshrl.u32 2102212464, %v2920
        %v2930 = vor.u32 %v2928, %v2929
        %v2931 = vshll.u32 2102212464, %v2919
        %v2932 = vshrl.u32 920167782, %v2920
        %v2933 = vor.u32 %v2931, %v2932
        %v2934 = vshll.u32 920167782, %v2919
        %v2935 = vshrl.u32 1326507024, %v2920
        %v2936 = vor.u32 %v2934, %v2935
        %vm2937 = vcmp.lt.s32.totalorder %v2918, 1
        %vm2938 = vcmp.lt.s32.totalorder %v2918, 2
        %vm2939 = vcmp.lt.s32.totalorder %v2918, 3
        %vm2940 = vcmp.lt.s32.totalorder %v2918, 4
        %v2941 = vsel %vm2937, %v2921, %v2924
        %v2942 = vsel %vm2940, %v2930, 2102212464
        %v2943 = vsel %vm2939, %v2927, %v2942
        %v2944 = vsel %vm2938, %v2941, %v2943
        %v2945 = vsel %vm2937, %v2924, %v2927
        %v2946 = vsel %vm2940, %v2933, 920167782
        %v2947 = vsel %vm2939, %v2930, %v2946
        %v2948 = vsel %vm2938, %v2945, %v2947
        %v2949 = vsel %vm2937, %v2927, %v2930
        %v2950 = vsel %vm2940, %v2936, 1326507024
        %v2951 = vsel %vm2939, %v2933, %v2950
        %v2952 = vsel %vm2938, %v2949, %v2951
        %v2953 = vshll.u32 %v2913, 8
        %v2954 = vmul.u32.u64.compose %v2953, %v2952
        %v2955 = vextract.low.u32 %v2954
        %v2956 = vextract.high.u32 %v2954
        %v2957 = vmul.u32.u64.compose %v2953, %v2948
        %v2958 = vextract.low.u32 %v2957
        %v2959 = vextract.high.u32 %v2957
        %v2960 = vmul.u32 %v2953, %v2944
        %v2961 = vadd.s32 %v2956, %v2958
        %vm2962 = vc.u32 %v2956, %v2958
        %v2963 = vadd.s32 %v2959, 1
        %v2964 = vsel %vm2962, %v2963, %v2959
        %v2965 = vadd.s32 %v2960, %v2964
        %v2966 = vadd.s32 %v2965, 536870912
        %v2967 = vshrl.u32 %v2966, 30
        %v2968 = vshll.u32 %v2967, 30
        %v2969 = vsub.s32 %v2965, %v2968
        %vm2970 = vcmp.lt.s32.totalorder %v2969, 0
        %v2971 = vsub.s32 0, %v2969
        %v2972 = vsel %vm2970, %v2971, %v2969
        %v2973 = vclz %v2972
        %v2974 = vsub.s32 %v2973, 2
        %vm2975 = vcmp.gt.s32.totalorder 0, %v2974
        %v2976 = vsel %vm2975, 0, %v2974
        %v2977 = vsub.s32 32, %v2976
        %v2978 = vshll.u32 %v2969, %v2976
        %v2979 = vshrl.u32 %v2961, %v2977
        %v2980 = vor.u32 %v2978, %v2979
        %v2981 = vsub.s32 4294967266, %v2976
        %v2982 = vadd.s32 %v2981, 127
        %v2983 = vshll.u32 %v2982, 23
        %v2984 = vor.u32 4788187, %v2983
        %v2985 = vand.u32 2147483647, %v2984
        %v2987 = vcvt.s32.f32 %v2980
        %v2988 = vmul.f32 %v2987, %v2985
        %v2989 = vxor.u32 %v2988, 2147483648
        %v2990 = vsel %vm2907, %v2989, %v2988
        %v2991 = vsub.s32 4, %v2967
        %v2992 = vsel %vm2907, %v2991, %v2967
        %v2993 = vsel %vm2906, %v2265, %v2990
        %v2994 = vsel %vm2906, 0, %v2992
        %v2995 = vcosq.f32.pop %v2993
        %v2996 = vsinq.f32.pop %v2993
        %vm2997 = vweird.f32 %v2265
        %v2998 = vadd.s32 %v2994, 3
        %v2999 = vand.u32 %v2998, 3
        %vm3000 = vcmp.lt.s32.totalorder %v2999, 2
        %vm3001 = vcmp.eq.s32.totalorder %v2999, 0
        %v3002 = vxor.u32 %v2996, 2147483648
        %v3003 = vsel %vm3001, %v2995, %v3002
        %vm3004 = vcmp.eq.s32.totalorder %v2999, 2
        %v3005 = vxor.u32 %v2995, 2147483648
        %v3006 = vsel %vm3004, %v3005, %v2996
        %v3007 = vsel %vm3000, %v3003, %v3006
        %v3008 = vsel %vm2997, nan, %v3007
        %v3009 = vand.u32 2147483647, %v2267
        %vm3010 = vcmp.le.f32.partialorder %v3009, 0.7853982
        %vm3011 = vcmp.lt.s32.totalorder %v2267, 0
        %v3012 = vand.u32 %v2267, 2139095040
        %v3013 = vshrl.u32 %v3012, 23
        %v3014 = vsub.s32 %v3013, 127
        %v3015 = vand.u32 2147483647, %v2267
        %v3016 = vand.u32 %v3015, 8388607
        %v3017 = vor.u32 %v3016, 8388608
        %v3018 = vsub.s32 0, %v3017
        %v3019 = vadd.s32 %v3014, 1
        %vm3020 = vcmp.gt.s32.totalorder %v3019, 0
        %v3021 = vsel %vm3020, %v3019, 0
        %v3022 = vshrl.u32 %v3021, 5
        %v3023 = vand.u32 %v3021, 31
        %v3024 = vsub.s32 32, %v3023
        %v3025 = vshrl.u32 683565275, %v3024
        %v3026 = vshll.u32 683565275, %v3023
        %v3027 = vshrl.u32 2475754826, %v3024
        %v3028 = vor.u32 %v3026, %v3027
        %v3029 = vshll.u32 2475754826, %v3023
        %v3030 = vshrl.u32 2131351028, %v3024
        %v3031 = vor.u32 %v3029, %v3030
        %v3032 = vshll.u32 2131351028, %v3023
        %v3033 = vshrl.u32 2102212464, %v3024
        %v3034 = vor.u32 %v3032, %v3033
        %v3035 = vshll.u32 2102212464, %v3023
        %v3036 = vshrl.u32 920167782, %v3024
        %v3037 = vor.u32 %v3035, %v3036
        %v3038 = vshll.u32 920167782, %v3023
        %v3039 = vshrl.u32 1326507024, %v3024
        %v3040 = vor.u32 %v3038, %v3039
        %vm3041 = vcmp.lt.s32.totalorder %v3022, 1
        %vm3042 = vcmp.lt.s32.totalorder %v3022, 2
        %vm3043 = vcmp.lt.s32.totalorder %v3022, 3
        %vm3044 = vcmp.lt.s32.totalorder %v3022, 4
        %v3045 = vsel %vm3041, %v3025, %v3028
        %v3046 = vsel %vm3044, %v3034, 2102212464
        %v3047 = vsel %vm3043, %v3031, %v3046
        %v3048 = vsel %vm3042, %v3045, %v3047
        %v3049 = vsel %vm3041, %v3028, %v3031
        %v3050 = vsel %vm3044, %v3037, 920167782
        %v3051 = vsel %vm3043, %v3034, %v3050
        %v3052 = vsel %vm3042, %v3049, %v3051
        %v3053 = vsel %vm3041, %v3031, %v3034
        %v3054 = vsel %vm3044, %v3040, 1326507024
        %v3055 = vsel %vm3043, %v3037, %v3054
        %v3056 = vsel %vm3042, %v3053, %v3055
        %v3057 = vshll.u32 %v3017, 8
        %v3058 = vmul.u32.u64.compose %v3057, %v3056
        %v3059 = vextract.low.u32 %v3058
        %v3060 = vextract.high.u32 %v3058
        %v3061 = vmul.u32.u64.compose %v3057, %v3052
        %v3062 = vextract.low.u32 %v3061
        %v3063 = vextract.high.u32 %v3061
        %v3064 = vmul.u32 %v3057, %v3048
        %v3065 = vadd.s32 %v3060, %v3062
        %vm3066 = vc.u32 %v3060, %v3062
        %v3067 = vadd.s32 %v3063, 1
        %v3068 = vsel %vm3066, %v3067, %v3063
        %v3069 = vadd.s32 %v3064, %v3068
        %v3070 = vadd.s32 %v3069, 536870912
        %v3071 = vshrl.u32 %v3070, 30
        %v3072 = vshll.u32 %v3071, 30
        %v3073 = vsub.s32 %v3069, %v3072
        %vm3074 = vcmp.lt.s32.totalorder %v3073, 0
        %v3075 = vsub.s32 0, %v3073
        %v3076 = vsel %vm3074, %v3075, %v3073
        %v3077 = vclz %v3076
        %v3078 = vsub.s32 %v3077, 2
        %vm3079 = vcmp.gt.s32.totalorder 0, %v3078
        %v3080 = vsel %vm3079, 0, %v3078
        %v3081 = vsub.s32 32, %v3080
        %v3082 = vshll.u32 %v3073, %v3080
        %v3083 = vshrl.u32 %v3065, %v3081
        %v3084 = vor.u32 %v3082, %v3083
        %v3085 = vsub.s32 4294967266, %v3080
        %v3086 = vadd.s32 %v3085, 127
        %v3087 = vshll.u32 %v3086, 23
        %v3088 = vor.u32 4788187, %v3087
        %v3089 = vand.u32 2147483647, %v3088
        %v3091 = vcvt.s32.f32 %v3084
        %v3092 = vmul.f32 %v3091, %v3089
        %v3093 = vxor.u32 %v3092, 2147483648
        %v3094 = vsel %vm3011, %v3093, %v3092
        %v3095 = vsub.s32 4, %v3071
        %v3096 = vsel %vm3011, %v3095, %v3071
        %v3097 = vsel %vm3010, %v2267, %v3094
        %v3098 = vsel %vm3010, 0, %v3096
        %v3099 = vcosq.f32.pop %v3097
        %v3100 = vsinq.f32.pop %v3097
        %vm3101 = vweird.f32 %v2267
        %v3102 = vadd.s32 %v3098, 3
        %v3103 = vand.u32 %v3102, 3
        %vm3104 = vcmp.lt.s32.totalorder %v3103, 2
        %vm3105 = vcmp.eq.s32.totalorder %v3103, 0
        %v3106 = vxor.u32 %v3100, 2147483648
        %v3107 = vsel %vm3105, %v3099, %v3106
        %vm3108 = vcmp.eq.s32.totalorder %v3103, 2
        %v3109 = vxor.u32 %v3099, 2147483648
        %v3110 = vsel %vm3108, %v3109, %v3100
        %v3111 = vsel %vm3104, %v3107, %v3110
        %v3112 = vsel %vm3101, nan, %v3111
        %v3113 = vand.u32 2147483647, %v2182
        %vm3114 = vcmp.le.f32.partialorder %v3113, 0.7853982
        %vm3115 = vcmp.lt.s32.totalorder %v2182, 0
        %v3116 = vand.u32 %v2182, 2139095040
        %v3117 = vshrl.u32 %v3116, 23
        %v3118 = vsub.s32 %v3117, 127
        %v3119 = vand.u32 2147483647, %v2182
        %v3120 = vand.u32 %v3119, 8388607
        %v3121 = vor.u32 %v3120, 8388608
        %v3122 = vsub.s32 0, %v3121
        %v3123 = vadd.s32 %v3118, 1
        %vm3124 = vcmp.gt.s32.totalorder %v3123, 0
        %v3125 = vsel %vm3124, %v3123, 0
        %v3126 = vshrl.u32 %v3125, 5
        %v3127 = vand.u32 %v3125, 31
        %v3128 = vsub.s32 32, %v3127
        %v3129 = vshrl.u32 683565275, %v3128
        %v3130 = vshll.u32 683565275, %v3127
        %v3131 = vshrl.u32 2475754826, %v3128
        %v3132 = vor.u32 %v3130, %v3131
        %v3133 = vshll.u32 2475754826, %v3127
        %v3134 = vshrl.u32 2131351028, %v3128
        %v3135 = vor.u32 %v3133, %v3134
        %v3136 = vshll.u32 2131351028, %v3127
        %v3137 = vshrl.u32 2102212464, %v3128
        %v3138 = vor.u32 %v3136, %v3137
        %v3139 = vshll.u32 2102212464, %v3127
        %v3140 = vshrl.u32 920167782, %v3128
        %v3141 = vor.u32 %v3139, %v3140
        %v3142 = vshll.u32 920167782, %v3127
        %v3143 = vshrl.u32 1326507024, %v3128
        %v3144 = vor.u32 %v3142, %v3143
        %vm3145 = vcmp.lt.s32.totalorder %v3126, 1
        %vm3146 = vcmp.lt.s32.totalorder %v3126, 2
        %vm3147 = vcmp.lt.s32.totalorder %v3126, 3
        %vm3148 = vcmp.lt.s32.totalorder %v3126, 4
        %v3149 = vsel %vm3145, %v3129, %v3132
        %v3150 = vsel %vm3148, %v3138, 2102212464
        %v3151 = vsel %vm3147, %v3135, %v3150
        %v3152 = vsel %vm3146, %v3149, %v3151
        %v3153 = vsel %vm3145, %v3132, %v3135
        %v3154 = vsel %vm3148, %v3141, 920167782
        %v3155 = vsel %vm3147, %v3138, %v3154
        %v3156 = vsel %vm3146, %v3153, %v3155
        %v3157 = vsel %vm3145, %v3135, %v3138
        %v3158 = vsel %vm3148, %v3144, 1326507024
        %v3159 = vsel %vm3147, %v3141, %v3158
        %v3160 = vsel %vm3146, %v3157, %v3159
        %v3161 = vshll.u32 %v3121, 8
        %v3162 = vmul.u32.u64.compose %v3161, %v3160
        %v3163 = vextract.low.u32 %v3162
        %v3164 = vextract.high.u32 %v3162
        %v3165 = vmul.u32.u64.compose %v3161, %v3156
        %v3166 = vextract.low.u32 %v3165
        %v3167 = vextract.high.u32 %v3165
        %v3168 = vmul.u32 %v3161, %v3152
        %v3169 = vadd.s32 %v3164, %v3166
        %vm3170 = vc.u32 %v3164, %v3166
        %v3171 = vadd.s32 %v3167, 1
        %v3172 = vsel %vm3170, %v3171, %v3167
        %v3173 = vadd.s32 %v3168, %v3172
        %v3174 = vadd.s32 %v3173, 536870912
        %v3175 = vshrl.u32 %v3174, 30
        %v3176 = vshll.u32 %v3175, 30
        %v3177 = vsub.s32 %v3173, %v3176
        %vm3178 = vcmp.lt.s32.totalorder %v3177, 0
        %v3179 = vsub.s32 0, %v3177
        %v3180 = vsel %vm3178, %v3179, %v3177
        %v3181 = vclz %v3180
        %v3182 = vsub.s32 %v3181, 2
        %vm3183 = vcmp.gt.s32.totalorder 0, %v3182
        %v3184 = vsel %vm3183, 0, %v3182
        %v3185 = vsub.s32 32, %v3184
        %v3186 = vshll.u32 %v3177, %v3184
        %v3187 = vshrl.u32 %v3169, %v3185
        %v3188 = vor.u32 %v3186, %v3187
        %v3189 = vsub.s32 4294967266, %v3184
        %v3190 = vadd.s32 %v3189, 127
        %v3191 = vshll.u32 %v3190, 23
        %v3192 = vor.u32 4788187, %v3191
        %v3193 = vand.u32 2147483647, %v3192
        %v3195 = vcvt.s32.f32 %v3188
        %v3196 = vmul.f32 %v3195, %v3193
        %v3197 = vxor.u32 %v3196, 2147483648
        %v3198 = vsel %vm3115, %v3197, %v3196
        %v3199 = vsub.s32 4, %v3175
        %v3200 = vsel %vm3115, %v3199, %v3175
        %v3201 = vsel %vm3114, %v2182, %v3198
        %v3202 = vsel %vm3114, 0, %v3200
        %v3203 = vcosq.f32.pop %v3201
        %v3204 = vsinq.f32.pop %v3201
        %vm3205 = vweird.f32 %v2182
        %v3206 = vadd.s32 %v3202, 3
        %v3207 = vand.u32 %v3206, 3
        %vm3208 = vcmp.lt.s32.totalorder %v3207, 2
        %vm3209 = vcmp.eq.s32.totalorder %v3207, 0
        %v3210 = vxor.u32 %v3204, 2147483648
        %v3211 = vsel %vm3209, %v3203, %v3210
        %vm3212 = vcmp.eq.s32.totalorder %v3207, 2
        %v3213 = vxor.u32 %v3203, 2147483648
        %v3214 = vsel %vm3212, %v3213, %v3204
        %v3215 = vsel %vm3208, %v3211, %v3214
        %v3216 = vsel %vm3205, nan, %v3215
        %v3217 = vand.u32 2147483647, %v2184
        %vm3218 = vcmp.le.f32.partialorder %v3217, 0.7853982
        %vm3219 = vcmp.lt.s32.totalorder %v2184, 0
        %v3220 = vand.u32 %v2184, 2139095040
        %v3221 = vshrl.u32 %v3220, 23
        %v3222 = vsub.s32 %v3221, 127
        %v3223 = vand.u32 2147483647, %v2184
        %v3224 = vand.u32 %v3223, 8388607
        %v3225 = vor.u32 %v3224, 8388608
        %v3226 = vsub.s32 0, %v3225
        %v3227 = vadd.s32 %v3222, 1
        %vm3228 = vcmp.gt.s32.totalorder %v3227, 0
        %v3229 = vsel %vm3228, %v3227, 0
        %v3230 = vshrl.u32 %v3229, 5
        %v3231 = vand.u32 %v3229, 31
        %v3232 = vsub.s32 32, %v3231
        %v3233 = vshrl.u32 683565275, %v3232
        %v3234 = vshll.u32 683565275, %v3231
        %v3235 = vshrl.u32 2475754826, %v3232
        %v3236 = vor.u32 %v3234, %v3235
        %v3237 = vshll.u32 2475754826, %v3231
        %v3238 = vshrl.u32 2131351028, %v3232
        %v3239 = vor.u32 %v3237, %v3238
        %v3240 = vshll.u32 2131351028, %v3231
        %v3241 = vshrl.u32 2102212464, %v3232
        %v3242 = vor.u32 %v3240, %v3241
        %v3243 = vshll.u32 2102212464, %v3231
        %v3244 = vshrl.u32 920167782, %v3232
        %v3245 = vor.u32 %v3243, %v3244
        %v3246 = vshll.u32 920167782, %v3231
        %v3247 = vshrl.u32 1326507024, %v3232
        %v3248 = vor.u32 %v3246, %v3247
        %vm3249 = vcmp.lt.s32.totalorder %v3230, 1
        %vm3250 = vcmp.lt.s32.totalorder %v3230, 2
        %vm3251 = vcmp.lt.s32.totalorder %v3230, 3
        %vm3252 = vcmp.lt.s32.totalorder %v3230, 4
        %v3253 = vsel %vm3249, %v3233, %v3236
        %v3254 = vsel %vm3252, %v3242, 2102212464
        %v3255 = vsel %vm3251, %v3239, %v3254
        %v3256 = vsel %vm3250, %v3253, %v3255
        %v3257 = vsel %vm3249, %v3236, %v3239
        %v3258 = vsel %vm3252, %v3245, 920167782
        %v3259 = vsel %vm3251, %v3242, %v3258
        %v3260 = vsel %vm3250, %v3257, %v3259
        %v3261 = vsel %vm3249, %v3239, %v3242
        %v3262 = vsel %vm3252, %v3248, 1326507024
        %v3263 = vsel %vm3251, %v3245, %v3262
        %v3264 = vsel %vm3250, %v3261, %v3263
        %v3265 = vshll.u32 %v3225, 8
        %v3266 = vmul.u32.u64.compose %v3265, %v3264
        %v3267 = vextract.low.u32 %v3266
        %v3268 = vextract.high.u32 %v3266
        %v3269 = vmul.u32.u64.compose %v3265, %v3260
        %v3270 = vextract.low.u32 %v3269
        %v3271 = vextract.high.u32 %v3269
        %v3272 = vmul.u32 %v3265, %v3256
        %v3273 = vadd.s32 %v3268, %v3270
        %vm3274 = vc.u32 %v3268, %v3270
        %v3275 = vadd.s32 %v3271, 1
        %v3276 = vsel %vm3274, %v3275, %v3271
        %v3277 = vadd.s32 %v3272, %v3276
        %v3278 = vadd.s32 %v3277, 536870912
        %v3279 = vshrl.u32 %v3278, 30
        %v3280 = vshll.u32 %v3279, 30
        %v3281 = vsub.s32 %v3277, %v3280
        %vm3282 = vcmp.lt.s32.totalorder %v3281, 0
        %v3283 = vsub.s32 0, %v3281
        %v3284 = vsel %vm3282, %v3283, %v3281
        %v3285 = vclz %v3284
        %v3286 = vsub.s32 %v3285, 2
        %vm3287 = vcmp.gt.s32.totalorder 0, %v3286
        %v3288 = vsel %vm3287, 0, %v3286
        %v3289 = vsub.s32 32, %v3288
        %v3290 = vshll.u32 %v3281, %v3288
        %v3291 = vshrl.u32 %v3273, %v3289
        %v3292 = vor.u32 %v3290, %v3291
        %v3293 = vsub.s32 4294967266, %v3288
        %v3294 = vadd.s32 %v3293, 127
        %v3295 = vshll.u32 %v3294, 23
        %v3296 = vor.u32 4788187, %v3295
        %v3297 = vand.u32 2147483647, %v3296
        %v3299 = vcvt.s32.f32 %v3292
        %v3300 = vmul.f32 %v3299, %v3297
        %v3301 = vxor.u32 %v3300, 2147483648
        %v3302 = vsel %vm3219, %v3301, %v3300
        %v3303 = vsub.s32 4, %v3279
        %v3304 = vsel %vm3219, %v3303, %v3279
        %v3305 = vsel %vm3218, %v2184, %v3302
        %v3306 = vsel %vm3218, 0, %v3304
        %v3307 = vcosq.f32.pop %v3305
        %v3308 = vsinq.f32.pop %v3305
        %vm3309 = vweird.f32 %v2184
        %v3310 = vadd.s32 %v3306, 3
        %v3311 = vand.u32 %v3310, 3
        %vm3312 = vcmp.lt.s32.totalorder %v3311, 2
        %vm3313 = vcmp.eq.s32.totalorder %v3311, 0
        %v3314 = vxor.u32 %v3308, 2147483648
        %v3315 = vsel %vm3313, %v3307, %v3314
        %vm3316 = vcmp.eq.s32.totalorder %v3311, 2
        %v3317 = vxor.u32 %v3307, 2147483648
        %v3318 = vsel %vm3316, %v3317, %v3308
        %v3319 = vsel %vm3312, %v3315, %v3318
        %v3320 = vsel %vm3309, nan, %v3319
        %v3321 = vand.u32 2147483647, %v2271
        %vm3322 = vcmp.le.f32.partialorder %v3321, 0.7853982
        %vm3323 = vcmp.lt.s32.totalorder %v2271, 0
        %v3324 = vand.u32 %v2271, 2139095040
        %v3325 = vshrl.u32 %v3324, 23
        %v3326 = vsub.s32 %v3325, 127
        %v3327 = vand.u32 2147483647, %v2271
        %v3328 = vand.u32 %v3327, 8388607
        %v3329 = vor.u32 %v3328, 8388608
        %v3330 = vsub.s32 0, %v3329
        %v3331 = vadd.s32 %v3326, 1
        %vm3332 = vcmp.gt.s32.totalorder %v3331, 0
        %v3333 = vsel %vm3332, %v3331, 0
        %v3334 = vshrl.u32 %v3333, 5
        %v3335 = vand.u32 %v3333, 31
        %v3336 = vsub.s32 32, %v3335
        %v3337 = vshrl.u32 683565275, %v3336
        %v3338 = vshll.u32 683565275, %v3335
        %v3339 = vshrl.u32 2475754826, %v3336
        %v3340 = vor.u32 %v3338, %v3339
        %v3341 = vshll.u32 2475754826, %v3335
        %v3342 = vshrl.u32 2131351028, %v3336
        %v3343 = vor.u32 %v3341, %v3342
        %v3344 = vshll.u32 2131351028, %v3335
        %v3345 = vshrl.u32 2102212464, %v3336
        %v3346 = vor.u32 %v3344, %v3345
        %v3347 = vshll.u32 2102212464, %v3335
        %v3348 = vshrl.u32 920167782, %v3336
        %v3349 = vor.u32 %v3347, %v3348
        %v3350 = vshll.u32 920167782, %v3335
        %v3351 = vshrl.u32 1326507024, %v3336
        %v3352 = vor.u32 %v3350, %v3351
        %vm3353 = vcmp.lt.s32.totalorder %v3334, 1
        %vm3354 = vcmp.lt.s32.totalorder %v3334, 2
        %vm3355 = vcmp.lt.s32.totalorder %v3334, 3
        %vm3356 = vcmp.lt.s32.totalorder %v3334, 4
        %v3357 = vsel %vm3353, %v3337, %v3340
        %v3358 = vsel %vm3356, %v3346, 2102212464
        %v3359 = vsel %vm3355, %v3343, %v3358
        %v3360 = vsel %vm3354, %v3357, %v3359
        %v3361 = vsel %vm3353, %v3340, %v3343
        %v3362 = vsel %vm3356, %v3349, 920167782
        %v3363 = vsel %vm3355, %v3346, %v3362
        %v3364 = vsel %vm3354, %v3361, %v3363
        %v3365 = vsel %vm3353, %v3343, %v3346
        %v3366 = vsel %vm3356, %v3352, 1326507024
        %v3367 = vsel %vm3355, %v3349, %v3366
        %v3368 = vsel %vm3354, %v3365, %v3367
        %v3369 = vshll.u32 %v3329, 8
        %v3370 = vmul.u32.u64.compose %v3369, %v3368
        %v3371 = vextract.low.u32 %v3370
        %v3372 = vextract.high.u32 %v3370
        %v3373 = vmul.u32.u64.compose %v3369, %v3364
        %v3374 = vextract.low.u32 %v3373
        %v3375 = vextract.high.u32 %v3373
        %v3376 = vmul.u32 %v3369, %v3360
        %v3377 = vadd.s32 %v3372, %v3374
        %vm3378 = vc.u32 %v3372, %v3374
        %v3379 = vadd.s32 %v3375, 1
        %v3380 = vsel %vm3378, %v3379, %v3375
        %v3381 = vadd.s32 %v3376, %v3380
        %v3382 = vadd.s32 %v3381, 536870912
        %v3383 = vshrl.u32 %v3382, 30
        %v3384 = vshll.u32 %v3383, 30
        %v3385 = vsub.s32 %v3381, %v3384
        %vm3386 = vcmp.lt.s32.totalorder %v3385, 0
        %v3387 = vsub.s32 0, %v3385
        %v3388 = vsel %vm3386, %v3387, %v3385
        %v3389 = vclz %v3388
        %v3390 = vsub.s32 %v3389, 2
        %vm3391 = vcmp.gt.s32.totalorder 0, %v3390
        %v3392 = vsel %vm3391, 0, %v3390
        %v3393 = vsub.s32 32, %v3392
        %v3394 = vshll.u32 %v3385, %v3392
        %v3395 = vshrl.u32 %v3377, %v3393
        %v3396 = vor.u32 %v3394, %v3395
        %v3397 = vsub.s32 4294967266, %v3392
        %v3398 = vadd.s32 %v3397, 127
        %v3399 = vshll.u32 %v3398, 23
        %v3400 = vor.u32 4788187, %v3399
        %v3401 = vand.u32 2147483647, %v3400
        %v3403 = vcvt.s32.f32 %v3396
        %v3404 = vmul.f32 %v3403, %v3401
        %v3405 = vxor.u32 %v3404, 2147483648
        %v3406 = vsel %vm3323, %v3405, %v3404
        %v3407 = vsub.s32 4, %v3383
        %v3408 = vsel %vm3323, %v3407, %v3383
        %v3409 = vsel %vm3322, %v2271, %v3406
        %v3410 = vsel %vm3322, 0, %v3408
        %v3411 = vcosq.f32.pop %v3409
        %v3412 = vsinq.f32.pop %v3409
        %vm3413 = vweird.f32 %v2271
        %v3414 = vadd.s32 %v3410, 3
        %v3415 = vand.u32 %v3414, 3
        %vm3416 = vcmp.lt.s32.totalorder %v3415, 2
        %vm3417 = vcmp.eq.s32.totalorder %v3415, 0
        %v3418 = vxor.u32 %v3412, 2147483648
        %v3419 = vsel %vm3417, %v3411, %v3418
        %vm3420 = vcmp.eq.s32.totalorder %v3415, 2
        %v3421 = vxor.u32 %v3411, 2147483648
        %v3422 = vsel %vm3420, %v3421, %v3412
        %v3423 = vsel %vm3416, %v3419, %v3422
        %v3424 = vsel %vm3413, nan, %v3423
        %v3425 = vand.u32 2147483647, %v2273
        %vm3426 = vcmp.le.f32.partialorder %v3425, 0.7853982
        %vm3427 = vcmp.lt.s32.totalorder %v2273, 0
        %v3428 = vand.u32 %v2273, 2139095040
        %v3429 = vshrl.u32 %v3428, 23
        %v3430 = vsub.s32 %v3429, 127
        %v3431 = vand.u32 2147483647, %v2273
        %v3432 = vand.u32 %v3431, 8388607
        %v3433 = vor.u32 %v3432, 8388608
        %v3434 = vsub.s32 0, %v3433
        %v3435 = vadd.s32 %v3430, 1
        %vm3436 = vcmp.gt.s32.totalorder %v3435, 0
        %v3437 = vsel %vm3436, %v3435, 0
        %v3438 = vshrl.u32 %v3437, 5
        %v3439 = vand.u32 %v3437, 31
        %v3440 = vsub.s32 32, %v3439
        %v3441 = vshrl.u32 683565275, %v3440
        %v3442 = vshll.u32 683565275, %v3439
        %v3443 = vshrl.u32 2475754826, %v3440
        %v3444 = vor.u32 %v3442, %v3443
        %v3445 = vshll.u32 2475754826, %v3439
        %v3446 = vshrl.u32 2131351028, %v3440
        %v3447 = vor.u32 %v3445, %v3446
        %v3448 = vshll.u32 2131351028, %v3439
        %v3449 = vshrl.u32 2102212464, %v3440
        %v3450 = vor.u32 %v3448, %v3449
        %v3451 = vshll.u32 2102212464, %v3439
        %v3452 = vshrl.u32 920167782, %v3440
        %v3453 = vor.u32 %v3451, %v3452
        %v3454 = vshll.u32 920167782, %v3439
        %v3455 = vshrl.u32 1326507024, %v3440
        %v3456 = vor.u32 %v3454, %v3455
        %vm3457 = vcmp.lt.s32.totalorder %v3438, 1
        %vm3458 = vcmp.lt.s32.totalorder %v3438, 2
        %vm3459 = vcmp.lt.s32.totalorder %v3438, 3
        %vm3460 = vcmp.lt.s32.totalorder %v3438, 4
        %v3461 = vsel %vm3457, %v3441, %v3444
        %v3462 = vsel %vm3460, %v3450, 2102212464
        %v3463 = vsel %vm3459, %v3447, %v3462
        %v3464 = vsel %vm3458, %v3461, %v3463
        %v3465 = vsel %vm3457, %v3444, %v3447
        %v3466 = vsel %vm3460, %v3453, 920167782
        %v3467 = vsel %vm3459, %v3450, %v3466
        %v3468 = vsel %vm3458, %v3465, %v3467
        %v3469 = vsel %vm3457, %v3447, %v3450
        %v3470 = vsel %vm3460, %v3456, 1326507024
        %v3471 = vsel %vm3459, %v3453, %v3470
        %v3472 = vsel %vm3458, %v3469, %v3471
        %v3473 = vshll.u32 %v3433, 8
        %v3474 = vmul.u32.u64.compose %v3473, %v3472
        %v3475 = vextract.low.u32 %v3474
        %v3476 = vextract.high.u32 %v3474
        %v3477 = vmul.u32.u64.compose %v3473, %v3468
        %v3478 = vextract.low.u32 %v3477
        %v3479 = vextract.high.u32 %v3477
        %v3480 = vmul.u32 %v3473, %v3464
        %v3481 = vadd.s32 %v3476, %v3478
        %vm3482 = vc.u32 %v3476, %v3478
        %v3483 = vadd.s32 %v3479, 1
        %v3484 = vsel %vm3482, %v3483, %v3479
        %v3485 = vadd.s32 %v3480, %v3484
        %v3486 = vadd.s32 %v3485, 536870912
        %v3487 = vshrl.u32 %v3486, 30
        %v3488 = vshll.u32 %v3487, 30
        %v3489 = vsub.s32 %v3485, %v3488
        %vm3490 = vcmp.lt.s32.totalorder %v3489, 0
        %v3491 = vsub.s32 0, %v3489
        %v3492 = vsel %vm3490, %v3491, %v3489
        %v3493 = vclz %v3492
        %v3494 = vsub.s32 %v3493, 2
        %vm3495 = vcmp.gt.s32.totalorder 0, %v3494
        %v3496 = vsel %vm3495, 0, %v3494
        %v3497 = vsub.s32 32, %v3496
        %v3498 = vshll.u32 %v3489, %v3496
        %v3499 = vshrl.u32 %v3481, %v3497
        %v3500 = vor.u32 %v3498, %v3499
        %v3501 = vsub.s32 4294967266, %v3496
        %v3502 = vadd.s32 %v3501, 127
        %v3503 = vshll.u32 %v3502, 23
        %v3504 = vor.u32 4788187, %v3503
        %v3505 = vand.u32 2147483647, %v3504
        %v3507 = vcvt.s32.f32 %v3500
        %v3508 = vmul.f32 %v3507, %v3505
        %v3509 = vxor.u32 %v3508, 2147483648
        %v3510 = vsel %vm3427, %v3509, %v3508
        %v3511 = vsub.s32 4, %v3487
        %v3512 = vsel %vm3427, %v3511, %v3487
        %v3513 = vsel %vm3426, %v2273, %v3510
        %v3514 = vsel %vm3426, 0, %v3512
        %v3515 = vcosq.f32.pop %v3513
        %v3516 = vsinq.f32.pop %v3513
        %vm3517 = vweird.f32 %v2273
        %v3518 = vadd.s32 %v3514, 3
        %v3519 = vand.u32 %v3518, 3
        %vm3520 = vcmp.lt.s32.totalorder %v3519, 2
        %vm3521 = vcmp.eq.s32.totalorder %v3519, 0
        %v3522 = vxor.u32 %v3516, 2147483648
        %v3523 = vsel %vm3521, %v3515, %v3522
        %vm3524 = vcmp.eq.s32.totalorder %v3519, 2
        %v3525 = vxor.u32 %v3515, 2147483648
        %v3526 = vsel %vm3524, %v3525, %v3516
        %v3527 = vsel %vm3520, %v3523, %v3526
        %v3528 = vsel %vm3517, nan, %v3527
        %v3529 = vand.u32 2147483647, %v2188
        %vm3530 = vcmp.le.f32.partialorder %v3529, 0.7853982
        %vm3531 = vcmp.lt.s32.totalorder %v2188, 0
        %v3532 = vand.u32 %v2188, 2139095040
        %v3533 = vshrl.u32 %v3532, 23
        %v3534 = vsub.s32 %v3533, 127
        %v3535 = vand.u32 2147483647, %v2188
        %v3536 = vand.u32 %v3535, 8388607
        %v3537 = vor.u32 %v3536, 8388608
        %v3538 = vsub.s32 0, %v3537
        %v3539 = vadd.s32 %v3534, 1
        %vm3540 = vcmp.gt.s32.totalorder %v3539, 0
        %v3541 = vsel %vm3540, %v3539, 0
        %v3542 = vshrl.u32 %v3541, 5
        %v3543 = vand.u32 %v3541, 31
        %v3544 = vsub.s32 32, %v3543
        %v3545 = vshrl.u32 683565275, %v3544
        %v3546 = vshll.u32 683565275, %v3543
        %v3547 = vshrl.u32 2475754826, %v3544
        %v3548 = vor.u32 %v3546, %v3547
        %v3549 = vshll.u32 2475754826, %v3543
        %v3550 = vshrl.u32 2131351028, %v3544
        %v3551 = vor.u32 %v3549, %v3550
        %v3552 = vshll.u32 2131351028, %v3543
        %v3553 = vshrl.u32 2102212464, %v3544
        %v3554 = vor.u32 %v3552, %v3553
        %v3555 = vshll.u32 2102212464, %v3543
        %v3556 = vshrl.u32 920167782, %v3544
        %v3557 = vor.u32 %v3555, %v3556
        %v3558 = vshll.u32 920167782, %v3543
        %v3559 = vshrl.u32 1326507024, %v3544
        %v3560 = vor.u32 %v3558, %v3559
        %vm3561 = vcmp.lt.s32.totalorder %v3542, 1
        %vm3562 = vcmp.lt.s32.totalorder %v3542, 2
        %vm3563 = vcmp.lt.s32.totalorder %v3542, 3
        %vm3564 = vcmp.lt.s32.totalorder %v3542, 4
        %v3565 = vsel %vm3561, %v3545, %v3548
        %v3566 = vsel %vm3564, %v3554, 2102212464
        %v3567 = vsel %vm3563, %v3551, %v3566
        %v3568 = vsel %vm3562, %v3565, %v3567
        %v3569 = vsel %vm3561, %v3548, %v3551
        %v3570 = vsel %vm3564, %v3557, 920167782
        %v3571 = vsel %vm3563, %v3554, %v3570
        %v3572 = vsel %vm3562, %v3569, %v3571
        %v3573 = vsel %vm3561, %v3551, %v3554
        %v3574 = vsel %vm3564, %v3560, 1326507024
        %v3575 = vsel %vm3563, %v3557, %v3574
        %v3576 = vsel %vm3562, %v3573, %v3575
        %v3577 = vshll.u32 %v3537, 8
        %v3578 = vmul.u32.u64.compose %v3577, %v3576
        %v3579 = vextract.low.u32 %v3578
        %v3580 = vextract.high.u32 %v3578
        %v3581 = vmul.u32.u64.compose %v3577, %v3572
        %v3582 = vextract.low.u32 %v3581
        %v3583 = vextract.high.u32 %v3581
        %v3584 = vmul.u32 %v3577, %v3568
        %v3585 = vadd.s32 %v3580, %v3582
        %vm3586 = vc.u32 %v3580, %v3582
        %v3587 = vadd.s32 %v3583, 1
        %v3588 = vsel %vm3586, %v3587, %v3583
        %v3589 = vadd.s32 %v3584, %v3588
        %v3590 = vadd.s32 %v3589, 536870912
        %v3591 = vshrl.u32 %v3590, 30
        %v3592 = vshll.u32 %v3591, 30
        %v3593 = vsub.s32 %v3589, %v3592
        %vm3594 = vcmp.lt.s32.totalorder %v3593, 0
        %v3595 = vsub.s32 0, %v3593
        %v3596 = vsel %vm3594, %v3595, %v3593
        %v3597 = vclz %v3596
        %v3598 = vsub.s32 %v3597, 2
        %vm3599 = vcmp.gt.s32.totalorder 0, %v3598
        %v3600 = vsel %vm3599, 0, %v3598
        %v3601 = vsub.s32 32, %v3600
        %v3602 = vshll.u32 %v3593, %v3600
        %v3603 = vshrl.u32 %v3585, %v3601
        %v3604 = vor.u32 %v3602, %v3603
        %v3605 = vsub.s32 4294967266, %v3600
        %v3606 = vadd.s32 %v3605, 127
        %v3607 = vshll.u32 %v3606, 23
        %v3608 = vor.u32 4788187, %v3607
        %v3609 = vand.u32 2147483647, %v3608
        %v3611 = vcvt.s32.f32 %v3604
        %v3612 = vmul.f32 %v3611, %v3609
        %v3613 = vxor.u32 %v3612, 2147483648
        %v3614 = vsel %vm3531, %v3613, %v3612
        %v3615 = vsub.s32 4, %v3591
        %v3616 = vsel %vm3531, %v3615, %v3591
        %v3617 = vsel %vm3530, %v2188, %v3614
        %v3618 = vsel %vm3530, 0, %v3616
        %v3619 = vcosq.f32.pop %v3617
        %v3620 = vsinq.f32.pop %v3617
        %vm3621 = vweird.f32 %v2188
        %v3622 = vadd.s32 %v3618, 3
        %v3623 = vand.u32 %v3622, 3
        %vm3624 = vcmp.lt.s32.totalorder %v3623, 2
        %vm3625 = vcmp.eq.s32.totalorder %v3623, 0
        %v3626 = vxor.u32 %v3620, 2147483648
        %v3627 = vsel %vm3625, %v3619, %v3626
        %vm3628 = vcmp.eq.s32.totalorder %v3623, 2
        %v3629 = vxor.u32 %v3619, 2147483648
        %v3630 = vsel %vm3628, %v3629, %v3620
        %v3631 = vsel %vm3624, %v3627, %v3630
        %v3632 = vsel %vm3621, nan, %v3631
        %v3633 = vand.u32 2147483647, %v2190
        %vm3634 = vcmp.le.f32.partialorder %v3633, 0.7853982
        %vm3635 = vcmp.lt.s32.totalorder %v2190, 0
        %v3636 = vand.u32 %v2190, 2139095040
        %v3637 = vshrl.u32 %v3636, 23
        %v3638 = vsub.s32 %v3637, 127
        %v3639 = vand.u32 2147483647, %v2190
        %v3640 = vand.u32 %v3639, 8388607
        %v3641 = vor.u32 %v3640, 8388608
        %v3642 = vsub.s32 0, %v3641
        %v3643 = vadd.s32 %v3638, 1
        %vm3644 = vcmp.gt.s32.totalorder %v3643, 0
        %v3645 = vsel %vm3644, %v3643, 0
        %v3646 = vshrl.u32 %v3645, 5
        %v3647 = vand.u32 %v3645, 31
        %v3648 = vsub.s32 32, %v3647
        %v3649 = vshrl.u32 683565275, %v3648
        %v3650 = vshll.u32 683565275, %v3647
        %v3651 = vshrl.u32 2475754826, %v3648
        %v3652 = vor.u32 %v3650, %v3651
        %v3653 = vshll.u32 2475754826, %v3647
        %v3654 = vshrl.u32 2131351028, %v3648
        %v3655 = vor.u32 %v3653, %v3654
        %v3656 = vshll.u32 2131351028, %v3647
        %v3657 = vshrl.u32 2102212464, %v3648
        %v3658 = vor.u32 %v3656, %v3657
        %v3659 = vshll.u32 2102212464, %v3647
        %v3660 = vshrl.u32 920167782, %v3648
        %v3661 = vor.u32 %v3659, %v3660
        %v3662 = vshll.u32 920167782, %v3647
        %v3663 = vshrl.u32 1326507024, %v3648
        %v3664 = vor.u32 %v3662, %v3663
        %vm3665 = vcmp.lt.s32.totalorder %v3646, 1
        %vm3666 = vcmp.lt.s32.totalorder %v3646, 2
        %vm3667 = vcmp.lt.s32.totalorder %v3646, 3
        %vm3668 = vcmp.lt.s32.totalorder %v3646, 4
        %v3669 = vsel %vm3665, %v3649, %v3652
        %v3670 = vsel %vm3668, %v3658, 2102212464
        %v3671 = vsel %vm3667, %v3655, %v3670
        %v3672 = vsel %vm3666, %v3669, %v3671
        %v3673 = vsel %vm3665, %v3652, %v3655
        %v3674 = vsel %vm3668, %v3661, 920167782
        %v3675 = vsel %vm3667, %v3658, %v3674
        %v3676 = vsel %vm3666, %v3673, %v3675
        %v3677 = vsel %vm3665, %v3655, %v3658
        %v3678 = vsel %vm3668, %v3664, 1326507024
        %v3679 = vsel %vm3667, %v3661, %v3678
        %v3680 = vsel %vm3666, %v3677, %v3679
        %v3681 = vshll.u32 %v3641, 8
        %v3682 = vmul.u32.u64.compose %v3681, %v3680
        %v3683 = vextract.low.u32 %v3682
        %v3684 = vextract.high.u32 %v3682
        %v3685 = vmul.u32.u64.compose %v3681, %v3676
        %v3686 = vextract.low.u32 %v3685
        %v3687 = vextract.high.u32 %v3685
        %v3688 = vmul.u32 %v3681, %v3672
        %v3689 = vadd.s32 %v3684, %v3686
        %vm3690 = vc.u32 %v3684, %v3686
        %v3691 = vadd.s32 %v3687, 1
        %v3692 = vsel %vm3690, %v3691, %v3687
        %v3693 = vadd.s32 %v3688, %v3692
        %v3694 = vadd.s32 %v3693, 536870912
        %v3695 = vshrl.u32 %v3694, 30
        %v3696 = vshll.u32 %v3695, 30
        %v3697 = vsub.s32 %v3693, %v3696
        %vm3698 = vcmp.lt.s32.totalorder %v3697, 0
        %v3699 = vsub.s32 0, %v3697
        %v3700 = vsel %vm3698, %v3699, %v3697
        %v3701 = vclz %v3700
        %v3702 = vsub.s32 %v3701, 2
        %vm3703 = vcmp.gt.s32.totalorder 0, %v3702
        %v3704 = vsel %vm3703, 0, %v3702
        %v3705 = vsub.s32 32, %v3704
        %v3706 = vshll.u32 %v3697, %v3704
        %v3707 = vshrl.u32 %v3689, %v3705
        %v3708 = vor.u32 %v3706, %v3707
        %v3709 = vsub.s32 4294967266, %v3704
        %v3710 = vadd.s32 %v3709, 127
        %v3711 = vshll.u32 %v3710, 23
        %v3712 = vor.u32 4788187, %v3711
        %v3713 = vand.u32 2147483647, %v3712
        %v3715 = vcvt.s32.f32 %v3708
        %v3716 = vmul.f32 %v3715, %v3713
        %v3717 = vxor.u32 %v3716, 2147483648
        %v3718 = vsel %vm3635, %v3717, %v3716
        %v3719 = vsub.s32 4, %v3695
        %v3720 = vsel %vm3635, %v3719, %v3695
        %v3721 = vsel %vm3634, %v2190, %v3718
        %v3722 = vsel %vm3634, 0, %v3720
        %v3723 = vcosq.f32.pop %v3721
        %v3724 = vsinq.f32.pop %v3721
        %vm3725 = vweird.f32 %v2190
        %v3726 = vadd.s32 %v3722, 3
        %v3727 = vand.u32 %v3726, 3
        %vm3728 = vcmp.lt.s32.totalorder %v3727, 2
        %vm3729 = vcmp.eq.s32.totalorder %v3727, 0
        %v3730 = vxor.u32 %v3724, 2147483648
        %v3731 = vsel %vm3729, %v3723, %v3730
        %vm3732 = vcmp.eq.s32.totalorder %v3727, 2
        %v3733 = vxor.u32 %v3723, 2147483648
        %v3734 = vsel %vm3732, %v3733, %v3724
        %v3735 = vsel %vm3728, %v3731, %v3734
        %v3736 = vsel %vm3725, nan, %v3735
        %v3737 = vand.u32 2147483647, %v2277
        %vm3738 = vcmp.le.f32.partialorder %v3737, 0.7853982
        %vm3739 = vcmp.lt.s32.totalorder %v2277, 0
        %v3740 = vand.u32 %v2277, 2139095040
        %v3741 = vshrl.u32 %v3740, 23
        %v3742 = vsub.s32 %v3741, 127
        %v3743 = vand.u32 2147483647, %v2277
        %v3744 = vand.u32 %v3743, 8388607
        %v3745 = vor.u32 %v3744, 8388608
        %v3746 = vsub.s32 0, %v3745
        %v3747 = vadd.s32 %v3742, 1
        %vm3748 = vcmp.gt.s32.totalorder %v3747, 0
        %v3749 = vsel %vm3748, %v3747, 0
        %v3750 = vshrl.u32 %v3749, 5
        %v3751 = vand.u32 %v3749, 31
        %v3752 = vsub.s32 32, %v3751
        %v3753 = vshrl.u32 683565275, %v3752
        %v3754 = vshll.u32 683565275, %v3751
        %v3755 = vshrl.u32 2475754826, %v3752
        %v3756 = vor.u32 %v3754, %v3755
        %v3757 = vshll.u32 2475754826, %v3751
        %v3758 = vshrl.u32 2131351028, %v3752
        %v3759 = vor.u32 %v3757, %v3758
        %v3760 = vshll.u32 2131351028, %v3751
        %v3761 = vshrl.u32 2102212464, %v3752
        %v3762 = vor.u32 %v3760, %v3761
        %v3763 = vshll.u32 2102212464, %v3751
        %v3764 = vshrl.u32 920167782, %v3752
        %v3765 = vor.u32 %v3763, %v3764
        %v3766 = vshll.u32 920167782, %v3751
        %v3767 = vshrl.u32 1326507024, %v3752
        %v3768 = vor.u32 %v3766, %v3767
        %vm3769 = vcmp.lt.s32.totalorder %v3750, 1
        %vm3770 = vcmp.lt.s32.totalorder %v3750, 2
        %vm3771 = vcmp.lt.s32.totalorder %v3750, 3
        %vm3772 = vcmp.lt.s32.totalorder %v3750, 4
        %v3773 = vsel %vm3769, %v3753, %v3756
        %v3774 = vsel %vm3772, %v3762, 2102212464
        %v3775 = vsel %vm3771, %v3759, %v3774
        %v3776 = vsel %vm3770, %v3773, %v3775
        %v3777 = vsel %vm3769, %v3756, %v3759
        %v3778 = vsel %vm3772, %v3765, 920167782
        %v3779 = vsel %vm3771, %v3762, %v3778
        %v3780 = vsel %vm3770, %v3777, %v3779
        %v3781 = vsel %vm3769, %v3759, %v3762
        %v3782 = vsel %vm3772, %v3768, 1326507024
        %v3783 = vsel %vm3771, %v3765, %v3782
        %v3784 = vsel %vm3770, %v3781, %v3783
        %v3785 = vshll.u32 %v3745, 8
        %v3786 = vmul.u32.u64.compose %v3785, %v3784
        %v3787 = vextract.low.u32 %v3786
        %v3788 = vextract.high.u32 %v3786
        %v3789 = vmul.u32.u64.compose %v3785, %v3780
        %v3790 = vextract.low.u32 %v3789
        %v3791 = vextract.high.u32 %v3789
        %v3792 = vmul.u32 %v3785, %v3776
        %v3793 = vadd.s32 %v3788, %v3790
        %vm3794 = vc.u32 %v3788, %v3790
        %v3795 = vadd.s32 %v3791, 1
        %v3796 = vsel %vm3794, %v3795, %v3791
        %v3797 = vadd.s32 %v3792, %v3796
        %v3798 = vadd.s32 %v3797, 536870912
        %v3799 = vshrl.u32 %v3798, 30
        %v3800 = vshll.u32 %v3799, 30
        %v3801 = vsub.s32 %v3797, %v3800
        %vm3802 = vcmp.lt.s32.totalorder %v3801, 0
        %v3803 = vsub.s32 0, %v3801
        %v3804 = vsel %vm3802, %v3803, %v3801
        %v3805 = vclz %v3804
        %v3806 = vsub.s32 %v3805, 2
        %vm3807 = vcmp.gt.s32.totalorder 0, %v3806
        %v3808 = vsel %vm3807, 0, %v3806
        %v3809 = vsub.s32 32, %v3808
        %v3810 = vshll.u32 %v3801, %v3808
        %v3811 = vshrl.u32 %v3793, %v3809
        %v3812 = vor.u32 %v3810, %v3811
        %v3813 = vsub.s32 4294967266, %v3808
        %v3814 = vadd.s32 %v3813, 127
        %v3815 = vshll.u32 %v3814, 23
        %v3816 = vor.u32 4788187, %v3815
        %v3817 = vand.u32 2147483647, %v3816
        %v3819 = vcvt.s32.f32 %v3812
        %v3820 = vmul.f32 %v3819, %v3817
        %v3821 = vxor.u32 %v3820, 2147483648
        %v3822 = vsel %vm3739, %v3821, %v3820
        %v3823 = vsub.s32 4, %v3799
        %v3824 = vsel %vm3739, %v3823, %v3799
        %v3825 = vsel %vm3738, %v2277, %v3822
        %v3826 = vsel %vm3738, 0, %v3824
        %v3827 = vcosq.f32.pop %v3825
        %v3828 = vsinq.f32.pop %v3825
        %vm3829 = vweird.f32 %v2277
        %v3830 = vadd.s32 %v3826, 3
        %v3831 = vand.u32 %v3830, 3
        %vm3832 = vcmp.lt.s32.totalorder %v3831, 2
        %vm3833 = vcmp.eq.s32.totalorder %v3831, 0
        %v3834 = vxor.u32 %v3828, 2147483648
        %v3835 = vsel %vm3833, %v3827, %v3834
        %vm3836 = vcmp.eq.s32.totalorder %v3831, 2
        %v3837 = vxor.u32 %v3827, 2147483648
        %v3838 = vsel %vm3836, %v3837, %v3828
        %v3839 = vsel %vm3832, %v3835, %v3838
        %v3840 = vsel %vm3829, nan, %v3839
        %v3841 = vand.u32 2147483647, %v2279
        %vm3842 = vcmp.le.f32.partialorder %v3841, 0.7853982
        %vm3843 = vcmp.lt.s32.totalorder %v2279, 0
        %v3844 = vand.u32 %v2279, 2139095040
        %v3845 = vshrl.u32 %v3844, 23
        %v3846 = vsub.s32 %v3845, 127
        %v3847 = vand.u32 2147483647, %v2279
        %v3848 = vand.u32 %v3847, 8388607
        %v3849 = vor.u32 %v3848, 8388608
        %v3850 = vsub.s32 0, %v3849
        %v3851 = vadd.s32 %v3846, 1
        %vm3852 = vcmp.gt.s32.totalorder %v3851, 0
        %v3853 = vsel %vm3852, %v3851, 0
        %v3854 = vshrl.u32 %v3853, 5
        %v3855 = vand.u32 %v3853, 31
        %v3856 = vsub.s32 32, %v3855
        %v3857 = vshrl.u32 683565275, %v3856
        %v3858 = vshll.u32 683565275, %v3855
        %v3859 = vshrl.u32 2475754826, %v3856
        %v3860 = vor.u32 %v3858, %v3859
        %v3861 = vshll.u32 2475754826, %v3855
        %v3862 = vshrl.u32 2131351028, %v3856
        %v3863 = vor.u32 %v3861, %v3862
        %v3864 = vshll.u32 2131351028, %v3855
        %v3865 = vshrl.u32 2102212464, %v3856
        %v3866 = vor.u32 %v3864, %v3865
        %v3867 = vshll.u32 2102212464, %v3855
        %v3868 = vshrl.u32 920167782, %v3856
        %v3869 = vor.u32 %v3867, %v3868
        %v3870 = vshll.u32 920167782, %v3855
        %v3871 = vshrl.u32 1326507024, %v3856
        %v3872 = vor.u32 %v3870, %v3871
        %vm3873 = vcmp.lt.s32.totalorder %v3854, 1
        %vm3874 = vcmp.lt.s32.totalorder %v3854, 2
        %vm3875 = vcmp.lt.s32.totalorder %v3854, 3
        %vm3876 = vcmp.lt.s32.totalorder %v3854, 4
        %v3877 = vsel %vm3873, %v3857, %v3860
        %v3878 = vsel %vm3876, %v3866, 2102212464
        %v3879 = vsel %vm3875, %v3863, %v3878
        %v3880 = vsel %vm3874, %v3877, %v3879
        %v3881 = vsel %vm3873, %v3860, %v3863
        %v3882 = vsel %vm3876, %v3869, 920167782
        %v3883 = vsel %vm3875, %v3866, %v3882
        %v3884 = vsel %vm3874, %v3881, %v3883
        %v3885 = vsel %vm3873, %v3863, %v3866
        %v3886 = vsel %vm3876, %v3872, 1326507024
        %v3887 = vsel %vm3875, %v3869, %v3886
        %v3888 = vsel %vm3874, %v3885, %v3887
        %v3889 = vshll.u32 %v3849, 8
        %v3890 = vmul.u32.u64.compose %v3889, %v3888
        %v3891 = vextract.low.u32 %v3890
        %v3892 = vextract.high.u32 %v3890
        %v3893 = vmul.u32.u64.compose %v3889, %v3884
        %v3894 = vextract.low.u32 %v3893
        %v3895 = vextract.high.u32 %v3893
        %v3896 = vmul.u32 %v3889, %v3880
        %v3897 = vadd.s32 %v3892, %v3894
        %vm3898 = vc.u32 %v3892, %v3894
        %v3899 = vadd.s32 %v3895, 1
        %v3900 = vsel %vm3898, %v3899, %v3895
        %v3901 = vadd.s32 %v3896, %v3900
        %v3902 = vadd.s32 %v3901, 536870912
        %v3903 = vshrl.u32 %v3902, 30
        %v3904 = vshll.u32 %v3903, 30
        %v3905 = vsub.s32 %v3901, %v3904
        %vm3906 = vcmp.lt.s32.totalorder %v3905, 0
        %v3907 = vsub.s32 0, %v3905
        %v3908 = vsel %vm3906, %v3907, %v3905
        %v3909 = vclz %v3908
        %v3910 = vsub.s32 %v3909, 2
        %vm3911 = vcmp.gt.s32.totalorder 0, %v3910
        %v3912 = vsel %vm3911, 0, %v3910
        %v3913 = vsub.s32 32, %v3912
        %v3914 = vshll.u32 %v3905, %v3912
        %v3915 = vshrl.u32 %v3897, %v3913
        %v3916 = vor.u32 %v3914, %v3915
        %v3917 = vsub.s32 4294967266, %v3912
        %v3918 = vadd.s32 %v3917, 127
        %v3919 = vshll.u32 %v3918, 23
        %v3920 = vor.u32 4788187, %v3919
        %v3921 = vand.u32 2147483647, %v3920
        %v3923 = vcvt.s32.f32 %v3916
        %v3924 = vmul.f32 %v3923, %v3921
        %v3925 = vxor.u32 %v3924, 2147483648
        %v3926 = vsel %vm3843, %v3925, %v3924
        %v3927 = vsub.s32 4, %v3903
        %v3928 = vsel %vm3843, %v3927, %v3903
        %v3929 = vsel %vm3842, %v2279, %v3926
        %v3930 = vsel %vm3842, 0, %v3928
        %v3931 = vcosq.f32.pop %v3929
        %v3932 = vsinq.f32.pop %v3929
        %vm3933 = vweird.f32 %v2279
        %v3934 = vadd.s32 %v3930, 3
        %v3935 = vand.u32 %v3934, 3
        %vm3936 = vcmp.lt.s32.totalorder %v3935, 2
        %vm3937 = vcmp.eq.s32.totalorder %v3935, 0
        %v3938 = vxor.u32 %v3932, 2147483648
        %v3939 = vsel %vm3937, %v3931, %v3938
        %vm3940 = vcmp.eq.s32.totalorder %v3935, 2
        %v3941 = vxor.u32 %v3931, 2147483648
        %v3942 = vsel %vm3940, %v3941, %v3932
        %v3943 = vsel %vm3936, %v3939, %v3942
        %v3944 = vsel %vm3933, nan, %v3943
        %v3945 = vld [vmem:[%s204 + $0x20] sm:$0xff]
        %v3946 = vld [vmem:[%s204 + $0x28] sm:$0xff]
        %v3947 = vld [vmem:[%s204 + $0x30] sm:$0xff]
        %v3948 = vld [vmem:[%s204 + $0x38] sm:$0xff]
        %3949 = vset.pattern.permute.xlu0 9
        %3950 = vperm.xlu0 %3949, %v207
        %v3951 = vpop.permute.xlu0 %3950
        %3953 = vset.pattern.permute.xlu0 9
        %3954 = vperm.xlu0 %3953, %v208
        %v3955 = vpop.permute.xlu0 %3954
        %3957 = vset.pattern.permute.xlu0 9
        %3958 = vperm.xlu0 %3957, %v209
        %v3959 = vpop.permute.xlu0 %3958
        %3961 = vset.pattern.permute.xlu0 9
        %3962 = vperm.xlu0 %3961, %v210
        %v3963 = vpop.permute.xlu0 %3962
        %v3966 = vsel %vm2090, %v3945, 0
        %v3969 = vsel %vm2090, %v3946, 0
        %v3972 = vsel %vm2090, %v3947, 0
        %v3975 = vsel %vm2090, %v3948, 0
        %3977 = vmatprep.subr.mxu0 %v2488
        %3978 = vmatpush1.msra.mxu0 %v2384
        %3979 = vmatprep.subr.mxu0 %v2904
        %3980 = vmatpush1.msra.mxu0 %v2800
        %3981 = vmatprep.subr.mxu0 %v3320
        %3982 = vmatpush1.msra.mxu0 %v3216
        %3983 = vmatprep.subr.mxu0 %v3736
        %3984 = vmatpush1.msra.mxu0 %v3632
        %3985 = vmatprep.subr.mxu0 0.0
        %3986 = vmatpush1.msra.mxu0 0.0
        %3987 = vmatprep.subr.mxu0 0.0
        %3988 = vmatpush1.msra.mxu0 0.0
        %3989 = vmatprep.subr.mxu0 0.0
        %3990 = vmatpush1.msra.mxu0 0.0
        %3991 = vmatprep.subr.mxu0 0.0
        %3992 = vmatpush1.msra.mxu0 0.0
        %3993 = vmatprep.subr.mxu0 0.0
        %3994 = vmatpush1.msra.mxu0 0.0
        %3995 = vmatprep.subr.mxu0 0.0
        %3996 = vmatpush1.msra.mxu0 0.0
        %3997 = vmatprep.subr.mxu0 0.0
        %3998 = vmatpush1.msra.mxu0 0.0
        %3999 = vmatprep.subr.mxu0 0.0
        %4000 = vmatpush1.msra.mxu0 0.0
        %4001 = vmatprep.subr.mxu0 0.0
        %4002 = vmatpush1.msra.mxu0 0.0
        %4003 = vmatprep.subr.mxu0 0.0
        %4004 = vmatpush1.msra.mxu0 0.0
        %4005 = vmatprep.subr.mxu0 0.0
        %4006 = vmatpush1.msra.mxu0 0.0
        %4007 = vmatprep.subr.mxu0 0.0
        %4008 = vmatpush1.msra.mxu0 0.0
        %4009 = vmatprep.subr.mxu0 0.0
        %4010 = vmatpush1.msra.mxu0 0.0
        %4011 = vmatprep.subr.mxu0 0.0
        %4012 = vmatpush1.msra.mxu0 0.0
        %4013 = vmatprep.subr.mxu0 0.0
        %4014 = vmatpush1.msra.mxu0 0.0
        %4015 = vmatprep.subr.mxu0 0.0
        %4016 = vmatpush1.msra.mxu0 0.0
        %4017 = vmatprep.subr.mxu0 0.0
        %4018 = vmatpush1.msra.mxu0 0.0
        %4019 = vmatprep.subr.mxu0 0.0
        %4020 = vmatpush1.msra.mxu0 0.0
        %4021 = vmatprep.subr.mxu0 0.0
        %4022 = vmatpush1.msra.mxu0 0.0
        %4023 = vmatprep.subr.mxu0 0.0
        %4024 = vmatpush1.msra.mxu0 0.0
        %4025 = vmatprep.subr.mxu0 0.0
        %4026 = vmatpush1.msra.mxu0 0.0
        %4027 = vmatprep.subr.mxu0 0.0
        %4028 = vmatpush1.msra.mxu0 0.0
        %4029 = vmatprep.subr.mxu0 0.0
        %4030 = vmatpush1.msra.mxu0 0.0
        %4031 = vmatprep.subr.mxu0 0.0
        %4032 = vmatpush1.msra.mxu0 0.0
        %4033 = vmatprep.subr.mxu0 0.0
        %4034 = vmatpush1.msra.mxu0 0.0
        %4035 = vmatprep.subr.mxu0 0.0
        %4036 = vmatpush1.msra.mxu0 0.0
        %4037 = vmatprep.subr.mxu0 0.0
        %4038 = vmatpush1.msra.mxu0 0.0
        %4039 = vmatprep.subr.mxu0 0.0
        %4040 = vmatpush1.msra.mxu0 0.0
        %4041 = vmatprep.mubr.f32.mxu0 0.0
        %4042 = vmatmul.mubr.f32.gmra.mrb[0].mxu0 %v3966
        %v4043 = vpop.f32.mrb[0].mxu0
        %v4044 = vadd.f32 %v3951, %v4043
        %v4045 = vpop.f32.mrb[0].mxu0
        %v4046 = vadd.f32 %v3951, %v4045
        %4047 = vmatprep.mubr.f32.mxu0 0.0
        %4048 = vmatmul.mubr.f32.gmra.mrb[0].mxu0 %v3969
        %v4049 = vpop.f32.mrb[0].mxu0
        %v4050 = vadd.f32 %v3955, %v4049
        %v4051 = vpop.f32.mrb[0].mxu0
        %v4052 = vadd.f32 %v3955, %v4051
        %4053 = vmatprep.mubr.f32.mxu0 0.0
        %4054 = vmatmul.mubr.f32.gmra.mrb[0].mxu0 %v3972
        %v4055 = vpop.f32.mrb[0].mxu0
        %v4056 = vadd.f32 %v3959, %v4055
        %v4057 = vpop.f32.mrb[0].mxu0
        %v4058 = vadd.f32 %v3959, %v4057
        %4059 = vmatprep.mubr.f32.mxu0 0.0
        %4060 = vmatmul.mubr.f32.gmra.mrb[0].mxu0 %v3975
        %v4061 = vpop.f32.mrb[0].mxu0
        %v4062 = vadd.f32 %v3963, %v4061
        %v4063 = vpop.f32.mrb[0].mxu0
        %v4064 = vadd.f32 %v3963, %v4063
        %4065 = vdwg.mxu0
        %4066 = vmatprep.subr.mxu0 %v2696
        %4067 = vmatpush1.msra.mxu0 %v2592
        %4068 = vmatprep.subr.mxu0 %v3112
        %4069 = vmatpush1.msra.mxu0 %v3008
        %4070 = vmatprep.subr.mxu0 %v3528
        %4071 = vmatpush1.msra.mxu0 %v3424
        %4072 = vmatprep.subr.mxu0 %v3944
        %4073 = vmatpush1.msra.mxu0 %v3840
        %4074 = vmatprep.subr.mxu0 0.0
        %4075 = vmatpush1.msra.mxu0 0.0
        %4076 = vmatprep.subr.mxu0 0.0
        %4077 = vmatpush1.msra.mxu0 0.0
        %4078 = vmatprep.subr.mxu0 0.0
        %4079 = vmatpush1.msra.mxu0 0.0
        %4080 = vmatprep.subr.mxu0 0.0
        %4081 = vmatpush1.msra.mxu0 0.0
        %4082 = vmatprep.subr.mxu0 0.0
        %4083 = vmatpush1.msra.mxu0 0.0
        %4084 = vmatprep.subr.mxu0 0.0
        %4085 = vmatpush1.msra.mxu0 0.0
        %4086 = vmatprep.subr.mxu0 0.0
        %4087 = vmatpush1.msra.mxu0 0.0
        %4088 = vmatprep.subr.mxu0 0.0
        %4089 = vmatpush1.msra.mxu0 0.0
        %4090 = vmatprep.subr.mxu0 0.0
        %4091 = vmatpush1.msra.mxu0 0.0
        %4092 = vmatprep.subr.mxu0 0.0
        %4093 = vmatpush1.msra.mxu0 0.0
        %4094 = vmatprep.subr.mxu0 0.0
        %4095 = vmatpush1.msra.mxu0 0.0
        %4096 = vmatprep.subr.mxu0 0.0
        %4097 = vmatpush1.msra.mxu0 0.0
        %4098 = vmatprep.subr.mxu0 0.0
        %4099 = vmatpush1.msra.mxu0 0.0
        %4100 = vmatprep.subr.mxu0 0.0
        %4101 = vmatpush1.msra.mxu0 0.0
        %4102 = vmatprep.subr.mxu0 0.0
        %4103 = vmatpush1.msra.mxu0 0.0
        %4104 = vmatprep.subr.mxu0 0.0
        %4105 = vmatpush1.msra.mxu0 0.0
        %4106 = vmatprep.subr.mxu0 0.0
        %4107 = vmatpush1.msra.mxu0 0.0
        %4108 = vmatprep.subr.mxu0 0.0
        %4109 = vmatpush1.msra.mxu0 0.0
        %4110 = vmatprep.subr.mxu0 0.0
        %4111 = vmatpush1.msra.mxu0 0.0
        %4112 = vmatprep.subr.mxu0 0.0
        %4113 = vmatpush1.msra.mxu0 0.0
        %4114 = vmatprep.subr.mxu0 0.0
        %4115 = vmatpush1.msra.mxu0 0.0
        %4116 = vmatprep.subr.mxu0 0.0
        %4117 = vmatpush1.msra.mxu0 0.0
        %4118 = vmatprep.subr.mxu0 0.0
        %4119 = vmatpush1.msra.mxu0 0.0
        %4120 = vmatprep.subr.mxu0 0.0
        %4121 = vmatpush1.msra.mxu0 0.0
        %4122 = vmatprep.subr.mxu0 0.0
        %4123 = vmatpush1.msra.mxu0 0.0
        %4124 = vmatprep.subr.mxu0 0.0
        %4125 = vmatpush1.msra.mxu0 0.0
        %4126 = vmatprep.subr.mxu0 0.0
        %4127 = vmatpush1.msra.mxu0 0.0
        %4128 = vmatprep.subr.mxu0 0.0
        %4129 = vmatpush1.msra.mxu0 0.0
        %4130 = vmatprep.mubr.f32.mxu0 0.0
        %4131 = vmatmul.mubr.f32.gmra.mrb[0].mxu0 %v3966
        %v4132 = vpop.f32.mrb[0].mxu0
        %v4133 = vadd.f32 %v3951, %v4132
        %v4134 = vpop.f32.mrb[0].mxu0
        %v4135 = vadd.f32 %v3951, %v4134
        %4136 = vmatprep.mubr.f32.mxu0 0.0
        %4137 = vmatmul.mubr.f32.gmra.mrb[0].mxu0 %v3969
        %v4138 = vpop.f32.mrb[0].mxu0
        %v4139 = vadd.f32 %v3955, %v4138
        %v4140 = vpop.f32.mrb[0].mxu0
        %v4141 = vadd.f32 %v3955, %v4140
        %4142 = vmatprep.mubr.f32.mxu0 0.0
        %4143 = vmatmul.mubr.f32.gmra.mrb[0].mxu0 %v3972
        %v4144 = vpop.f32.mrb[0].mxu0
        %v4145 = vadd.f32 %v3959, %v4144
        %v4146 = vpop.f32.mrb[0].mxu0
        %v4147 = vadd.f32 %v3959, %v4146
        %4148 = vmatprep.mubr.f32.mxu0 0.0
        %4149 = vmatmul.mubr.f32.gmra.mrb[0].mxu0 %v3975
        %v4150 = vpop.f32.mrb[0].mxu0
        %v4151 = vadd.f32 %v3963, %v4150
        %v4152 = vpop.f32.mrb[0].mxu0
        %v4153 = vadd.f32 %v3963, %v4152
        %4154 = vdwg.mxu0
        %v4155 = vand.u32 2147483647, %v4044
        %vm4156 = vcmp.le.f32.partialorder %v4155, 0.7853982
        %vm4157 = vcmp.lt.s32.totalorder %v4044, 0
        %v4158 = vand.u32 %v4044, 2139095040
        %v4159 = vshrl.u32 %v4158, 23
        %v4160 = vsub.s32 %v4159, 127
        %v4161 = vand.u32 2147483647, %v4044
        %v4162 = vand.u32 %v4161, 8388607
        %v4163 = vor.u32 %v4162, 8388608
        %v4164 = vsub.s32 0, %v4163
        %v4165 = vadd.s32 %v4160, 1
        %vm4166 = vcmp.gt.s32.totalorder %v4165, 0
        %v4167 = vsel %vm4166, %v4165, 0
        %v4168 = vshrl.u32 %v4167, 5
        %v4169 = vand.u32 %v4167, 31
        %v4170 = vsub.s32 32, %v4169
        %v4171 = vshrl.u32 683565275, %v4170
        %v4172 = vshll.u32 683565275, %v4169
        %v4173 = vshrl.u32 2475754826, %v4170
        %v4174 = vor.u32 %v4172, %v4173
        %v4175 = vshll.u32 2475754826, %v4169
        %v4176 = vshrl.u32 2131351028, %v4170
        %v4177 = vor.u32 %v4175, %v4176
        %v4178 = vshll.u32 2131351028, %v4169
        %v4179 = vshrl.u32 2102212464, %v4170
        %v4180 = vor.u32 %v4178, %v4179
        %v4181 = vshll.u32 2102212464, %v4169
        %v4182 = vshrl.u32 920167782, %v4170
        %v4183 = vor.u32 %v4181, %v4182
        %v4184 = vshll.u32 920167782, %v4169
        %v4185 = vshrl.u32 1326507024, %v4170
        %v4186 = vor.u32 %v4184, %v4185
        %vm4187 = vcmp.lt.s32.totalorder %v4168, 1
        %vm4188 = vcmp.lt.s32.totalorder %v4168, 2
        %vm4189 = vcmp.lt.s32.totalorder %v4168, 3
        %vm4190 = vcmp.lt.s32.totalorder %v4168, 4
        %v4191 = vsel %vm4187, %v4171, %v4174
        %v4192 = vsel %vm4190, %v4180, 2102212464
        %v4193 = vsel %vm4189, %v4177, %v4192
        %v4194 = vsel %vm4188, %v4191, %v4193
        %v4195 = vsel %vm4187, %v4174, %v4177
        %v4196 = vsel %vm4190, %v4183, 920167782
        %v4197 = vsel %vm4189, %v4180, %v4196
        %v4198 = vsel %vm4188, %v4195, %v4197
        %v4199 = vsel %vm4187, %v4177, %v4180
        %v4200 = vsel %vm4190, %v4186, 1326507024
        %v4201 = vsel %vm4189, %v4183, %v4200
        %v4202 = vsel %vm4188, %v4199, %v4201
        %v4203 = vshll.u32 %v4163, 8
        %v4204 = vmul.u32.u64.compose %v4203, %v4202
        %v4205 = vextract.low.u32 %v4204
        %v4206 = vextract.high.u32 %v4204
        %v4207 = vmul.u32.u64.compose %v4203, %v4198
        %v4208 = vextract.low.u32 %v4207
        %v4209 = vextract.high.u32 %v4207
        %v4210 = vmul.u32 %v4203, %v4194
        %v4211 = vadd.s32 %v4206, %v4208
        %vm4212 = vc.u32 %v4206, %v4208
        %v4213 = vadd.s32 %v4209, 1
        %v4214 = vsel %vm4212, %v4213, %v4209
        %v4215 = vadd.s32 %v4210, %v4214
        %v4216 = vadd.s32 %v4215, 536870912
        %v4217 = vshrl.u32 %v4216, 30
        %v4218 = vshll.u32 %v4217, 30
        %v4219 = vsub.s32 %v4215, %v4218
        %vm4220 = vcmp.lt.s32.totalorder %v4219, 0
        %v4221 = vsub.s32 0, %v4219
        %v4222 = vsel %vm4220, %v4221, %v4219
        %v4223 = vclz %v4222
        %v4224 = vsub.s32 %v4223, 2
        %vm4225 = vcmp.gt.s32.totalorder 0, %v4224
        %v4226 = vsel %vm4225, 0, %v4224
        %v4227 = vsub.s32 32, %v4226
        %v4228 = vshll.u32 %v4219, %v4226
        %v4229 = vshrl.u32 %v4211, %v4227
        %v4230 = vor.u32 %v4228, %v4229
        %v4231 = vsub.s32 4294967266, %v4226
        %v4232 = vadd.s32 %v4231, 127
        %v4233 = vshll.u32 %v4232, 23
        %v4234 = vor.u32 4788187, %v4233
        %v4235 = vand.u32 2147483647, %v4234
        %v4237 = vcvt.s32.f32 %v4230
        %v4238 = vmul.f32 %v4237, %v4235
        %v4239 = vxor.u32 %v4238, 2147483648
        %v4240 = vsel %vm4157, %v4239, %v4238
        %v4241 = vsub.s32 4, %v4217
        %v4242 = vsel %vm4157, %v4241, %v4217
        %v4243 = vsel %vm4156, %v4044, %v4240
        %v4244 = vsel %vm4156, 0, %v4242
        %v4245 = vcosq.f32.pop %v4243
        %v4246 = vsinq.f32.pop %v4243
        %vm4247 = vweird.f32 %v4044
        %v4248 = vadd.s32 %v4244, 3
        %v4249 = vand.u32 %v4248, 3
        %vm4250 = vcmp.lt.s32.totalorder %v4249, 2
        %vm4251 = vcmp.eq.s32.totalorder %v4249, 0
        %v4252 = vxor.u32 %v4246, 2147483648
        %v4253 = vsel %vm4251, %v4245, %v4252
        %vm4254 = vcmp.eq.s32.totalorder %v4249, 2
        %v4255 = vxor.u32 %v4245, 2147483648
        %v4256 = vsel %vm4254, %v4255, %v4246
        %v4257 = vsel %vm4250, %v4253, %v4256
        %v4258 = vsel %vm4247, nan, %v4257
        %v4259 = vand.u32 2147483647, %v4046
        %vm4260 = vcmp.le.f32.partialorder %v4259, 0.7853982
        %vm4261 = vcmp.lt.s32.totalorder %v4046, 0
        %v4262 = vand.u32 %v4046, 2139095040
        %v4263 = vshrl.u32 %v4262, 23
        %v4264 = vsub.s32 %v4263, 127
        %v4265 = vand.u32 2147483647, %v4046
        %v4266 = vand.u32 %v4265, 8388607
        %v4267 = vor.u32 %v4266, 8388608
        %v4268 = vsub.s32 0, %v4267
        %v4269 = vadd.s32 %v4264, 1
        %vm4270 = vcmp.gt.s32.totalorder %v4269, 0
        %v4271 = vsel %vm4270, %v4269, 0
        %v4272 = vshrl.u32 %v4271, 5
        %v4273 = vand.u32 %v4271, 31
        %v4274 = vsub.s32 32, %v4273
        %v4275 = vshrl.u32 683565275, %v4274
        %v4276 = vshll.u32 683565275, %v4273
        %v4277 = vshrl.u32 2475754826, %v4274
        %v4278 = vor.u32 %v4276, %v4277
        %v4279 = vshll.u32 2475754826, %v4273
        %v4280 = vshrl.u32 2131351028, %v4274
        %v4281 = vor.u32 %v4279, %v4280
        %v4282 = vshll.u32 2131351028, %v4273
        %v4283 = vshrl.u32 2102212464, %v4274
        %v4284 = vor.u32 %v4282, %v4283
        %v4285 = vshll.u32 2102212464, %v4273
        %v4286 = vshrl.u32 920167782, %v4274
        %v4287 = vor.u32 %v4285, %v4286
        %v4288 = vshll.u32 920167782, %v4273
        %v4289 = vshrl.u32 1326507024, %v4274
        %v4290 = vor.u32 %v4288, %v4289
        %vm4291 = vcmp.lt.s32.totalorder %v4272, 1
        %vm4292 = vcmp.lt.s32.totalorder %v4272, 2
        %vm4293 = vcmp.lt.s32.totalorder %v4272, 3
        %vm4294 = vcmp.lt.s32.totalorder %v4272, 4
        %v4295 = vsel %vm4291, %v4275, %v4278
        %v4296 = vsel %vm4294, %v4284, 2102212464
        %v4297 = vsel %vm4293, %v4281, %v4296
        %v4298 = vsel %vm4292, %v4295, %v4297
        %v4299 = vsel %vm4291, %v4278, %v4281
        %v4300 = vsel %vm4294, %v4287, 920167782
        %v4301 = vsel %vm4293, %v4284, %v4300
        %v4302 = vsel %vm4292, %v4299, %v4301
        %v4303 = vsel %vm4291, %v4281, %v4284
        %v4304 = vsel %vm4294, %v4290, 1326507024
        %v4305 = vsel %vm4293, %v4287, %v4304
        %v4306 = vsel %vm4292, %v4303, %v4305
        %v4307 = vshll.u32 %v4267, 8
        %v4308 = vmul.u32.u64.compose %v4307, %v4306
        %v4309 = vextract.low.u32 %v4308
        %v4310 = vextract.high.u32 %v4308
        %v4311 = vmul.u32.u64.compose %v4307, %v4302
        %v4312 = vextract.low.u32 %v4311
        %v4313 = vextract.high.u32 %v4311
        %v4314 = vmul.u32 %v4307, %v4298
        %v4315 = vadd.s32 %v4310, %v4312
        %vm4316 = vc.u32 %v4310, %v4312
        %v4317 = vadd.s32 %v4313, 1
        %v4318 = vsel %vm4316, %v4317, %v4313
        %v4319 = vadd.s32 %v4314, %v4318
        %v4320 = vadd.s32 %v4319, 536870912
        %v4321 = vshrl.u32 %v4320, 30
        %v4322 = vshll.u32 %v4321, 30
        %v4323 = vsub.s32 %v4319, %v4322
        %vm4324 = vcmp.lt.s32.totalorder %v4323, 0
        %v4325 = vsub.s32 0, %v4323
        %v4326 = vsel %vm4324, %v4325, %v4323
        %v4327 = vclz %v4326
        %v4328 = vsub.s32 %v4327, 2
        %vm4329 = vcmp.gt.s32.totalorder 0, %v4328
        %v4330 = vsel %vm4329, 0, %v4328
        %v4331 = vsub.s32 32, %v4330
        %v4332 = vshll.u32 %v4323, %v4330
        %v4333 = vshrl.u32 %v4315, %v4331
        %v4334 = vor.u32 %v4332, %v4333
        %v4335 = vsub.s32 4294967266, %v4330
        %v4336 = vadd.s32 %v4335, 127
        %v4337 = vshll.u32 %v4336, 23
        %v4338 = vor.u32 4788187, %v4337
        %v4339 = vand.u32 2147483647, %v4338
        %v4341 = vcvt.s32.f32 %v4334
        %v4342 = vmul.f32 %v4341, %v4339
        %v4343 = vxor.u32 %v4342, 2147483648
        %v4344 = vsel %vm4261, %v4343, %v4342
        %v4345 = vsub.s32 4, %v4321
        %v4346 = vsel %vm4261, %v4345, %v4321
        %v4347 = vsel %vm4260, %v4046, %v4344
        %v4348 = vsel %vm4260, 0, %v4346
        %v4349 = vcosq.f32.pop %v4347
        %v4350 = vsinq.f32.pop %v4347
        %vm4351 = vweird.f32 %v4046
        %v4352 = vadd.s32 %v4348, 3
        %v4353 = vand.u32 %v4352, 3
        %vm4354 = vcmp.lt.s32.totalorder %v4353, 2
        %vm4355 = vcmp.eq.s32.totalorder %v4353, 0
        %v4356 = vxor.u32 %v4350, 2147483648
        %v4357 = vsel %vm4355, %v4349, %v4356
        %vm4358 = vcmp.eq.s32.totalorder %v4353, 2
        %v4359 = vxor.u32 %v4349, 2147483648
        %v4360 = vsel %vm4358, %v4359, %v4350
        %v4361 = vsel %vm4354, %v4357, %v4360
        %v4362 = vsel %vm4351, nan, %v4361
        %v4363 = vand.u32 2147483647, %v4133
        %vm4364 = vcmp.le.f32.partialorder %v4363, 0.7853982
        %vm4365 = vcmp.lt.s32.totalorder %v4133, 0
        %v4366 = vand.u32 %v4133, 2139095040
        %v4367 = vshrl.u32 %v4366, 23
        %v4368 = vsub.s32 %v4367, 127
        %v4369 = vand.u32 2147483647, %v4133
        %v4370 = vand.u32 %v4369, 8388607
        %v4371 = vor.u32 %v4370, 8388608
        %v4372 = vsub.s32 0, %v4371
        %v4373 = vadd.s32 %v4368, 1
        %vm4374 = vcmp.gt.s32.totalorder %v4373, 0
        %v4375 = vsel %vm4374, %v4373, 0
        %v4376 = vshrl.u32 %v4375, 5
        %v4377 = vand.u32 %v4375, 31
        %v4378 = vsub.s32 32, %v4377
        %v4379 = vshrl.u32 683565275, %v4378
        %v4380 = vshll.u32 683565275, %v4377
        %v4381 = vshrl.u32 2475754826, %v4378
        %v4382 = vor.u32 %v4380, %v4381
        %v4383 = vshll.u32 2475754826, %v4377
        %v4384 = vshrl.u32 2131351028, %v4378
        %v4385 = vor.u32 %v4383, %v4384
        %v4386 = vshll.u32 2131351028, %v4377
        %v4387 = vshrl.u32 2102212464, %v4378
        %v4388 = vor.u32 %v4386, %v4387
        %v4389 = vshll.u32 2102212464, %v4377
        %v4390 = vshrl.u32 920167782, %v4378
        %v4391 = vor.u32 %v4389, %v4390
        %v4392 = vshll.u32 920167782, %v4377
        %v4393 = vshrl.u32 1326507024, %v4378
        %v4394 = vor.u32 %v4392, %v4393
        %vm4395 = vcmp.lt.s32.totalorder %v4376, 1
        %vm4396 = vcmp.lt.s32.totalorder %v4376, 2
        %vm4397 = vcmp.lt.s32.totalorder %v4376, 3
        %vm4398 = vcmp.lt.s32.totalorder %v4376, 4
        %v4399 = vsel %vm4395, %v4379, %v4382
        %v4400 = vsel %vm4398, %v4388, 2102212464
        %v4401 = vsel %vm4397, %v4385, %v4400
        %v4402 = vsel %vm4396, %v4399, %v4401
        %v4403 = vsel %vm4395, %v4382, %v4385
        %v4404 = vsel %vm4398, %v4391, 920167782
        %v4405 = vsel %vm4397, %v4388, %v4404
        %v4406 = vsel %vm4396, %v4403, %v4405
        %v4407 = vsel %vm4395, %v4385, %v4388
        %v4408 = vsel %vm4398, %v4394, 1326507024
        %v4409 = vsel %vm4397, %v4391, %v4408
        %v4410 = vsel %vm4396, %v4407, %v4409
        %v4411 = vshll.u32 %v4371, 8
        %v4412 = vmul.u32.u64.compose %v4411, %v4410
        %v4413 = vextract.low.u32 %v4412
        %v4414 = vextract.high.u32 %v4412
        %v4415 = vmul.u32.u64.compose %v4411, %v4406
        %v4416 = vextract.low.u32 %v4415
        %v4417 = vextract.high.u32 %v4415
        %v4418 = vmul.u32 %v4411, %v4402
        %v4419 = vadd.s32 %v4414, %v4416
        %vm4420 = vc.u32 %v4414, %v4416
        %v4421 = vadd.s32 %v4417, 1
        %v4422 = vsel %vm4420, %v4421, %v4417
        %v4423 = vadd.s32 %v4418, %v4422
        %v4424 = vadd.s32 %v4423, 536870912
        %v4425 = vshrl.u32 %v4424, 30
        %v4426 = vshll.u32 %v4425, 30
        %v4427 = vsub.s32 %v4423, %v4426
        %vm4428 = vcmp.lt.s32.totalorder %v4427, 0
        %v4429 = vsub.s32 0, %v4427
        %v4430 = vsel %vm4428, %v4429, %v4427
        %v4431 = vclz %v4430
        %v4432 = vsub.s32 %v4431, 2
        %vm4433 = vcmp.gt.s32.totalorder 0, %v4432
        %v4434 = vsel %vm4433, 0, %v4432
        %v4435 = vsub.s32 32, %v4434
        %v4436 = vshll.u32 %v4427, %v4434
        %v4437 = vshrl.u32 %v4419, %v4435
        %v4438 = vor.u32 %v4436, %v4437
        %v4439 = vsub.s32 4294967266, %v4434
        %v4440 = vadd.s32 %v4439, 127
        %v4441 = vshll.u32 %v4440, 23
        %v4442 = vor.u32 4788187, %v4441
        %v4443 = vand.u32 2147483647, %v4442
        %v4445 = vcvt.s32.f32 %v4438
        %v4446 = vmul.f32 %v4445, %v4443
        %v4447 = vxor.u32 %v4446, 2147483648
        %v4448 = vsel %vm4365, %v4447, %v4446
        %v4449 = vsub.s32 4, %v4425
        %v4450 = vsel %vm4365, %v4449, %v4425
        %v4451 = vsel %vm4364, %v4133, %v4448
        %v4452 = vsel %vm4364, 0, %v4450
        %v4453 = vcosq.f32.pop %v4451
        %v4454 = vsinq.f32.pop %v4451
        %vm4455 = vweird.f32 %v4133
        %v4456 = vadd.s32 %v4452, 3
        %v4457 = vand.u32 %v4456, 3
        %vm4458 = vcmp.lt.s32.totalorder %v4457, 2
        %vm4459 = vcmp.eq.s32.totalorder %v4457, 0
        %v4460 = vxor.u32 %v4454, 2147483648
        %v4461 = vsel %vm4459, %v4453, %v4460
        %vm4462 = vcmp.eq.s32.totalorder %v4457, 2
        %v4463 = vxor.u32 %v4453, 2147483648
        %v4464 = vsel %vm4462, %v4463, %v4454
        %v4465 = vsel %vm4458, %v4461, %v4464
        %v4466 = vsel %vm4455, nan, %v4465
        %v4467 = vand.u32 2147483647, %v4135
        %vm4468 = vcmp.le.f32.partialorder %v4467, 0.7853982
        %vm4469 = vcmp.lt.s32.totalorder %v4135, 0
        %v4470 = vand.u32 %v4135, 2139095040
        %v4471 = vshrl.u32 %v4470, 23
        %v4472 = vsub.s32 %v4471, 127
        %v4473 = vand.u32 2147483647, %v4135
        %v4474 = vand.u32 %v4473, 8388607
        %v4475 = vor.u32 %v4474, 8388608
        %v4476 = vsub.s32 0, %v4475
        %v4477 = vadd.s32 %v4472, 1
        %vm4478 = vcmp.gt.s32.totalorder %v4477, 0
        %v4479 = vsel %vm4478, %v4477, 0
        %v4480 = vshrl.u32 %v4479, 5
        %v4481 = vand.u32 %v4479, 31
        %v4482 = vsub.s32 32, %v4481
        %v4483 = vshrl.u32 683565275, %v4482
        %v4484 = vshll.u32 683565275, %v4481
        %v4485 = vshrl.u32 2475754826, %v4482
        %v4486 = vor.u32 %v4484, %v4485
        %v4487 = vshll.u32 2475754826, %v4481
        %v4488 = vshrl.u32 2131351028, %v4482
        %v4489 = vor.u32 %v4487, %v4488
        %v4490 = vshll.u32 2131351028, %v4481
        %v4491 = vshrl.u32 2102212464, %v4482
        %v4492 = vor.u32 %v4490, %v4491
        %v4493 = vshll.u32 2102212464, %v4481
        %v4494 = vshrl.u32 920167782, %v4482
        %v4495 = vor.u32 %v4493, %v4494
        %v4496 = vshll.u32 920167782, %v4481
        %v4497 = vshrl.u32 1326507024, %v4482
        %v4498 = vor.u32 %v4496, %v4497
        %vm4499 = vcmp.lt.s32.totalorder %v4480, 1
        %vm4500 = vcmp.lt.s32.totalorder %v4480, 2
        %vm4501 = vcmp.lt.s32.totalorder %v4480, 3
        %vm4502 = vcmp.lt.s32.totalorder %v4480, 4
        %v4503 = vsel %vm4499, %v4483, %v4486
        %v4504 = vsel %vm4502, %v4492, 2102212464
        %v4505 = vsel %vm4501, %v4489, %v4504
        %v4506 = vsel %vm4500, %v4503, %v4505
        %v4507 = vsel %vm4499, %v4486, %v4489
        %v4508 = vsel %vm4502, %v4495, 920167782
        %v4509 = vsel %vm4501, %v4492, %v4508
        %v4510 = vsel %vm4500, %v4507, %v4509
        %v4511 = vsel %vm4499, %v4489, %v4492
        %v4512 = vsel %vm4502, %v4498, 1326507024
        %v4513 = vsel %vm4501, %v4495, %v4512
        %v4514 = vsel %vm4500, %v4511, %v4513
        %v4515 = vshll.u32 %v4475, 8
        %v4516 = vmul.u32.u64.compose %v4515, %v4514
        %v4517 = vextract.low.u32 %v4516
        %v4518 = vextract.high.u32 %v4516
        %v4519 = vmul.u32.u64.compose %v4515, %v4510
        %v4520 = vextract.low.u32 %v4519
        %v4521 = vextract.high.u32 %v4519
        %v4522 = vmul.u32 %v4515, %v4506
        %v4523 = vadd.s32 %v4518, %v4520
        %vm4524 = vc.u32 %v4518, %v4520
        %v4525 = vadd.s32 %v4521, 1
        %v4526 = vsel %vm4524, %v4525, %v4521
        %v4527 = vadd.s32 %v4522, %v4526
        %v4528 = vadd.s32 %v4527, 536870912
        %v4529 = vshrl.u32 %v4528, 30
        %v4530 = vshll.u32 %v4529, 30
        %v4531 = vsub.s32 %v4527, %v4530
        %vm4532 = vcmp.lt.s32.totalorder %v4531, 0
        %v4533 = vsub.s32 0, %v4531
        %v4534 = vsel %vm4532, %v4533, %v4531
        %v4535 = vclz %v4534
        %v4536 = vsub.s32 %v4535, 2
        %vm4537 = vcmp.gt.s32.totalorder 0, %v4536
        %v4538 = vsel %vm4537, 0, %v4536
        %v4539 = vsub.s32 32, %v4538
        %v4540 = vshll.u32 %v4531, %v4538
        %v4541 = vshrl.u32 %v4523, %v4539
        %v4542 = vor.u32 %v4540, %v4541
        %v4543 = vsub.s32 4294967266, %v4538
        %v4544 = vadd.s32 %v4543, 127
        %v4545 = vshll.u32 %v4544, 23
        %v4546 = vor.u32 4788187, %v4545
        %v4547 = vand.u32 2147483647, %v4546
        %v4549 = vcvt.s32.f32 %v4542
        %v4550 = vmul.f32 %v4549, %v4547
        %v4551 = vxor.u32 %v4550, 2147483648
        %v4552 = vsel %vm4469, %v4551, %v4550
        %v4553 = vsub.s32 4, %v4529
        %v4554 = vsel %vm4469, %v4553, %v4529
        %v4555 = vsel %vm4468, %v4135, %v4552
        %v4556 = vsel %vm4468, 0, %v4554
        %v4557 = vcosq.f32.pop %v4555
        %v4558 = vsinq.f32.pop %v4555
        %vm4559 = vweird.f32 %v4135
        %v4560 = vadd.s32 %v4556, 3
        %v4561 = vand.u32 %v4560, 3
        %vm4562 = vcmp.lt.s32.totalorder %v4561, 2
        %vm4563 = vcmp.eq.s32.totalorder %v4561, 0
        %v4564 = vxor.u32 %v4558, 2147483648
        %v4565 = vsel %vm4563, %v4557, %v4564
        %vm4566 = vcmp.eq.s32.totalorder %v4561, 2
        %v4567 = vxor.u32 %v4557, 2147483648
        %v4568 = vsel %vm4566, %v4567, %v4558
        %v4569 = vsel %vm4562, %v4565, %v4568
        %v4570 = vsel %vm4559, nan, %v4569
        %v4571 = vand.u32 2147483647, %v4050
        %vm4572 = vcmp.le.f32.partialorder %v4571, 0.7853982
        %vm4573 = vcmp.lt.s32.totalorder %v4050, 0
        %v4574 = vand.u32 %v4050, 2139095040
        %v4575 = vshrl.u32 %v4574, 23
        %v4576 = vsub.s32 %v4575, 127
        %v4577 = vand.u32 2147483647, %v4050
        %v4578 = vand.u32 %v4577, 8388607
        %v4579 = vor.u32 %v4578, 8388608
        %v4580 = vsub.s32 0, %v4579
        %v4581 = vadd.s32 %v4576, 1
        %vm4582 = vcmp.gt.s32.totalorder %v4581, 0
        %v4583 = vsel %vm4582, %v4581, 0
        %v4584 = vshrl.u32 %v4583, 5
        %v4585 = vand.u32 %v4583, 31
        %v4586 = vsub.s32 32, %v4585
        %v4587 = vshrl.u32 683565275, %v4586
        %v4588 = vshll.u32 683565275, %v4585
        %v4589 = vshrl.u32 2475754826, %v4586
        %v4590 = vor.u32 %v4588, %v4589
        %v4591 = vshll.u32 2475754826, %v4585
        %v4592 = vshrl.u32 2131351028, %v4586
        %v4593 = vor.u32 %v4591, %v4592
        %v4594 = vshll.u32 2131351028, %v4585
        %v4595 = vshrl.u32 2102212464, %v4586
        %v4596 = vor.u32 %v4594, %v4595
        %v4597 = vshll.u32 2102212464, %v4585
        %v4598 = vshrl.u32 920167782, %v4586
        %v4599 = vor.u32 %v4597, %v4598
        %v4600 = vshll.u32 920167782, %v4585
        %v4601 = vshrl.u32 1326507024, %v4586
        %v4602 = vor.u32 %v4600, %v4601
        %vm4603 = vcmp.lt.s32.totalorder %v4584, 1
        %vm4604 = vcmp.lt.s32.totalorder %v4584, 2
        %vm4605 = vcmp.lt.s32.totalorder %v4584, 3
        %vm4606 = vcmp.lt.s32.totalorder %v4584, 4
        %v4607 = vsel %vm4603, %v4587, %v4590
        %v4608 = vsel %vm4606, %v4596, 2102212464
        %v4609 = vsel %vm4605, %v4593, %v4608
        %v4610 = vsel %vm4604, %v4607, %v4609
        %v4611 = vsel %vm4603, %v4590, %v4593
        %v4612 = vsel %vm4606, %v4599, 920167782
        %v4613 = vsel %vm4605, %v4596, %v4612
        %v4614 = vsel %vm4604, %v4611, %v4613
        %v4615 = vsel %vm4603, %v4593, %v4596
        %v4616 = vsel %vm4606, %v4602, 1326507024
        %v4617 = vsel %vm4605, %v4599, %v4616
        %v4618 = vsel %vm4604, %v4615, %v4617
        %v4619 = vshll.u32 %v4579, 8
        %v4620 = vmul.u32.u64.compose %v4619, %v4618
        %v4621 = vextract.low.u32 %v4620
        %v4622 = vextract.high.u32 %v4620
        %v4623 = vmul.u32.u64.compose %v4619, %v4614
        %v4624 = vextract.low.u32 %v4623
        %v4625 = vextract.high.u32 %v4623
        %v4626 = vmul.u32 %v4619, %v4610
        %v4627 = vadd.s32 %v4622, %v4624
        %vm4628 = vc.u32 %v4622, %v4624
        %v4629 = vadd.s32 %v4625, 1
        %v4630 = vsel %vm4628, %v4629, %v4625
        %v4631 = vadd.s32 %v4626, %v4630
        %v4632 = vadd.s32 %v4631, 536870912
        %v4633 = vshrl.u32 %v4632, 30
        %v4634 = vshll.u32 %v4633, 30
        %v4635 = vsub.s32 %v4631, %v4634
        %vm4636 = vcmp.lt.s32.totalorder %v4635, 0
        %v4637 = vsub.s32 0, %v4635
        %v4638 = vsel %vm4636, %v4637, %v4635
        %v4639 = vclz %v4638
        %v4640 = vsub.s32 %v4639, 2
        %vm4641 = vcmp.gt.s32.totalorder 0, %v4640
        %v4642 = vsel %vm4641, 0, %v4640
        %v4643 = vsub.s32 32, %v4642
        %v4644 = vshll.u32 %v4635, %v4642
        %v4645 = vshrl.u32 %v4627, %v4643
        %v4646 = vor.u32 %v4644, %v4645
        %v4647 = vsub.s32 4294967266, %v4642
        %v4648 = vadd.s32 %v4647, 127
        %v4649 = vshll.u32 %v4648, 23
        %v4650 = vor.u32 4788187, %v4649
        %v4651 = vand.u32 2147483647, %v4650
        %v4653 = vcvt.s32.f32 %v4646
        %v4654 = vmul.f32 %v4653, %v4651
        %v4655 = vxor.u32 %v4654, 2147483648
        %v4656 = vsel %vm4573, %v4655, %v4654
        %v4657 = vsub.s32 4, %v4633
        %v4658 = vsel %vm4573, %v4657, %v4633
        %v4659 = vsel %vm4572, %v4050, %v4656
        %v4660 = vsel %vm4572, 0, %v4658
        %v4661 = vcosq.f32.pop %v4659
        %v4662 = vsinq.f32.pop %v4659
        %vm4663 = vweird.f32 %v4050
        %v4664 = vadd.s32 %v4660, 3
        %v4665 = vand.u32 %v4664, 3
        %vm4666 = vcmp.lt.s32.totalorder %v4665, 2
        %vm4667 = vcmp.eq.s32.totalorder %v4665, 0
        %v4668 = vxor.u32 %v4662, 2147483648
        %v4669 = vsel %vm4667, %v4661, %v4668
        %vm4670 = vcmp.eq.s32.totalorder %v4665, 2
        %v4671 = vxor.u32 %v4661, 2147483648
        %v4672 = vsel %vm4670, %v4671, %v4662
        %v4673 = vsel %vm4666, %v4669, %v4672
        %v4674 = vsel %vm4663, nan, %v4673
        %v4675 = vand.u32 2147483647, %v4052
        %vm4676 = vcmp.le.f32.partialorder %v4675, 0.7853982
        %vm4677 = vcmp.lt.s32.totalorder %v4052, 0
        %v4678 = vand.u32 %v4052, 2139095040
        %v4679 = vshrl.u32 %v4678, 23
        %v4680 = vsub.s32 %v4679, 127
        %v4681 = vand.u32 2147483647, %v4052
        %v4682 = vand.u32 %v4681, 8388607
        %v4683 = vor.u32 %v4682, 8388608
        %v4684 = vsub.s32 0, %v4683
        %v4685 = vadd.s32 %v4680, 1
        %vm4686 = vcmp.gt.s32.totalorder %v4685, 0
        %v4687 = vsel %vm4686, %v4685, 0
        %v4688 = vshrl.u32 %v4687, 5
        %v4689 = vand.u32 %v4687, 31
        %v4690 = vsub.s32 32, %v4689
        %v4691 = vshrl.u32 683565275, %v4690
        %v4692 = vshll.u32 683565275, %v4689
        %v4693 = vshrl.u32 2475754826, %v4690
        %v4694 = vor.u32 %v4692, %v4693
        %v4695 = vshll.u32 2475754826, %v4689
        %v4696 = vshrl.u32 2131351028, %v4690
        %v4697 = vor.u32 %v4695, %v4696
        %v4698 = vshll.u32 2131351028, %v4689
        %v4699 = vshrl.u32 2102212464, %v4690
        %v4700 = vor.u32 %v4698, %v4699
        %v4701 = vshll.u32 2102212464, %v4689
        %v4702 = vshrl.u32 920167782, %v4690
        %v4703 = vor.u32 %v4701, %v4702
        %v4704 = vshll.u32 920167782, %v4689
        %v4705 = vshrl.u32 1326507024, %v4690
        %v4706 = vor.u32 %v4704, %v4705
        %vm4707 = vcmp.lt.s32.totalorder %v4688, 1
        %vm4708 = vcmp.lt.s32.totalorder %v4688, 2
        %vm4709 = vcmp.lt.s32.totalorder %v4688, 3
        %vm4710 = vcmp.lt.s32.totalorder %v4688, 4
        %v4711 = vsel %vm4707, %v4691, %v4694
        %v4712 = vsel %vm4710, %v4700, 2102212464
        %v4713 = vsel %vm4709, %v4697, %v4712
        %v4714 = vsel %vm4708, %v4711, %v4713
        %v4715 = vsel %vm4707, %v4694, %v4697
        %v4716 = vsel %vm4710, %v4703, 920167782
        %v4717 = vsel %vm4709, %v4700, %v4716
        %v4718 = vsel %vm4708, %v4715, %v4717
        %v4719 = vsel %vm4707, %v4697, %v4700
        %v4720 = vsel %vm4710, %v4706, 1326507024
        %v4721 = vsel %vm4709, %v4703, %v4720
        %v4722 = vsel %vm4708, %v4719, %v4721
        %v4723 = vshll.u32 %v4683, 8
        %v4724 = vmul.u32.u64.compose %v4723, %v4722
        %v4725 = vextract.low.u32 %v4724
        %v4726 = vextract.high.u32 %v4724
        %v4727 = vmul.u32.u64.compose %v4723, %v4718
        %v4728 = vextract.low.u32 %v4727
        %v4729 = vextract.high.u32 %v4727
        %v4730 = vmul.u32 %v4723, %v4714
        %v4731 = vadd.s32 %v4726, %v4728
        %vm4732 = vc.u32 %v4726, %v4728
        %v4733 = vadd.s32 %v4729, 1
        %v4734 = vsel %vm4732, %v4733, %v4729
        %v4735 = vadd.s32 %v4730, %v4734
        %v4736 = vadd.s32 %v4735, 536870912
        %v4737 = vshrl.u32 %v4736, 30
        %v4738 = vshll.u32 %v4737, 30
        %v4739 = vsub.s32 %v4735, %v4738
        %vm4740 = vcmp.lt.s32.totalorder %v4739, 0
        %v4741 = vsub.s32 0, %v4739
        %v4742 = vsel %vm4740, %v4741, %v4739
        %v4743 = vclz %v4742
        %v4744 = vsub.s32 %v4743, 2
        %vm4745 = vcmp.gt.s32.totalorder 0, %v4744
        %v4746 = vsel %vm4745, 0, %v4744
        %v4747 = vsub.s32 32, %v4746
        %v4748 = vshll.u32 %v4739, %v4746
        %v4749 = vshrl.u32 %v4731, %v4747
        %v4750 = vor.u32 %v4748, %v4749
        %v4751 = vsub.s32 4294967266, %v4746
        %v4752 = vadd.s32 %v4751, 127
        %v4753 = vshll.u32 %v4752, 23
        %v4754 = vor.u32 4788187, %v4753
        %v4755 = vand.u32 2147483647, %v4754
        %v4757 = vcvt.s32.f32 %v4750
        %v4758 = vmul.f32 %v4757, %v4755
        %v4759 = vxor.u32 %v4758, 2147483648
        %v4760 = vsel %vm4677, %v4759, %v4758
        %v4761 = vsub.s32 4, %v4737
        %v4762 = vsel %vm4677, %v4761, %v4737
        %v4763 = vsel %vm4676, %v4052, %v4760
        %v4764 = vsel %vm4676, 0, %v4762
        %v4765 = vcosq.f32.pop %v4763
        %v4766 = vsinq.f32.pop %v4763
        %vm4767 = vweird.f32 %v4052
        %v4768 = vadd.s32 %v4764, 3
        %v4769 = vand.u32 %v4768, 3
        %vm4770 = vcmp.lt.s32.totalorder %v4769, 2
        %vm4771 = vcmp.eq.s32.totalorder %v4769, 0
        %v4772 = vxor.u32 %v4766, 2147483648
        %v4773 = vsel %vm4771, %v4765, %v4772
        %vm4774 = vcmp.eq.s32.totalorder %v4769, 2
        %v4775 = vxor.u32 %v4765, 2147483648
        %v4776 = vsel %vm4774, %v4775, %v4766
        %v4777 = vsel %vm4770, %v4773, %v4776
        %v4778 = vsel %vm4767, nan, %v4777
        %v4779 = vand.u32 2147483647, %v4139
        %vm4780 = vcmp.le.f32.partialorder %v4779, 0.7853982
        %vm4781 = vcmp.lt.s32.totalorder %v4139, 0
        %v4782 = vand.u32 %v4139, 2139095040
        %v4783 = vshrl.u32 %v4782, 23
        %v4784 = vsub.s32 %v4783, 127
        %v4785 = vand.u32 2147483647, %v4139
        %v4786 = vand.u32 %v4785, 8388607
        %v4787 = vor.u32 %v4786, 8388608
        %v4788 = vsub.s32 0, %v4787
        %v4789 = vadd.s32 %v4784, 1
        %vm4790 = vcmp.gt.s32.totalorder %v4789, 0
        %v4791 = vsel %vm4790, %v4789, 0
        %v4792 = vshrl.u32 %v4791, 5
        %v4793 = vand.u32 %v4791, 31
        %v4794 = vsub.s32 32, %v4793
        %v4795 = vshrl.u32 683565275, %v4794
        %v4796 = vshll.u32 683565275, %v4793
        %v4797 = vshrl.u32 2475754826, %v4794
        %v4798 = vor.u32 %v4796, %v4797
        %v4799 = vshll.u32 2475754826, %v4793
        %v4800 = vshrl.u32 2131351028, %v4794
        %v4801 = vor.u32 %v4799, %v4800
        %v4802 = vshll.u32 2131351028, %v4793
        %v4803 = vshrl.u32 2102212464, %v4794
        %v4804 = vor.u32 %v4802, %v4803
        %v4805 = vshll.u32 2102212464, %v4793
        %v4806 = vshrl.u32 920167782, %v4794
        %v4807 = vor.u32 %v4805, %v4806
        %v4808 = vshll.u32 920167782, %v4793
        %v4809 = vshrl.u32 1326507024, %v4794
        %v4810 = vor.u32 %v4808, %v4809
        %vm4811 = vcmp.lt.s32.totalorder %v4792, 1
        %vm4812 = vcmp.lt.s32.totalorder %v4792, 2
        %vm4813 = vcmp.lt.s32.totalorder %v4792, 3
        %vm4814 = vcmp.lt.s32.totalorder %v4792, 4
        %v4815 = vsel %vm4811, %v4795, %v4798
        %v4816 = vsel %vm4814, %v4804, 2102212464
        %v4817 = vsel %vm4813, %v4801, %v4816
        %v4818 = vsel %vm4812, %v4815, %v4817
        %v4819 = vsel %vm4811, %v4798, %v4801
        %v4820 = vsel %vm4814, %v4807, 920167782
        %v4821 = vsel %vm4813, %v4804, %v4820
        %v4822 = vsel %vm4812, %v4819, %v4821
        %v4823 = vsel %vm4811, %v4801, %v4804
        %v4824 = vsel %vm4814, %v4810, 1326507024
        %v4825 = vsel %vm4813, %v4807, %v4824
        %v4826 = vsel %vm4812, %v4823, %v4825
        %v4827 = vshll.u32 %v4787, 8
        %v4828 = vmul.u32.u64.compose %v4827, %v4826
        %v4829 = vextract.low.u32 %v4828
        %v4830 = vextract.high.u32 %v4828
        %v4831 = vmul.u32.u64.compose %v4827, %v4822
        %v4832 = vextract.low.u32 %v4831
        %v4833 = vextract.high.u32 %v4831
        %v4834 = vmul.u32 %v4827, %v4818
        %v4835 = vadd.s32 %v4830, %v4832
        %vm4836 = vc.u32 %v4830, %v4832
        %v4837 = vadd.s32 %v4833, 1
        %v4838 = vsel %vm4836, %v4837, %v4833
        %v4839 = vadd.s32 %v4834, %v4838
        %v4840 = vadd.s32 %v4839, 536870912
        %v4841 = vshrl.u32 %v4840, 30
        %v4842 = vshll.u32 %v4841, 30
        %v4843 = vsub.s32 %v4839, %v4842
        %vm4844 = vcmp.lt.s32.totalorder %v4843, 0
        %v4845 = vsub.s32 0, %v4843
        %v4846 = vsel %vm4844, %v4845, %v4843
        %v4847 = vclz %v4846
        %v4848 = vsub.s32 %v4847, 2
        %vm4849 = vcmp.gt.s32.totalorder 0, %v4848
        %v4850 = vsel %vm4849, 0, %v4848
        %v4851 = vsub.s32 32, %v4850
        %v4852 = vshll.u32 %v4843, %v4850
        %v4853 = vshrl.u32 %v4835, %v4851
        %v4854 = vor.u32 %v4852, %v4853
        %v4855 = vsub.s32 4294967266, %v4850
        %v4856 = vadd.s32 %v4855, 127
        %v4857 = vshll.u32 %v4856, 23
        %v4858 = vor.u32 4788187, %v4857
        %v4859 = vand.u32 2147483647, %v4858
        %v4861 = vcvt.s32.f32 %v4854
        %v4862 = vmul.f32 %v4861, %v4859
        %v4863 = vxor.u32 %v4862, 2147483648
        %v4864 = vsel %vm4781, %v4863, %v4862
        %v4865 = vsub.s32 4, %v4841
        %v4866 = vsel %vm4781, %v4865, %v4841
        %v4867 = vsel %vm4780, %v4139, %v4864
        %v4868 = vsel %vm4780, 0, %v4866
        %v4869 = vcosq.f32.pop %v4867
        %v4870 = vsinq.f32.pop %v4867
        %vm4871 = vweird.f32 %v4139
        %v4872 = vadd.s32 %v4868, 3
        %v4873 = vand.u32 %v4872, 3
        %vm4874 = vcmp.lt.s32.totalorder %v4873, 2
        %vm4875 = vcmp.eq.s32.totalorder %v4873, 0
        %v4876 = vxor.u32 %v4870, 2147483648
        %v4877 = vsel %vm4875, %v4869, %v4876
        %vm4878 = vcmp.eq.s32.totalorder %v4873, 2
        %v4879 = vxor.u32 %v4869, 2147483648
        %v4880 = vsel %vm4878, %v4879, %v4870
        %v4881 = vsel %vm4874, %v4877, %v4880
        %v4882 = vsel %vm4871, nan, %v4881
        %v4883 = vand.u32 2147483647, %v4141
        %vm4884 = vcmp.le.f32.partialorder %v4883, 0.7853982
        %vm4885 = vcmp.lt.s32.totalorder %v4141, 0
        %v4886 = vand.u32 %v4141, 2139095040
        %v4887 = vshrl.u32 %v4886, 23
        %v4888 = vsub.s32 %v4887, 127
        %v4889 = vand.u32 2147483647, %v4141
        %v4890 = vand.u32 %v4889, 8388607
        %v4891 = vor.u32 %v4890, 8388608
        %v4892 = vsub.s32 0, %v4891
        %v4893 = vadd.s32 %v4888, 1
        %vm4894 = vcmp.gt.s32.totalorder %v4893, 0
        %v4895 = vsel %vm4894, %v4893, 0
        %v4896 = vshrl.u32 %v4895, 5
        %v4897 = vand.u32 %v4895, 31
        %v4898 = vsub.s32 32, %v4897
        %v4899 = vshrl.u32 683565275, %v4898
        %v4900 = vshll.u32 683565275, %v4897
        %v4901 = vshrl.u32 2475754826, %v4898
        %v4902 = vor.u32 %v4900, %v4901
        %v4903 = vshll.u32 2475754826, %v4897
        %v4904 = vshrl.u32 2131351028, %v4898
        %v4905 = vor.u32 %v4903, %v4904
        %v4906 = vshll.u32 2131351028, %v4897
        %v4907 = vshrl.u32 2102212464, %v4898
        %v4908 = vor.u32 %v4906, %v4907
        %v4909 = vshll.u32 2102212464, %v4897
        %v4910 = vshrl.u32 920167782, %v4898
        %v4911 = vor.u32 %v4909, %v4910
        %v4912 = vshll.u32 920167782, %v4897
        %v4913 = vshrl.u32 1326507024, %v4898
        %v4914 = vor.u32 %v4912, %v4913
        %vm4915 = vcmp.lt.s32.totalorder %v4896, 1
        %vm4916 = vcmp.lt.s32.totalorder %v4896, 2
        %vm4917 = vcmp.lt.s32.totalorder %v4896, 3
        %vm4918 = vcmp.lt.s32.totalorder %v4896, 4
        %v4919 = vsel %vm4915, %v4899, %v4902
        %v4920 = vsel %vm4918, %v4908, 2102212464
        %v4921 = vsel %vm4917, %v4905, %v4920
        %v4922 = vsel %vm4916, %v4919, %v4921
        %v4923 = vsel %vm4915, %v4902, %v4905
        %v4924 = vsel %vm4918, %v4911, 920167782
        %v4925 = vsel %vm4917, %v4908, %v4924
        %v4926 = vsel %vm4916, %v4923, %v4925
        %v4927 = vsel %vm4915, %v4905, %v4908
        %v4928 = vsel %vm4918, %v4914, 1326507024
        %v4929 = vsel %vm4917, %v4911, %v4928
        %v4930 = vsel %vm4916, %v4927, %v4929
        %v4931 = vshll.u32 %v4891, 8
        %v4932 = vmul.u32.u64.compose %v4931, %v4930
        %v4933 = vextract.low.u32 %v4932
        %v4934 = vextract.high.u32 %v4932
        %v4935 = vmul.u32.u64.compose %v4931, %v4926
        %v4936 = vextract.low.u32 %v4935
        %v4937 = vextract.high.u32 %v4935
        %v4938 = vmul.u32 %v4931, %v4922
        %v4939 = vadd.s32 %v4934, %v4936
        %vm4940 = vc.u32 %v4934, %v4936
        %v4941 = vadd.s32 %v4937, 1
        %v4942 = vsel %vm4940, %v4941, %v4937
        %v4943 = vadd.s32 %v4938, %v4942
        %v4944 = vadd.s32 %v4943, 536870912
        %v4945 = vshrl.u32 %v4944, 30
        %v4946 = vshll.u32 %v4945, 30
        %v4947 = vsub.s32 %v4943, %v4946
        %vm4948 = vcmp.lt.s32.totalorder %v4947, 0
        %v4949 = vsub.s32 0, %v4947
        %v4950 = vsel %vm4948, %v4949, %v4947
        %v4951 = vclz %v4950
        %v4952 = vsub.s32 %v4951, 2
        %vm4953 = vcmp.gt.s32.totalorder 0, %v4952
        %v4954 = vsel %vm4953, 0, %v4952
        %v4955 = vsub.s32 32, %v4954
        %v4956 = vshll.u32 %v4947, %v4954
        %v4957 = vshrl.u32 %v4939, %v4955
        %v4958 = vor.u32 %v4956, %v4957
        %v4959 = vsub.s32 4294967266, %v4954
        %v4960 = vadd.s32 %v4959, 127
        %v4961 = vshll.u32 %v4960, 23
        %v4962 = vor.u32 4788187, %v4961
        %v4963 = vand.u32 2147483647, %v4962
        %v4965 = vcvt.s32.f32 %v4958
        %v4966 = vmul.f32 %v4965, %v4963
        %v4967 = vxor.u32 %v4966, 2147483648
        %v4968 = vsel %vm4885, %v4967, %v4966
        %v4969 = vsub.s32 4, %v4945
        %v4970 = vsel %vm4885, %v4969, %v4945
        %v4971 = vsel %vm4884, %v4141, %v4968
        %v4972 = vsel %vm4884, 0, %v4970
        %v4973 = vcosq.f32.pop %v4971
        %v4974 = vsinq.f32.pop %v4971
        %vm4975 = vweird.f32 %v4141
        %v4976 = vadd.s32 %v4972, 3
        %v4977 = vand.u32 %v4976, 3
        %vm4978 = vcmp.lt.s32.totalorder %v4977, 2
        %vm4979 = vcmp.eq.s32.totalorder %v4977, 0
        %v4980 = vxor.u32 %v4974, 2147483648
        %v4981 = vsel %vm4979, %v4973, %v4980
        %vm4982 = vcmp.eq.s32.totalorder %v4977, 2
        %v4983 = vxor.u32 %v4973, 2147483648
        %v4984 = vsel %vm4982, %v4983, %v4974
        %v4985 = vsel %vm4978, %v4981, %v4984
        %v4986 = vsel %vm4975, nan, %v4985
        %v4987 = vand.u32 2147483647, %v4056
        %vm4988 = vcmp.le.f32.partialorder %v4987, 0.7853982
        %vm4989 = vcmp.lt.s32.totalorder %v4056, 0
        %v4990 = vand.u32 %v4056, 2139095040
        %v4991 = vshrl.u32 %v4990, 23
        %v4992 = vsub.s32 %v4991, 127
        %v4993 = vand.u32 2147483647, %v4056
        %v4994 = vand.u32 %v4993, 8388607
        %v4995 = vor.u32 %v4994, 8388608
        %v4996 = vsub.s32 0, %v4995
        %v4997 = vadd.s32 %v4992, 1
        %vm4998 = vcmp.gt.s32.totalorder %v4997, 0
        %v4999 = vsel %vm4998, %v4997, 0
        %v5000 = vshrl.u32 %v4999, 5
        %v5001 = vand.u32 %v4999, 31
        %v5002 = vsub.s32 32, %v5001
        %v5003 = vshrl.u32 683565275, %v5002
        %v5004 = vshll.u32 683565275, %v5001
        %v5005 = vshrl.u32 2475754826, %v5002
        %v5006 = vor.u32 %v5004, %v5005
        %v5007 = vshll.u32 2475754826, %v5001
        %v5008 = vshrl.u32 2131351028, %v5002
        %v5009 = vor.u32 %v5007, %v5008
        %v5010 = vshll.u32 2131351028, %v5001
        %v5011 = vshrl.u32 2102212464, %v5002
        %v5012 = vor.u32 %v5010, %v5011
        %v5013 = vshll.u32 2102212464, %v5001
        %v5014 = vshrl.u32 920167782, %v5002
        %v5015 = vor.u32 %v5013, %v5014
        %v5016 = vshll.u32 920167782, %v5001
        %v5017 = vshrl.u32 1326507024, %v5002
        %v5018 = vor.u32 %v5016, %v5017
        %vm5019 = vcmp.lt.s32.totalorder %v5000, 1
        %vm5020 = vcmp.lt.s32.totalorder %v5000, 2
        %vm5021 = vcmp.lt.s32.totalorder %v5000, 3
        %vm5022 = vcmp.lt.s32.totalorder %v5000, 4
        %v5023 = vsel %vm5019, %v5003, %v5006
        %v5024 = vsel %vm5022, %v5012, 2102212464
        %v5025 = vsel %vm5021, %v5009, %v5024
        %v5026 = vsel %vm5020, %v5023, %v5025
        %v5027 = vsel %vm5019, %v5006, %v5009
        %v5028 = vsel %vm5022, %v5015, 920167782
        %v5029 = vsel %vm5021, %v5012, %v5028
        %v5030 = vsel %vm5020, %v5027, %v5029
        %v5031 = vsel %vm5019, %v5009, %v5012
        %v5032 = vsel %vm5022, %v5018, 1326507024
        %v5033 = vsel %vm5021, %v5015, %v5032
        %v5034 = vsel %vm5020, %v5031, %v5033
        %v5035 = vshll.u32 %v4995, 8
        %v5036 = vmul.u32.u64.compose %v5035, %v5034
        %v5037 = vextract.low.u32 %v5036
        %v5038 = vextract.high.u32 %v5036
        %v5039 = vmul.u32.u64.compose %v5035, %v5030
        %v5040 = vextract.low.u32 %v5039
        %v5041 = vextract.high.u32 %v5039
        %v5042 = vmul.u32 %v5035, %v5026
        %v5043 = vadd.s32 %v5038, %v5040
        %vm5044 = vc.u32 %v5038, %v5040
        %v5045 = vadd.s32 %v5041, 1
        %v5046 = vsel %vm5044, %v5045, %v5041
        %v5047 = vadd.s32 %v5042, %v5046
        %v5048 = vadd.s32 %v5047, 536870912
        %v5049 = vshrl.u32 %v5048, 30
        %v5050 = vshll.u32 %v5049, 30
        %v5051 = vsub.s32 %v5047, %v5050
        %vm5052 = vcmp.lt.s32.totalorder %v5051, 0
        %v5053 = vsub.s32 0, %v5051
        %v5054 = vsel %vm5052, %v5053, %v5051
        %v5055 = vclz %v5054
        %v5056 = vsub.s32 %v5055, 2
        %vm5057 = vcmp.gt.s32.totalorder 0, %v5056
        %v5058 = vsel %vm5057, 0, %v5056
        %v5059 = vsub.s32 32, %v5058
        %v5060 = vshll.u32 %v5051, %v5058
        %v5061 = vshrl.u32 %v5043, %v5059
        %v5062 = vor.u32 %v5060, %v5061
        %v5063 = vsub.s32 4294967266, %v5058
        %v5064 = vadd.s32 %v5063, 127
        %v5065 = vshll.u32 %v5064, 23
        %v5066 = vor.u32 4788187, %v5065
        %v5067 = vand.u32 2147483647, %v5066
        %v5069 = vcvt.s32.f32 %v5062
        %v5070 = vmul.f32 %v5069, %v5067
        %v5071 = vxor.u32 %v5070, 2147483648
        %v5072 = vsel %vm4989, %v5071, %v5070
        %v5073 = vsub.s32 4, %v5049
        %v5074 = vsel %vm4989, %v5073, %v5049
        %v5075 = vsel %vm4988, %v4056, %v5072
        %v5076 = vsel %vm4988, 0, %v5074
        %v5077 = vcosq.f32.pop %v5075
        %v5078 = vsinq.f32.pop %v5075
        %vm5079 = vweird.f32 %v4056
        %v5080 = vadd.s32 %v5076, 3
        %v5081 = vand.u32 %v5080, 3
        %vm5082 = vcmp.lt.s32.totalorder %v5081, 2
        %vm5083 = vcmp.eq.s32.totalorder %v5081, 0
        %v5084 = vxor.u32 %v5078, 2147483648
        %v5085 = vsel %vm5083, %v5077, %v5084
        %vm5086 = vcmp.eq.s32.totalorder %v5081, 2
        %v5087 = vxor.u32 %v5077, 2147483648
        %v5088 = vsel %vm5086, %v5087, %v5078
        %v5089 = vsel %vm5082, %v5085, %v5088
        %v5090 = vsel %vm5079, nan, %v5089
        %v5091 = vand.u32 2147483647, %v4058
        %vm5092 = vcmp.le.f32.partialorder %v5091, 0.7853982
        %vm5093 = vcmp.lt.s32.totalorder %v4058, 0
        %v5094 = vand.u32 %v4058, 2139095040
        %v5095 = vshrl.u32 %v5094, 23
        %v5096 = vsub.s32 %v5095, 127
        %v5097 = vand.u32 2147483647, %v4058
        %v5098 = vand.u32 %v5097, 8388607
        %v5099 = vor.u32 %v5098, 8388608
        %v5100 = vsub.s32 0, %v5099
        %v5101 = vadd.s32 %v5096, 1
        %vm5102 = vcmp.gt.s32.totalorder %v5101, 0
        %v5103 = vsel %vm5102, %v5101, 0
        %v5104 = vshrl.u32 %v5103, 5
        %v5105 = vand.u32 %v5103, 31
        %v5106 = vsub.s32 32, %v5105
        %v5107 = vshrl.u32 683565275, %v5106
        %v5108 = vshll.u32 683565275, %v5105
        %v5109 = vshrl.u32 2475754826, %v5106
        %v5110 = vor.u32 %v5108, %v5109
        %v5111 = vshll.u32 2475754826, %v5105
        %v5112 = vshrl.u32 2131351028, %v5106
        %v5113 = vor.u32 %v5111, %v5112
        %v5114 = vshll.u32 2131351028, %v5105
        %v5115 = vshrl.u32 2102212464, %v5106
        %v5116 = vor.u32 %v5114, %v5115
        %v5117 = vshll.u32 2102212464, %v5105
        %v5118 = vshrl.u32 920167782, %v5106
        %v5119 = vor.u32 %v5117, %v5118
        %v5120 = vshll.u32 920167782, %v5105
        %v5121 = vshrl.u32 1326507024, %v5106
        %v5122 = vor.u32 %v5120, %v5121
        %vm5123 = vcmp.lt.s32.totalorder %v5104, 1
        %vm5124 = vcmp.lt.s32.totalorder %v5104, 2
        %vm5125 = vcmp.lt.s32.totalorder %v5104, 3
        %vm5126 = vcmp.lt.s32.totalorder %v5104, 4
        %v5127 = vsel %vm5123, %v5107, %v5110
        %v5128 = vsel %vm5126, %v5116, 2102212464
        %v5129 = vsel %vm5125, %v5113, %v5128
        %v5130 = vsel %vm5124, %v5127, %v5129
        %v5131 = vsel %vm5123, %v5110, %v5113
        %v5132 = vsel %vm5126, %v5119, 920167782
        %v5133 = vsel %vm5125, %v5116, %v5132
        %v5134 = vsel %vm5124, %v5131, %v5133
        %v5135 = vsel %vm5123, %v5113, %v5116
        %v5136 = vsel %vm5126, %v5122, 1326507024
        %v5137 = vsel %vm5125, %v5119, %v5136
        %v5138 = vsel %vm5124, %v5135, %v5137
        %v5139 = vshll.u32 %v5099, 8
        %v5140 = vmul.u32.u64.compose %v5139, %v5138
        %v5141 = vextract.low.u32 %v5140
        %v5142 = vextract.high.u32 %v5140
        %v5143 = vmul.u32.u64.compose %v5139, %v5134
        %v5144 = vextract.low.u32 %v5143
        %v5145 = vextract.high.u32 %v5143
        %v5146 = vmul.u32 %v5139, %v5130
        %v5147 = vadd.s32 %v5142, %v5144
        %vm5148 = vc.u32 %v5142, %v5144
        %v5149 = vadd.s32 %v5145, 1
        %v5150 = vsel %vm5148, %v5149, %v5145
        %v5151 = vadd.s32 %v5146, %v5150
        %v5152 = vadd.s32 %v5151, 536870912
        %v5153 = vshrl.u32 %v5152, 30
        %v5154 = vshll.u32 %v5153, 30
        %v5155 = vsub.s32 %v5151, %v5154
        %vm5156 = vcmp.lt.s32.totalorder %v5155, 0
        %v5157 = vsub.s32 0, %v5155
        %v5158 = vsel %vm5156, %v5157, %v5155
        %v5159 = vclz %v5158
        %v5160 = vsub.s32 %v5159, 2
        %vm5161 = vcmp.gt.s32.totalorder 0, %v5160
        %v5162 = vsel %vm5161, 0, %v5160
        %v5163 = vsub.s32 32, %v5162
        %v5164 = vshll.u32 %v5155, %v5162
        %v5165 = vshrl.u32 %v5147, %v5163
        %v5166 = vor.u32 %v5164, %v5165
        %v5167 = vsub.s32 4294967266, %v5162
        %v5168 = vadd.s32 %v5167, 127
        %v5169 = vshll.u32 %v5168, 23
        %v5170 = vor.u32 4788187, %v5169
        %v5171 = vand.u32 2147483647, %v5170
        %v5173 = vcvt.s32.f32 %v5166
        %v5174 = vmul.f32 %v5173, %v5171
        %v5175 = vxor.u32 %v5174, 2147483648
        %v5176 = vsel %vm5093, %v5175, %v5174
        %v5177 = vsub.s32 4, %v5153
        %v5178 = vsel %vm5093, %v5177, %v5153
        %v5179 = vsel %vm5092, %v4058, %v5176
        %v5180 = vsel %vm5092, 0, %v5178
        %v5181 = vcosq.f32.pop %v5179
        %v5182 = vsinq.f32.pop %v5179
        %vm5183 = vweird.f32 %v4058
        %v5184 = vadd.s32 %v5180, 3
        %v5185 = vand.u32 %v5184, 3
        %vm5186 = vcmp.lt.s32.totalorder %v5185, 2
        %vm5187 = vcmp.eq.s32.totalorder %v5185, 0
        %v5188 = vxor.u32 %v5182, 2147483648
        %v5189 = vsel %vm5187, %v5181, %v5188
        %vm5190 = vcmp.eq.s32.totalorder %v5185, 2
        %v5191 = vxor.u32 %v5181, 2147483648
        %v5192 = vsel %vm5190, %v5191, %v5182
        %v5193 = vsel %vm5186, %v5189, %v5192
        %v5194 = vsel %vm5183, nan, %v5193
        %v5195 = vand.u32 2147483647, %v4145
        %vm5196 = vcmp.le.f32.partialorder %v5195, 0.7853982
        %vm5197 = vcmp.lt.s32.totalorder %v4145, 0
        %v5198 = vand.u32 %v4145, 2139095040
        %v5199 = vshrl.u32 %v5198, 23
        %v5200 = vsub.s32 %v5199, 127
        %v5201 = vand.u32 2147483647, %v4145
        %v5202 = vand.u32 %v5201, 8388607
        %v5203 = vor.u32 %v5202, 8388608
        %v5204 = vsub.s32 0, %v5203
        %v5205 = vadd.s32 %v5200, 1
        %vm5206 = vcmp.gt.s32.totalorder %v5205, 0
        %v5207 = vsel %vm5206, %v5205, 0
        %v5208 = vshrl.u32 %v5207, 5
        %v5209 = vand.u32 %v5207, 31
        %v5210 = vsub.s32 32, %v5209
        %v5211 = vshrl.u32 683565275, %v5210
        %v5212 = vshll.u32 683565275, %v5209
        %v5213 = vshrl.u32 2475754826, %v5210
        %v5214 = vor.u32 %v5212, %v5213
        %v5215 = vshll.u32 2475754826, %v5209
        %v5216 = vshrl.u32 2131351028, %v5210
        %v5217 = vor.u32 %v5215, %v5216
        %v5218 = vshll.u32 2131351028, %v5209
        %v5219 = vshrl.u32 2102212464, %v5210
        %v5220 = vor.u32 %v5218, %v5219
        %v5221 = vshll.u32 2102212464, %v5209
        %v5222 = vshrl.u32 920167782, %v5210
        %v5223 = vor.u32 %v5221, %v5222
        %v5224 = vshll.u32 920167782, %v5209
        %v5225 = vshrl.u32 1326507024, %v5210
        %v5226 = vor.u32 %v5224, %v5225
        %vm5227 = vcmp.lt.s32.totalorder %v5208, 1
        %vm5228 = vcmp.lt.s32.totalorder %v5208, 2
        %vm5229 = vcmp.lt.s32.totalorder %v5208, 3
        %vm5230 = vcmp.lt.s32.totalorder %v5208, 4
        %v5231 = vsel %vm5227, %v5211, %v5214
        %v5232 = vsel %vm5230, %v5220, 2102212464
        %v5233 = vsel %vm5229, %v5217, %v5232
        %v5234 = vsel %vm5228, %v5231, %v5233
        %v5235 = vsel %vm5227, %v5214, %v5217
        %v5236 = vsel %vm5230, %v5223, 920167782
        %v5237 = vsel %vm5229, %v5220, %v5236
        %v5238 = vsel %vm5228, %v5235, %v5237
        %v5239 = vsel %vm5227, %v5217, %v5220
        %v5240 = vsel %vm5230, %v5226, 1326507024
        %v5241 = vsel %vm5229, %v5223, %v5240
        %v5242 = vsel %vm5228, %v5239, %v5241
        %v5243 = vshll.u32 %v5203, 8
        %v5244 = vmul.u32.u64.compose %v5243, %v5242
        %v5245 = vextract.low.u32 %v5244
        %v5246 = vextract.high.u32 %v5244
        %v5247 = vmul.u32.u64.compose %v5243, %v5238
        %v5248 = vextract.low.u32 %v5247
        %v5249 = vextract.high.u32 %v5247
        %v5250 = vmul.u32 %v5243, %v5234
        %v5251 = vadd.s32 %v5246, %v5248
        %vm5252 = vc.u32 %v5246, %v5248
        %v5253 = vadd.s32 %v5249, 1
        %v5254 = vsel %vm5252, %v5253, %v5249
        %v5255 = vadd.s32 %v5250, %v5254
        %v5256 = vadd.s32 %v5255, 536870912
        %v5257 = vshrl.u32 %v5256, 30
        %v5258 = vshll.u32 %v5257, 30
        %v5259 = vsub.s32 %v5255, %v5258
        %vm5260 = vcmp.lt.s32.totalorder %v5259, 0
        %v5261 = vsub.s32 0, %v5259
        %v5262 = vsel %vm5260, %v5261, %v5259
        %v5263 = vclz %v5262
        %v5264 = vsub.s32 %v5263, 2
        %vm5265 = vcmp.gt.s32.totalorder 0, %v5264
        %v5266 = vsel %vm5265, 0, %v5264
        %v5267 = vsub.s32 32, %v5266
        %v5268 = vshll.u32 %v5259, %v5266
        %v5269 = vshrl.u32 %v5251, %v5267
        %v5270 = vor.u32 %v5268, %v5269
        %v5271 = vsub.s32 4294967266, %v5266
        %v5272 = vadd.s32 %v5271, 127
        %v5273 = vshll.u32 %v5272, 23
        %v5274 = vor.u32 4788187, %v5273
        %v5275 = vand.u32 2147483647, %v5274
        %v5277 = vcvt.s32.f32 %v5270
        %v5278 = vmul.f32 %v5277, %v5275
        %v5279 = vxor.u32 %v5278, 2147483648
        %v5280 = vsel %vm5197, %v5279, %v5278
        %v5281 = vsub.s32 4, %v5257
        %v5282 = vsel %vm5197, %v5281, %v5257
        %v5283 = vsel %vm5196, %v4145, %v5280
        %v5284 = vsel %vm5196, 0, %v5282
        %v5285 = vcosq.f32.pop %v5283
        %v5286 = vsinq.f32.pop %v5283
        %vm5287 = vweird.f32 %v4145
        %v5288 = vadd.s32 %v5284, 3
        %v5289 = vand.u32 %v5288, 3
        %vm5290 = vcmp.lt.s32.totalorder %v5289, 2
        %vm5291 = vcmp.eq.s32.totalorder %v5289, 0
        %v5292 = vxor.u32 %v5286, 2147483648
        %v5293 = vsel %vm5291, %v5285, %v5292
        %vm5294 = vcmp.eq.s32.totalorder %v5289, 2
        %v5295 = vxor.u32 %v5285, 2147483648
        %v5296 = vsel %vm5294, %v5295, %v5286
        %v5297 = vsel %vm5290, %v5293, %v5296
        %v5298 = vsel %vm5287, nan, %v5297
        %v5299 = vand.u32 2147483647, %v4147
        %vm5300 = vcmp.le.f32.partialorder %v5299, 0.7853982
        %vm5301 = vcmp.lt.s32.totalorder %v4147, 0
        %v5302 = vand.u32 %v4147, 2139095040
        %v5303 = vshrl.u32 %v5302, 23
        %v5304 = vsub.s32 %v5303, 127
        %v5305 = vand.u32 2147483647, %v4147
        %v5306 = vand.u32 %v5305, 8388607
        %v5307 = vor.u32 %v5306, 8388608
        %v5308 = vsub.s32 0, %v5307
        %v5309 = vadd.s32 %v5304, 1
        %vm5310 = vcmp.gt.s32.totalorder %v5309, 0
        %v5311 = vsel %vm5310, %v5309, 0
        %v5312 = vshrl.u32 %v5311, 5
        %v5313 = vand.u32 %v5311, 31
        %v5314 = vsub.s32 32, %v5313
        %v5315 = vshrl.u32 683565275, %v5314
        %v5316 = vshll.u32 683565275, %v5313
        %v5317 = vshrl.u32 2475754826, %v5314
        %v5318 = vor.u32 %v5316, %v5317
        %v5319 = vshll.u32 2475754826, %v5313
        %v5320 = vshrl.u32 2131351028, %v5314
        %v5321 = vor.u32 %v5319, %v5320
        %v5322 = vshll.u32 2131351028, %v5313
        %v5323 = vshrl.u32 2102212464, %v5314
        %v5324 = vor.u32 %v5322, %v5323
        %v5325 = vshll.u32 2102212464, %v5313
        %v5326 = vshrl.u32 920167782, %v5314
        %v5327 = vor.u32 %v5325, %v5326
        %v5328 = vshll.u32 920167782, %v5313
        %v5329 = vshrl.u32 1326507024, %v5314
        %v5330 = vor.u32 %v5328, %v5329
        %vm5331 = vcmp.lt.s32.totalorder %v5312, 1
        %vm5332 = vcmp.lt.s32.totalorder %v5312, 2
        %vm5333 = vcmp.lt.s32.totalorder %v5312, 3
        %vm5334 = vcmp.lt.s32.totalorder %v5312, 4
        %v5335 = vsel %vm5331, %v5315, %v5318
        %v5336 = vsel %vm5334, %v5324, 2102212464
        %v5337 = vsel %vm5333, %v5321, %v5336
        %v5338 = vsel %vm5332, %v5335, %v5337
        %v5339 = vsel %vm5331, %v5318, %v5321
        %v5340 = vsel %vm5334, %v5327, 920167782
        %v5341 = vsel %vm5333, %v5324, %v5340
        %v5342 = vsel %vm5332, %v5339, %v5341
        %v5343 = vsel %vm5331, %v5321, %v5324
        %v5344 = vsel %vm5334, %v5330, 1326507024
        %v5345 = vsel %vm5333, %v5327, %v5344
        %v5346 = vsel %vm5332, %v5343, %v5345
        %v5347 = vshll.u32 %v5307, 8
        %v5348 = vmul.u32.u64.compose %v5347, %v5346
        %v5349 = vextract.low.u32 %v5348
        %v5350 = vextract.high.u32 %v5348
        %v5351 = vmul.u32.u64.compose %v5347, %v5342
        %v5352 = vextract.low.u32 %v5351
        %v5353 = vextract.high.u32 %v5351
        %v5354 = vmul.u32 %v5347, %v5338
        %v5355 = vadd.s32 %v5350, %v5352
        %vm5356 = vc.u32 %v5350, %v5352
        %v5357 = vadd.s32 %v5353, 1
        %v5358 = vsel %vm5356, %v5357, %v5353
        %v5359 = vadd.s32 %v5354, %v5358
        %v5360 = vadd.s32 %v5359, 536870912
        %v5361 = vshrl.u32 %v5360, 30
        %v5362 = vshll.u32 %v5361, 30
        %v5363 = vsub.s32 %v5359, %v5362
        %vm5364 = vcmp.lt.s32.totalorder %v5363, 0
        %v5365 = vsub.s32 0, %v5363
        %v5366 = vsel %vm5364, %v5365, %v5363
        %v5367 = vclz %v5366
        %v5368 = vsub.s32 %v5367, 2
        %vm5369 = vcmp.gt.s32.totalorder 0, %v5368
        %v5370 = vsel %vm5369, 0, %v5368
        %v5371 = vsub.s32 32, %v5370
        %v5372 = vshll.u32 %v5363, %v5370
        %v5373 = vshrl.u32 %v5355, %v5371
        %v5374 = vor.u32 %v5372, %v5373
        %v5375 = vsub.s32 4294967266, %v5370
        %v5376 = vadd.s32 %v5375, 127
        %v5377 = vshll.u32 %v5376, 23
        %v5378 = vor.u32 4788187, %v5377
        %v5379 = vand.u32 2147483647, %v5378
        %v5381 = vcvt.s32.f32 %v5374
        %v5382 = vmul.f32 %v5381, %v5379
        %v5383 = vxor.u32 %v5382, 2147483648
        %v5384 = vsel %vm5301, %v5383, %v5382
        %v5385 = vsub.s32 4, %v5361
        %v5386 = vsel %vm5301, %v5385, %v5361
        %v5387 = vsel %vm5300, %v4147, %v5384
        %v5388 = vsel %vm5300, 0, %v5386
        %v5389 = vcosq.f32.pop %v5387
        %v5390 = vsinq.f32.pop %v5387
        %vm5391 = vweird.f32 %v4147
        %v5392 = vadd.s32 %v5388, 3
        %v5393 = vand.u32 %v5392, 3
        %vm5394 = vcmp.lt.s32.totalorder %v5393, 2
        %vm5395 = vcmp.eq.s32.totalorder %v5393, 0
        %v5396 = vxor.u32 %v5390, 2147483648
        %v5397 = vsel %vm5395, %v5389, %v5396
        %vm5398 = vcmp.eq.s32.totalorder %v5393, 2
        %v5399 = vxor.u32 %v5389, 2147483648
        %v5400 = vsel %vm5398, %v5399, %v5390
        %v5401 = vsel %vm5394, %v5397, %v5400
        %v5402 = vsel %vm5391, nan, %v5401
        %v5403 = vand.u32 2147483647, %v4062
        %vm5404 = vcmp.le.f32.partialorder %v5403, 0.7853982
        %vm5405 = vcmp.lt.s32.totalorder %v4062, 0
        %v5406 = vand.u32 %v4062, 2139095040
        %v5407 = vshrl.u32 %v5406, 23
        %v5408 = vsub.s32 %v5407, 127
        %v5409 = vand.u32 2147483647, %v4062
        %v5410 = vand.u32 %v5409, 8388607
        %v5411 = vor.u32 %v5410, 8388608
        %v5412 = vsub.s32 0, %v5411
        %v5413 = vadd.s32 %v5408, 1
        %vm5414 = vcmp.gt.s32.totalorder %v5413, 0
        %v5415 = vsel %vm5414, %v5413, 0
        %v5416 = vshrl.u32 %v5415, 5
        %v5417 = vand.u32 %v5415, 31
        %v5418 = vsub.s32 32, %v5417
        %v5419 = vshrl.u32 683565275, %v5418
        %v5420 = vshll.u32 683565275, %v5417
        %v5421 = vshrl.u32 2475754826, %v5418
        %v5422 = vor.u32 %v5420, %v5421
        %v5423 = vshll.u32 2475754826, %v5417
        %v5424 = vshrl.u32 2131351028, %v5418
        %v5425 = vor.u32 %v5423, %v5424
        %v5426 = vshll.u32 2131351028, %v5417
        %v5427 = vshrl.u32 2102212464, %v5418
        %v5428 = vor.u32 %v5426, %v5427
        %v5429 = vshll.u32 2102212464, %v5417
        %v5430 = vshrl.u32 920167782, %v5418
        %v5431 = vor.u32 %v5429, %v5430
        %v5432 = vshll.u32 920167782, %v5417
        %v5433 = vshrl.u32 1326507024, %v5418
        %v5434 = vor.u32 %v5432, %v5433
        %vm5435 = vcmp.lt.s32.totalorder %v5416, 1
        %vm5436 = vcmp.lt.s32.totalorder %v5416, 2
        %vm5437 = vcmp.lt.s32.totalorder %v5416, 3
        %vm5438 = vcmp.lt.s32.totalorder %v5416, 4
        %v5439 = vsel %vm5435, %v5419, %v5422
        %v5440 = vsel %vm5438, %v5428, 2102212464
        %v5441 = vsel %vm5437, %v5425, %v5440
        %v5442 = vsel %vm5436, %v5439, %v5441
        %v5443 = vsel %vm5435, %v5422, %v5425
        %v5444 = vsel %vm5438, %v5431, 920167782
        %v5445 = vsel %vm5437, %v5428, %v5444
        %v5446 = vsel %vm5436, %v5443, %v5445
        %v5447 = vsel %vm5435, %v5425, %v5428
        %v5448 = vsel %vm5438, %v5434, 1326507024
        %v5449 = vsel %vm5437, %v5431, %v5448
        %v5450 = vsel %vm5436, %v5447, %v5449
        %v5451 = vshll.u32 %v5411, 8
        %v5452 = vmul.u32.u64.compose %v5451, %v5450
        %v5453 = vextract.low.u32 %v5452
        %v5454 = vextract.high.u32 %v5452
        %v5455 = vmul.u32.u64.compose %v5451, %v5446
        %v5456 = vextract.low.u32 %v5455
        %v5457 = vextract.high.u32 %v5455
        %v5458 = vmul.u32 %v5451, %v5442
        %v5459 = vadd.s32 %v5454, %v5456
        %vm5460 = vc.u32 %v5454, %v5456
        %v5461 = vadd.s32 %v5457, 1
        %v5462 = vsel %vm5460, %v5461, %v5457
        %v5463 = vadd.s32 %v5458, %v5462
        %v5464 = vadd.s32 %v5463, 536870912
        %v5465 = vshrl.u32 %v5464, 30
        %v5466 = vshll.u32 %v5465, 30
        %v5467 = vsub.s32 %v5463, %v5466
        %vm5468 = vcmp.lt.s32.totalorder %v5467, 0
        %v5469 = vsub.s32 0, %v5467
        %v5470 = vsel %vm5468, %v5469, %v5467
        %v5471 = vclz %v5470
        %v5472 = vsub.s32 %v5471, 2
        %vm5473 = vcmp.gt.s32.totalorder 0, %v5472
        %v5474 = vsel %vm5473, 0, %v5472
        %v5475 = vsub.s32 32, %v5474
        %v5476 = vshll.u32 %v5467, %v5474
        %v5477 = vshrl.u32 %v5459, %v5475
        %v5478 = vor.u32 %v5476, %v5477
        %v5479 = vsub.s32 4294967266, %v5474
        %v5480 = vadd.s32 %v5479, 127
        %v5481 = vshll.u32 %v5480, 23
        %v5482 = vor.u32 4788187, %v5481
        %v5483 = vand.u32 2147483647, %v5482
        %v5485 = vcvt.s32.f32 %v5478
        %v5486 = vmul.f32 %v5485, %v5483
        %v5487 = vxor.u32 %v5486, 2147483648
        %v5488 = vsel %vm5405, %v5487, %v5486
        %v5489 = vsub.s32 4, %v5465
        %v5490 = vsel %vm5405, %v5489, %v5465
        %v5491 = vsel %vm5404, %v4062, %v5488
        %v5492 = vsel %vm5404, 0, %v5490
        %v5493 = vcosq.f32.pop %v5491
        %v5494 = vsinq.f32.pop %v5491
        %vm5495 = vweird.f32 %v4062
        %v5496 = vadd.s32 %v5492, 3
        %v5497 = vand.u32 %v5496, 3
        %vm5498 = vcmp.lt.s32.totalorder %v5497, 2
        %vm5499 = vcmp.eq.s32.totalorder %v5497, 0
        %v5500 = vxor.u32 %v5494, 2147483648
        %v5501 = vsel %vm5499, %v5493, %v5500
        %vm5502 = vcmp.eq.s32.totalorder %v5497, 2
        %v5503 = vxor.u32 %v5493, 2147483648
        %v5504 = vsel %vm5502, %v5503, %v5494
        %v5505 = vsel %vm5498, %v5501, %v5504
        %v5506 = vsel %vm5495, nan, %v5505
        %v5507 = vand.u32 2147483647, %v4064
        %vm5508 = vcmp.le.f32.partialorder %v5507, 0.7853982
        %vm5509 = vcmp.lt.s32.totalorder %v4064, 0
        %v5510 = vand.u32 %v4064, 2139095040
        %v5511 = vshrl.u32 %v5510, 23
        %v5512 = vsub.s32 %v5511, 127
        %v5513 = vand.u32 2147483647, %v4064
        %v5514 = vand.u32 %v5513, 8388607
        %v5515 = vor.u32 %v5514, 8388608
        %v5516 = vsub.s32 0, %v5515
        %v5517 = vadd.s32 %v5512, 1
        %vm5518 = vcmp.gt.s32.totalorder %v5517, 0
        %v5519 = vsel %vm5518, %v5517, 0
        %v5520 = vshrl.u32 %v5519, 5
        %v5521 = vand.u32 %v5519, 31
        %v5522 = vsub.s32 32, %v5521
        %v5523 = vshrl.u32 683565275, %v5522
        %v5524 = vshll.u32 683565275, %v5521
        %v5525 = vshrl.u32 2475754826, %v5522
        %v5526 = vor.u32 %v5524, %v5525
        %v5527 = vshll.u32 2475754826, %v5521
        %v5528 = vshrl.u32 2131351028, %v5522
        %v5529 = vor.u32 %v5527, %v5528
        %v5530 = vshll.u32 2131351028, %v5521
        %v5531 = vshrl.u32 2102212464, %v5522
        %v5532 = vor.u32 %v5530, %v5531
        %v5533 = vshll.u32 2102212464, %v5521
        %v5534 = vshrl.u32 920167782, %v5522
        %v5535 = vor.u32 %v5533, %v5534
        %v5536 = vshll.u32 920167782, %v5521
        %v5537 = vshrl.u32 1326507024, %v5522
        %v5538 = vor.u32 %v5536, %v5537
        %vm5539 = vcmp.lt.s32.totalorder %v5520, 1
        %vm5540 = vcmp.lt.s32.totalorder %v5520, 2
        %vm5541 = vcmp.lt.s32.totalorder %v5520, 3
        %vm5542 = vcmp.lt.s32.totalorder %v5520, 4
        %v5543 = vsel %vm5539, %v5523, %v5526
        %v5544 = vsel %vm5542, %v5532, 2102212464
        %v5545 = vsel %vm5541, %v5529, %v5544
        %v5546 = vsel %vm5540, %v5543, %v5545
        %v5547 = vsel %vm5539, %v5526, %v5529
        %v5548 = vsel %vm5542, %v5535, 920167782
        %v5549 = vsel %vm5541, %v5532, %v5548
        %v5550 = vsel %vm5540, %v5547, %v5549
        %v5551 = vsel %vm5539, %v5529, %v5532
        %v5552 = vsel %vm5542, %v5538, 1326507024
        %v5553 = vsel %vm5541, %v5535, %v5552
        %v5554 = vsel %vm5540, %v5551, %v5553
        %v5555 = vshll.u32 %v5515, 8
        %v5556 = vmul.u32.u64.compose %v5555, %v5554
        %v5557 = vextract.low.u32 %v5556
        %v5558 = vextract.high.u32 %v5556
        %v5559 = vmul.u32.u64.compose %v5555, %v5550
        %v5560 = vextract.low.u32 %v5559
        %v5561 = vextract.high.u32 %v5559
        %v5562 = vmul.u32 %v5555, %v5546
        %v5563 = vadd.s32 %v5558, %v5560
        %vm5564 = vc.u32 %v5558, %v5560
        %v5565 = vadd.s32 %v5561, 1
        %v5566 = vsel %vm5564, %v5565, %v5561
        %v5567 = vadd.s32 %v5562, %v5566
        %v5568 = vadd.s32 %v5567, 536870912
        %v5569 = vshrl.u32 %v5568, 30
        %v5570 = vshll.u32 %v5569, 30
        %v5571 = vsub.s32 %v5567, %v5570
        %vm5572 = vcmp.lt.s32.totalorder %v5571, 0
        %v5573 = vsub.s32 0, %v5571
        %v5574 = vsel %vm5572, %v5573, %v5571
        %v5575 = vclz %v5574
        %v5576 = vsub.s32 %v5575, 2
        %vm5577 = vcmp.gt.s32.totalorder 0, %v5576
        %v5578 = vsel %vm5577, 0, %v5576
        %v5579 = vsub.s32 32, %v5578
        %v5580 = vshll.u32 %v5571, %v5578
        %v5581 = vshrl.u32 %v5563, %v5579
        %v5582 = vor.u32 %v5580, %v5581
        %v5583 = vsub.s32 4294967266, %v5578
        %v5584 = vadd.s32 %v5583, 127
        %v5585 = vshll.u32 %v5584, 23
        %v5586 = vor.u32 4788187, %v5585
        %v5587 = vand.u32 2147483647, %v5586
        %v5589 = vcvt.s32.f32 %v5582
        %v5590 = vmul.f32 %v5589, %v5587
        %v5591 = vxor.u32 %v5590, 2147483648
        %v5592 = vsel %vm5509, %v5591, %v5590
        %v5593 = vsub.s32 4, %v5569
        %v5594 = vsel %vm5509, %v5593, %v5569
        %v5595 = vsel %vm5508, %v4064, %v5592
        %v5596 = vsel %vm5508, 0, %v5594
        %v5597 = vcosq.f32.pop %v5595
        %v5598 = vsinq.f32.pop %v5595
        %vm5599 = vweird.f32 %v4064
        %v5600 = vadd.s32 %v5596, 3
        %v5601 = vand.u32 %v5600, 3
        %vm5602 = vcmp.lt.s32.totalorder %v5601, 2
        %vm5603 = vcmp.eq.s32.totalorder %v5601, 0
        %v5604 = vxor.u32 %v5598, 2147483648
        %v5605 = vsel %vm5603, %v5597, %v5604
        %vm5606 = vcmp.eq.s32.totalorder %v5601, 2
        %v5607 = vxor.u32 %v5597, 2147483648
        %v5608 = vsel %vm5606, %v5607, %v5598
        %v5609 = vsel %vm5602, %v5605, %v5608
        %v5610 = vsel %vm5599, nan, %v5609
        %v5611 = vand.u32 2147483647, %v4151
        %vm5612 = vcmp.le.f32.partialorder %v5611, 0.7853982
        %vm5613 = vcmp.lt.s32.totalorder %v4151, 0
        %v5614 = vand.u32 %v4151, 2139095040
        %v5615 = vshrl.u32 %v5614, 23
        %v5616 = vsub.s32 %v5615, 127
        %v5617 = vand.u32 2147483647, %v4151
        %v5618 = vand.u32 %v5617, 8388607
        %v5619 = vor.u32 %v5618, 8388608
        %v5620 = vsub.s32 0, %v5619
        %v5621 = vadd.s32 %v5616, 1
        %vm5622 = vcmp.gt.s32.totalorder %v5621, 0
        %v5623 = vsel %vm5622, %v5621, 0
        %v5624 = vshrl.u32 %v5623, 5
        %v5625 = vand.u32 %v5623, 31
        %v5626 = vsub.s32 32, %v5625
        %v5627 = vshrl.u32 683565275, %v5626
        %v5628 = vshll.u32 683565275, %v5625
        %v5629 = vshrl.u32 2475754826, %v5626
        %v5630 = vor.u32 %v5628, %v5629
        %v5631 = vshll.u32 2475754826, %v5625
        %v5632 = vshrl.u32 2131351028, %v5626
        %v5633 = vor.u32 %v5631, %v5632
        %v5634 = vshll.u32 2131351028, %v5625
        %v5635 = vshrl.u32 2102212464, %v5626
        %v5636 = vor.u32 %v5634, %v5635
        %v5637 = vshll.u32 2102212464, %v5625
        %v5638 = vshrl.u32 920167782, %v5626
        %v5639 = vor.u32 %v5637, %v5638
        %v5640 = vshll.u32 920167782, %v5625
        %v5641 = vshrl.u32 1326507024, %v5626
        %v5642 = vor.u32 %v5640, %v5641
        %vm5643 = vcmp.lt.s32.totalorder %v5624, 1
        %vm5644 = vcmp.lt.s32.totalorder %v5624, 2
        %vm5645 = vcmp.lt.s32.totalorder %v5624, 3
        %vm5646 = vcmp.lt.s32.totalorder %v5624, 4
        %v5647 = vsel %vm5643, %v5627, %v5630
        %v5648 = vsel %vm5646, %v5636, 2102212464
        %v5649 = vsel %vm5645, %v5633, %v5648
        %v5650 = vsel %vm5644, %v5647, %v5649
        %v5651 = vsel %vm5643, %v5630, %v5633
        %v5652 = vsel %vm5646, %v5639, 920167782
        %v5653 = vsel %vm5645, %v5636, %v5652
        %v5654 = vsel %vm5644, %v5651, %v5653
        %v5655 = vsel %vm5643, %v5633, %v5636
        %v5656 = vsel %vm5646, %v5642, 1326507024
        %v5657 = vsel %vm5645, %v5639, %v5656
        %v5658 = vsel %vm5644, %v5655, %v5657
        %v5659 = vshll.u32 %v5619, 8
        %v5660 = vmul.u32.u64.compose %v5659, %v5658
        %v5661 = vextract.low.u32 %v5660
        %v5662 = vextract.high.u32 %v5660
        %v5663 = vmul.u32.u64.compose %v5659, %v5654
        %v5664 = vextract.low.u32 %v5663
        %v5665 = vextract.high.u32 %v5663
        %v5666 = vmul.u32 %v5659, %v5650
        %v5667 = vadd.s32 %v5662, %v5664
        %vm5668 = vc.u32 %v5662, %v5664
        %v5669 = vadd.s32 %v5665, 1
        %v5670 = vsel %vm5668, %v5669, %v5665
        %v5671 = vadd.s32 %v5666, %v5670
        %v5672 = vadd.s32 %v5671, 536870912
        %v5673 = vshrl.u32 %v5672, 30
        %v5674 = vshll.u32 %v5673, 30
        %v5675 = vsub.s32 %v5671, %v5674
        %vm5676 = vcmp.lt.s32.totalorder %v5675, 0
        %v5677 = vsub.s32 0, %v5675
        %v5678 = vsel %vm5676, %v5677, %v5675
        %v5679 = vclz %v5678
        %v5680 = vsub.s32 %v5679, 2
        %vm5681 = vcmp.gt.s32.totalorder 0, %v5680
        %v5682 = vsel %vm5681, 0, %v5680
        %v5683 = vsub.s32 32, %v5682
        %v5684 = vshll.u32 %v5675, %v5682
        %v5685 = vshrl.u32 %v5667, %v5683
        %v5686 = vor.u32 %v5684, %v5685
        %v5687 = vsub.s32 4294967266, %v5682
        %v5688 = vadd.s32 %v5687, 127
        %v5689 = vshll.u32 %v5688, 23
        %v5690 = vor.u32 4788187, %v5689
        %v5691 = vand.u32 2147483647, %v5690
        %v5693 = vcvt.s32.f32 %v5686
        %v5694 = vmul.f32 %v5693, %v5691
        %v5695 = vxor.u32 %v5694, 2147483648
        %v5696 = vsel %vm5613, %v5695, %v5694
        %v5697 = vsub.s32 4, %v5673
        %v5698 = vsel %vm5613, %v5697, %v5673
        %v5699 = vsel %vm5612, %v4151, %v5696
        %v5700 = vsel %vm5612, 0, %v5698
        %v5701 = vcosq.f32.pop %v5699
        %v5702 = vsinq.f32.pop %v5699
        %vm5703 = vweird.f32 %v4151
        %v5704 = vadd.s32 %v5700, 3
        %v5705 = vand.u32 %v5704, 3
        %vm5706 = vcmp.lt.s32.totalorder %v5705, 2
        %vm5707 = vcmp.eq.s32.totalorder %v5705, 0
        %v5708 = vxor.u32 %v5702, 2147483648
        %v5709 = vsel %vm5707, %v5701, %v5708
        %vm5710 = vcmp.eq.s32.totalorder %v5705, 2
        %v5711 = vxor.u32 %v5701, 2147483648
        %v5712 = vsel %vm5710, %v5711, %v5702
        %v5713 = vsel %vm5706, %v5709, %v5712
        %v5714 = vsel %vm5703, nan, %v5713
        %v5715 = vand.u32 2147483647, %v4153
        %vm5716 = vcmp.le.f32.partialorder %v5715, 0.7853982
        %vm5717 = vcmp.lt.s32.totalorder %v4153, 0
        %v5718 = vand.u32 %v4153, 2139095040
        %v5719 = vshrl.u32 %v5718, 23
        %v5720 = vsub.s32 %v5719, 127
        %v5721 = vand.u32 2147483647, %v4153
        %v5722 = vand.u32 %v5721, 8388607
        %v5723 = vor.u32 %v5722, 8388608
        %v5724 = vsub.s32 0, %v5723
        %v5725 = vadd.s32 %v5720, 1
        %vm5726 = vcmp.gt.s32.totalorder %v5725, 0
        %v5727 = vsel %vm5726, %v5725, 0
        %v5728 = vshrl.u32 %v5727, 5
        %v5729 = vand.u32 %v5727, 31
        %v5730 = vsub.s32 32, %v5729
        %v5731 = vshrl.u32 683565275, %v5730
        %v5732 = vshll.u32 683565275, %v5729
        %v5733 = vshrl.u32 2475754826, %v5730
        %v5734 = vor.u32 %v5732, %v5733
        %v5735 = vshll.u32 2475754826, %v5729
        %v5736 = vshrl.u32 2131351028, %v5730
        %v5737 = vor.u32 %v5735, %v5736
        %v5738 = vshll.u32 2131351028, %v5729
        %v5739 = vshrl.u32 2102212464, %v5730
        %v5740 = vor.u32 %v5738, %v5739
        %v5741 = vshll.u32 2102212464, %v5729
        %v5742 = vshrl.u32 920167782, %v5730
        %v5743 = vor.u32 %v5741, %v5742
        %v5744 = vshll.u32 920167782, %v5729
        %v5745 = vshrl.u32 1326507024, %v5730
        %v5746 = vor.u32 %v5744, %v5745
        %vm5747 = vcmp.lt.s32.totalorder %v5728, 1
        %vm5748 = vcmp.lt.s32.totalorder %v5728, 2
        %vm5749 = vcmp.lt.s32.totalorder %v5728, 3
        %vm5750 = vcmp.lt.s32.totalorder %v5728, 4
        %v5751 = vsel %vm5747, %v5731, %v5734
        %v5752 = vsel %vm5750, %v5740, 2102212464
        %v5753 = vsel %vm5749, %v5737, %v5752
        %v5754 = vsel %vm5748, %v5751, %v5753
        %v5755 = vsel %vm5747, %v5734, %v5737
        %v5756 = vsel %vm5750, %v5743, 920167782
        %v5757 = vsel %vm5749, %v5740, %v5756
        %v5758 = vsel %vm5748, %v5755, %v5757
        %v5759 = vsel %vm5747, %v5737, %v5740
        %v5760 = vsel %vm5750, %v5746, 1326507024
        %v5761 = vsel %vm5749, %v5743, %v5760
        %v5762 = vsel %vm5748, %v5759, %v5761
        %v5763 = vshll.u32 %v5723, 8
        %v5764 = vmul.u32.u64.compose %v5763, %v5762
        %v5765 = vextract.low.u32 %v5764
        %v5766 = vextract.high.u32 %v5764
        %v5767 = vmul.u32.u64.compose %v5763, %v5758
        %v5768 = vextract.low.u32 %v5767
        %v5769 = vextract.high.u32 %v5767
        %v5770 = vmul.u32 %v5763, %v5754
        %v5771 = vadd.s32 %v5766, %v5768
        %vm5772 = vc.u32 %v5766, %v5768
        %v5773 = vadd.s32 %v5769, 1
        %v5774 = vsel %vm5772, %v5773, %v5769
        %v5775 = vadd.s32 %v5770, %v5774
        %v5776 = vadd.s32 %v5775, 536870912
        %v5777 = vshrl.u32 %v5776, 30
        %v5778 = vshll.u32 %v5777, 30
        %v5779 = vsub.s32 %v5775, %v5778
        %vm5780 = vcmp.lt.s32.totalorder %v5779, 0
        %v5781 = vsub.s32 0, %v5779
        %v5782 = vsel %vm5780, %v5781, %v5779
        %v5783 = vclz %v5782
        %v5784 = vsub.s32 %v5783, 2
        %vm5785 = vcmp.gt.s32.totalorder 0, %v5784
        %v5786 = vsel %vm5785, 0, %v5784
        %v5787 = vsub.s32 32, %v5786
        %v5788 = vshll.u32 %v5779, %v5786
        %v5789 = vshrl.u32 %v5771, %v5787
        %v5790 = vor.u32 %v5788, %v5789
        %v5791 = vsub.s32 4294967266, %v5786
        %v5792 = vadd.s32 %v5791, 127
        %v5793 = vshll.u32 %v5792, 23
        %v5794 = vor.u32 4788187, %v5793
        %v5795 = vand.u32 2147483647, %v5794
        %v5797 = vcvt.s32.f32 %v5790
        %v5798 = vmul.f32 %v5797, %v5795
        %v5799 = vxor.u32 %v5798, 2147483648
        %v5800 = vsel %vm5717, %v5799, %v5798
        %v5801 = vsub.s32 4, %v5777
        %v5802 = vsel %vm5717, %v5801, %v5777
        %v5803 = vsel %vm5716, %v4153, %v5800
        %v5804 = vsel %vm5716, 0, %v5802
        %v5805 = vcosq.f32.pop %v5803
        %v5806 = vsinq.f32.pop %v5803
        %vm5807 = vweird.f32 %v4153
        %v5808 = vadd.s32 %v5804, 3
        %v5809 = vand.u32 %v5808, 3
        %vm5810 = vcmp.lt.s32.totalorder %v5809, 2
        %vm5811 = vcmp.eq.s32.totalorder %v5809, 0
        %v5812 = vxor.u32 %v5806, 2147483648
        %v5813 = vsel %vm5811, %v5805, %v5812
        %vm5814 = vcmp.eq.s32.totalorder %v5809, 2
        %v5815 = vxor.u32 %v5805, 2147483648
        %v5816 = vsel %vm5814, %v5815, %v5806
        %v5817 = vsel %vm5810, %v5813, %v5816
        %v5818 = vsel %vm5807, nan, %v5817
        %5819 = vset.pattern.permute.xlu0 10
        %5820 = vperm.xlu0 %5819, %v207
        %v5821 = vpop.permute.xlu0 %5820
        %5823 = vset.pattern.permute.xlu0 10
        %5824 = vperm.xlu0 %5823, %v208
        %v5825 = vpop.permute.xlu0 %5824
        %5827 = vset.pattern.permute.xlu0 10
        %5828 = vperm.xlu0 %5827, %v209
        %v5829 = vpop.permute.xlu0 %5828
        %5831 = vset.pattern.permute.xlu0 10
        %5832 = vperm.xlu0 %5831, %v210
        %v5833 = vpop.permute.xlu0 %5832
        %v5835 = vmul.f32 %v5821, %v4258
        %v5836 = vmul.f32 %v5821, %v4362
        %v5837 = vmul.f32 %v5821, %v4466
        %v5838 = vmul.f32 %v5821, %v4570
        %v5839 = vmul.f32 %v5825, %v4674
        %v5840 = vmul.f32 %v5825, %v4778
        %v5841 = vmul.f32 %v5825, %v4882
        %v5842 = vmul.f32 %v5825, %v4986
        %v5843 = vmul.f32 %v5829, %v5090
        %v5844 = vmul.f32 %v5829, %v5194
        %v5845 = vmul.f32 %v5829, %v5298
        %v5846 = vmul.f32 %v5829, %v5402
        %v5847 = vmul.f32 %v5833, %v5506
        %v5848 = vmul.f32 %v5833, %v5610
        %v5849 = vmul.f32 %v5833, %v5714
        %v5850 = vmul.f32 %v5833, %v5818
        %v5851 = vadd.f32 %v5835, %v5839
        %v5852 = vadd.f32 %v5851, %v5843
        %v5853 = vadd.f32 %v5852, %v5847
        %v5854 = vrot.slane %v5853, 4
        %v5855 = vadd.f32 %v5853, %v5854
        %v5856 = vrot.slane %v5855, 2
        %v5857 = vadd.f32 %v5855, %v5856
        %v5858 = vrot.slane %v5857, 1
        %v5859 = vadd.f32 %v5857, %v5858
        %v5860 = vadd.f32 %v5836, %v5840
        %v5861 = vadd.f32 %v5860, %v5844
        %v5862 = vadd.f32 %v5861, %v5848
        %v5863 = vrot.slane %v5862, 4
        %v5864 = vadd.f32 %v5862, %v5863
        %v5865 = vrot.slane %v5864, 2
        %v5866 = vadd.f32 %v5864, %v5865
        %v5867 = vrot.slane %v5866, 1
        %v5868 = vadd.f32 %v5866, %v5867
        %v5869 = vadd.f32 %v5837, %v5841
        %v5870 = vadd.f32 %v5869, %v5845
        %v5871 = vadd.f32 %v5870, %v5849
        %v5872 = vrot.slane %v5871, 4
        %v5873 = vadd.f32 %v5871, %v5872
        %v5874 = vrot.slane %v5873, 2
        %v5875 = vadd.f32 %v5873, %v5874
        %v5876 = vrot.slane %v5875, 1
        %v5877 = vadd.f32 %v5875, %v5876
        %v5878 = vadd.f32 %v5838, %v5842
        %v5879 = vadd.f32 %v5878, %v5846
        %v5880 = vadd.f32 %v5879, %v5850
        %v5881 = vrot.slane %v5880, 4
        %v5882 = vadd.f32 %v5880, %v5881
        %v5883 = vrot.slane %v5882, 2
        %v5884 = vadd.f32 %v5882, %v5883
        %v5885 = vrot.slane %v5884, 1
        %v5886 = vadd.f32 %v5884, %v5885
        %5887 = vset.pattern.permute.xlu0 11
        %5888 = vperm.xlu0 %5887, %v207
        %v5889 = vpop.permute.xlu0 %5888
        %v5891 = vadd.f32 %v5859, %v5889
        %v5892 = vadd.f32 %v5868, %v5889
        %v5893 = vadd.f32 %v5877, %v5889
        %v5894 = vadd.f32 %v5886, %v5889
        %v5895 = vand.u32 2147483647, %v5891
        %vm5896 = vcmp.le.f32.partialorder %v5895, 0.7853982
        %vm5897 = vcmp.lt.s32.totalorder %v5891, 0
        %v5898 = vand.u32 %v5891, 2139095040
        %v5899 = vshrl.u32 %v5898, 23
        %v5900 = vsub.s32 %v5899, 127
        %v5901 = vand.u32 2147483647, %v5891
        %v5902 = vand.u32 %v5901, 8388607
        %v5903 = vor.u32 %v5902, 8388608
        %v5904 = vsub.s32 0, %v5903
        %v5905 = vadd.s32 %v5900, 1
        %vm5906 = vcmp.gt.s32.totalorder %v5905, 0
        %v5907 = vsel %vm5906, %v5905, 0
        %v5908 = vshrl.u32 %v5907, 5
        %v5909 = vand.u32 %v5907, 31
        %v5910 = vsub.s32 32, %v5909
        %v5911 = vshrl.u32 683565275, %v5910
        %v5912 = vshll.u32 683565275, %v5909
        %v5913 = vshrl.u32 2475754826, %v5910
        %v5914 = vor.u32 %v5912, %v5913
        %v5915 = vshll.u32 2475754826, %v5909
        %v5916 = vshrl.u32 2131351028, %v5910
        %v5917 = vor.u32 %v5915, %v5916
        %v5918 = vshll.u32 2131351028, %v5909
        %v5919 = vshrl.u32 2102212464, %v5910
        %v5920 = vor.u32 %v5918, %v5919
        %v5921 = vshll.u32 2102212464, %v5909
        %v5922 = vshrl.u32 920167782, %v5910
        %v5923 = vor.u32 %v5921, %v5922
        %v5924 = vshll.u32 920167782, %v5909
        %v5925 = vshrl.u32 1326507024, %v5910
        %v5926 = vor.u32 %v5924, %v5925
        %vm5927 = vcmp.lt.s32.totalorder %v5908, 1
        %vm5928 = vcmp.lt.s32.totalorder %v5908, 2
        %vm5929 = vcmp.lt.s32.totalorder %v5908, 3
        %vm5930 = vcmp.lt.s32.totalorder %v5908, 4
        %v5931 = vsel %vm5927, %v5911, %v5914
        %v5932 = vsel %vm5930, %v5920, 2102212464
        %v5933 = vsel %vm5929, %v5917, %v5932
        %v5934 = vsel %vm5928, %v5931, %v5933
        %v5935 = vsel %vm5927, %v5914, %v5917
        %v5936 = vsel %vm5930, %v5923, 920167782
        %v5937 = vsel %vm5929, %v5920, %v5936
        %v5938 = vsel %vm5928, %v5935, %v5937
        %v5939 = vsel %vm5927, %v5917, %v5920
        %v5940 = vsel %vm5930, %v5926, 1326507024
        %v5941 = vsel %vm5929, %v5923, %v5940
        %v5942 = vsel %vm5928, %v5939, %v5941
        %v5943 = vshll.u32 %v5903, 8
        %v5944 = vmul.u32.u64.compose %v5943, %v5942
        %v5945 = vextract.low.u32 %v5944
        %v5946 = vextract.high.u32 %v5944
        %v5947 = vmul.u32.u64.compose %v5943, %v5938
        %v5948 = vextract.low.u32 %v5947
        %v5949 = vextract.high.u32 %v5947
        %v5950 = vmul.u32 %v5943, %v5934
        %v5951 = vadd.s32 %v5946, %v5948
        %vm5952 = vc.u32 %v5946, %v5948
        %v5953 = vadd.s32 %v5949, 1
        %v5954 = vsel %vm5952, %v5953, %v5949
        %v5955 = vadd.s32 %v5950, %v5954
        %v5956 = vadd.s32 %v5955, 536870912
        %v5957 = vshrl.u32 %v5956, 30
        %v5958 = vshll.u32 %v5957, 30
        %v5959 = vsub.s32 %v5955, %v5958
        %vm5960 = vcmp.lt.s32.totalorder %v5959, 0
        %v5961 = vsub.s32 0, %v5959
        %v5962 = vsel %vm5960, %v5961, %v5959
        %v5963 = vclz %v5962
        %v5964 = vsub.s32 %v5963, 2
        %vm5965 = vcmp.gt.s32.totalorder 0, %v5964
        %v5966 = vsel %vm5965, 0, %v5964
        %v5967 = vsub.s32 32, %v5966
        %v5968 = vshll.u32 %v5959, %v5966
        %v5969 = vshrl.u32 %v5951, %v5967
        %v5970 = vor.u32 %v5968, %v5969
        %v5971 = vsub.s32 4294967266, %v5966
        %v5972 = vadd.s32 %v5971, 127
        %v5973 = vshll.u32 %v5972, 23
        %v5974 = vor.u32 4788187, %v5973
        %v5975 = vand.u32 2147483647, %v5974
        %v5977 = vcvt.s32.f32 %v5970
        %v5978 = vmul.f32 %v5977, %v5975
        %v5979 = vxor.u32 %v5978, 2147483648
        %v5980 = vsel %vm5897, %v5979, %v5978
        %v5981 = vsub.s32 4, %v5957
        %v5982 = vsel %vm5897, %v5981, %v5957
        %v5983 = vsel %vm5896, %v5891, %v5980
        %v5984 = vsel %vm5896, 0, %v5982
        %v5985 = vcosq.f32.pop %v5983
        %v5986 = vsinq.f32.pop %v5983
        %vm5987 = vweird.f32 %v5891
        %v5988 = vadd.s32 %v5984, 3
        %v5989 = vand.u32 %v5988, 3
        %vm5990 = vcmp.lt.s32.totalorder %v5989, 2
        %vm5991 = vcmp.eq.s32.totalorder %v5989, 0
        %v5992 = vxor.u32 %v5986, 2147483648
        %v5993 = vsel %vm5991, %v5985, %v5992
        %vm5994 = vcmp.eq.s32.totalorder %v5989, 2
        %v5995 = vxor.u32 %v5985, 2147483648
        %v5996 = vsel %vm5994, %v5995, %v5986
        %v5997 = vsel %vm5990, %v5993, %v5996
        %v5998 = vsel %vm5987, nan, %v5997
        %v5999 = vand.u32 2147483647, %v5892
        %vm6000 = vcmp.le.f32.partialorder %v5999, 0.7853982
        %vm6001 = vcmp.lt.s32.totalorder %v5892, 0
        %v6002 = vand.u32 %v5892, 2139095040
        %v6003 = vshrl.u32 %v6002, 23
        %v6004 = vsub.s32 %v6003, 127
        %v6005 = vand.u32 2147483647, %v5892
        %v6006 = vand.u32 %v6005, 8388607
        %v6007 = vor.u32 %v6006, 8388608
        %v6008 = vsub.s32 0, %v6007
        %v6009 = vadd.s32 %v6004, 1
        %vm6010 = vcmp.gt.s32.totalorder %v6009, 0
        %v6011 = vsel %vm6010, %v6009, 0
        %v6012 = vshrl.u32 %v6011, 5
        %v6013 = vand.u32 %v6011, 31
        %v6014 = vsub.s32 32, %v6013
        %v6015 = vshrl.u32 683565275, %v6014
        %v6016 = vshll.u32 683565275, %v6013
        %v6017 = vshrl.u32 2475754826, %v6014
        %v6018 = vor.u32 %v6016, %v6017
        %v6019 = vshll.u32 2475754826, %v6013
        %v6020 = vshrl.u32 2131351028, %v6014
        %v6021 = vor.u32 %v6019, %v6020
        %v6022 = vshll.u32 2131351028, %v6013
        %v6023 = vshrl.u32 2102212464, %v6014
        %v6024 = vor.u32 %v6022, %v6023
        %v6025 = vshll.u32 2102212464, %v6013
        %v6026 = vshrl.u32 920167782, %v6014
        %v6027 = vor.u32 %v6025, %v6026
        %v6028 = vshll.u32 920167782, %v6013
        %v6029 = vshrl.u32 1326507024, %v6014
        %v6030 = vor.u32 %v6028, %v6029
        %vm6031 = vcmp.lt.s32.totalorder %v6012, 1
        %vm6032 = vcmp.lt.s32.totalorder %v6012, 2
        %vm6033 = vcmp.lt.s32.totalorder %v6012, 3
        %vm6034 = vcmp.lt.s32.totalorder %v6012, 4
        %v6035 = vsel %vm6031, %v6015, %v6018
        %v6036 = vsel %vm6034, %v6024, 2102212464
        %v6037 = vsel %vm6033, %v6021, %v6036
        %v6038 = vsel %vm6032, %v6035, %v6037
        %v6039 = vsel %vm6031, %v6018, %v6021
        %v6040 = vsel %vm6034, %v6027, 920167782
        %v6041 = vsel %vm6033, %v6024, %v6040
        %v6042 = vsel %vm6032, %v6039, %v6041
        %v6043 = vsel %vm6031, %v6021, %v6024
        %v6044 = vsel %vm6034, %v6030, 1326507024
        %v6045 = vsel %vm6033, %v6027, %v6044
        %v6046 = vsel %vm6032, %v6043, %v6045
        %v6047 = vshll.u32 %v6007, 8
        %v6048 = vmul.u32.u64.compose %v6047, %v6046
        %v6049 = vextract.low.u32 %v6048
        %v6050 = vextract.high.u32 %v6048
        %v6051 = vmul.u32.u64.compose %v6047, %v6042
        %v6052 = vextract.low.u32 %v6051
        %v6053 = vextract.high.u32 %v6051
        %v6054 = vmul.u32 %v6047, %v6038
        %v6055 = vadd.s32 %v6050, %v6052
        %vm6056 = vc.u32 %v6050, %v6052
        %v6057 = vadd.s32 %v6053, 1
        %v6058 = vsel %vm6056, %v6057, %v6053
        %v6059 = vadd.s32 %v6054, %v6058
        %v6060 = vadd.s32 %v6059, 536870912
        %v6061 = vshrl.u32 %v6060, 30
        %v6062 = vshll.u32 %v6061, 30
        %v6063 = vsub.s32 %v6059, %v6062
        %vm6064 = vcmp.lt.s32.totalorder %v6063, 0
        %v6065 = vsub.s32 0, %v6063
        %v6066 = vsel %vm6064, %v6065, %v6063
        %v6067 = vclz %v6066
        %v6068 = vsub.s32 %v6067, 2
        %vm6069 = vcmp.gt.s32.totalorder 0, %v6068
        %v6070 = vsel %vm6069, 0, %v6068
        %v6071 = vsub.s32 32, %v6070
        %v6072 = vshll.u32 %v6063, %v6070
        %v6073 = vshrl.u32 %v6055, %v6071
        %v6074 = vor.u32 %v6072, %v6073
        %v6075 = vsub.s32 4294967266, %v6070
        %v6076 = vadd.s32 %v6075, 127
        %v6077 = vshll.u32 %v6076, 23
        %v6078 = vor.u32 4788187, %v6077
        %v6079 = vand.u32 2147483647, %v6078
        %v6081 = vcvt.s32.f32 %v6074
        %v6082 = vmul.f32 %v6081, %v6079
        %v6083 = vxor.u32 %v6082, 2147483648
        %v6084 = vsel %vm6001, %v6083, %v6082
        %v6085 = vsub.s32 4, %v6061
        %v6086 = vsel %vm6001, %v6085, %v6061
        %v6087 = vsel %vm6000, %v5892, %v6084
        %v6088 = vsel %vm6000, 0, %v6086
        %v6089 = vcosq.f32.pop %v6087
        %v6090 = vsinq.f32.pop %v6087
        %vm6091 = vweird.f32 %v5892
        %v6092 = vadd.s32 %v6088, 3
        %v6093 = vand.u32 %v6092, 3
        %vm6094 = vcmp.lt.s32.totalorder %v6093, 2
        %vm6095 = vcmp.eq.s32.totalorder %v6093, 0
        %v6096 = vxor.u32 %v6090, 2147483648
        %v6097 = vsel %vm6095, %v6089, %v6096
        %vm6098 = vcmp.eq.s32.totalorder %v6093, 2
        %v6099 = vxor.u32 %v6089, 2147483648
        %v6100 = vsel %vm6098, %v6099, %v6090
        %v6101 = vsel %vm6094, %v6097, %v6100
        %v6102 = vsel %vm6091, nan, %v6101
        %v6103 = vand.u32 2147483647, %v5893
        %vm6104 = vcmp.le.f32.partialorder %v6103, 0.7853982
        %vm6105 = vcmp.lt.s32.totalorder %v5893, 0
        %v6106 = vand.u32 %v5893, 2139095040
        %v6107 = vshrl.u32 %v6106, 23
        %v6108 = vsub.s32 %v6107, 127
        %v6109 = vand.u32 2147483647, %v5893
        %v6110 = vand.u32 %v6109, 8388607
        %v6111 = vor.u32 %v6110, 8388608
        %v6112 = vsub.s32 0, %v6111
        %v6113 = vadd.s32 %v6108, 1
        %vm6114 = vcmp.gt.s32.totalorder %v6113, 0
        %v6115 = vsel %vm6114, %v6113, 0
        %v6116 = vshrl.u32 %v6115, 5
        %v6117 = vand.u32 %v6115, 31
        %v6118 = vsub.s32 32, %v6117
        %v6119 = vshrl.u32 683565275, %v6118
        %v6120 = vshll.u32 683565275, %v6117
        %v6121 = vshrl.u32 2475754826, %v6118
        %v6122 = vor.u32 %v6120, %v6121
        %v6123 = vshll.u32 2475754826, %v6117
        %v6124 = vshrl.u32 2131351028, %v6118
        %v6125 = vor.u32 %v6123, %v6124
        %v6126 = vshll.u32 2131351028, %v6117
        %v6127 = vshrl.u32 2102212464, %v6118
        %v6128 = vor.u32 %v6126, %v6127
        %v6129 = vshll.u32 2102212464, %v6117
        %v6130 = vshrl.u32 920167782, %v6118
        %v6131 = vor.u32 %v6129, %v6130
        %v6132 = vshll.u32 920167782, %v6117
        %v6133 = vshrl.u32 1326507024, %v6118
        %v6134 = vor.u32 %v6132, %v6133
        %vm6135 = vcmp.lt.s32.totalorder %v6116, 1
        %vm6136 = vcmp.lt.s32.totalorder %v6116, 2
        %vm6137 = vcmp.lt.s32.totalorder %v6116, 3
        %vm6138 = vcmp.lt.s32.totalorder %v6116, 4
        %v6139 = vsel %vm6135, %v6119, %v6122
        %v6140 = vsel %vm6138, %v6128, 2102212464
        %v6141 = vsel %vm6137, %v6125, %v6140
        %v6142 = vsel %vm6136, %v6139, %v6141
        %v6143 = vsel %vm6135, %v6122, %v6125
        %v6144 = vsel %vm6138, %v6131, 920167782
        %v6145 = vsel %vm6137, %v6128, %v6144
        %v6146 = vsel %vm6136, %v6143, %v6145
        %v6147 = vsel %vm6135, %v6125, %v6128
        %v6148 = vsel %vm6138, %v6134, 1326507024
        %v6149 = vsel %vm6137, %v6131, %v6148
        %v6150 = vsel %vm6136, %v6147, %v6149
        %v6151 = vshll.u32 %v6111, 8
        %v6152 = vmul.u32.u64.compose %v6151, %v6150
        %v6153 = vextract.low.u32 %v6152
        %v6154 = vextract.high.u32 %v6152
        %v6155 = vmul.u32.u64.compose %v6151, %v6146
        %v6156 = vextract.low.u32 %v6155
        %v6157 = vextract.high.u32 %v6155
        %v6158 = vmul.u32 %v6151, %v6142
        %v6159 = vadd.s32 %v6154, %v6156
        %vm6160 = vc.u32 %v6154, %v6156
        %v6161 = vadd.s32 %v6157, 1
        %v6162 = vsel %vm6160, %v6161, %v6157
        %v6163 = vadd.s32 %v6158, %v6162
        %v6164 = vadd.s32 %v6163, 536870912
        %v6165 = vshrl.u32 %v6164, 30
        %v6166 = vshll.u32 %v6165, 30
        %v6167 = vsub.s32 %v6163, %v6166
        %vm6168 = vcmp.lt.s32.totalorder %v6167, 0
        %v6169 = vsub.s32 0, %v6167
        %v6170 = vsel %vm6168, %v6169, %v6167
        %v6171 = vclz %v6170
        %v6172 = vsub.s32 %v6171, 2
        %vm6173 = vcmp.gt.s32.totalorder 0, %v6172
        %v6174 = vsel %vm6173, 0, %v6172
        %v6175 = vsub.s32 32, %v6174
        %v6176 = vshll.u32 %v6167, %v6174
        %v6177 = vshrl.u32 %v6159, %v6175
        %v6178 = vor.u32 %v6176, %v6177
        %v6179 = vsub.s32 4294967266, %v6174
        %v6180 = vadd.s32 %v6179, 127
        %v6181 = vshll.u32 %v6180, 23
        %v6182 = vor.u32 4788187, %v6181
        %v6183 = vand.u32 2147483647, %v6182
        %v6185 = vcvt.s32.f32 %v6178
        %v6186 = vmul.f32 %v6185, %v6183
        %v6187 = vxor.u32 %v6186, 2147483648
        %v6188 = vsel %vm6105, %v6187, %v6186
        %v6189 = vsub.s32 4, %v6165
        %v6190 = vsel %vm6105, %v6189, %v6165
        %v6191 = vsel %vm6104, %v5893, %v6188
        %v6192 = vsel %vm6104, 0, %v6190
        %v6193 = vcosq.f32.pop %v6191
        %v6194 = vsinq.f32.pop %v6191
        %vm6195 = vweird.f32 %v5893
        %v6196 = vadd.s32 %v6192, 3
        %v6197 = vand.u32 %v6196, 3
        %vm6198 = vcmp.lt.s32.totalorder %v6197, 2
        %vm6199 = vcmp.eq.s32.totalorder %v6197, 0
        %v6200 = vxor.u32 %v6194, 2147483648
        %v6201 = vsel %vm6199, %v6193, %v6200
        %vm6202 = vcmp.eq.s32.totalorder %v6197, 2
        %v6203 = vxor.u32 %v6193, 2147483648
        %v6204 = vsel %vm6202, %v6203, %v6194
        %v6205 = vsel %vm6198, %v6201, %v6204
        %v6206 = vsel %vm6195, nan, %v6205
        %v6207 = vand.u32 2147483647, %v5894
        %vm6208 = vcmp.le.f32.partialorder %v6207, 0.7853982
        %vm6209 = vcmp.lt.s32.totalorder %v5894, 0
        %v6210 = vand.u32 %v5894, 2139095040
        %v6211 = vshrl.u32 %v6210, 23
        %v6212 = vsub.s32 %v6211, 127
        %v6213 = vand.u32 2147483647, %v5894
        %v6214 = vand.u32 %v6213, 8388607
        %v6215 = vor.u32 %v6214, 8388608
        %v6216 = vsub.s32 0, %v6215
        %v6217 = vadd.s32 %v6212, 1
        %vm6218 = vcmp.gt.s32.totalorder %v6217, 0
        %v6219 = vsel %vm6218, %v6217, 0
        %v6220 = vshrl.u32 %v6219, 5
        %v6221 = vand.u32 %v6219, 31
        %v6222 = vsub.s32 32, %v6221
        %v6223 = vshrl.u32 683565275, %v6222
        %v6224 = vshll.u32 683565275, %v6221
        %v6225 = vshrl.u32 2475754826, %v6222
        %v6226 = vor.u32 %v6224, %v6225
        %v6227 = vshll.u32 2475754826, %v6221
        %v6228 = vshrl.u32 2131351028, %v6222
        %v6229 = vor.u32 %v6227, %v6228
        %v6230 = vshll.u32 2131351028, %v6221
        %v6231 = vshrl.u32 2102212464, %v6222
        %v6232 = vor.u32 %v6230, %v6231
        %v6233 = vshll.u32 2102212464, %v6221
        %v6234 = vshrl.u32 920167782, %v6222
        %v6235 = vor.u32 %v6233, %v6234
        %v6236 = vshll.u32 920167782, %v6221
        %v6237 = vshrl.u32 1326507024, %v6222
        %v6238 = vor.u32 %v6236, %v6237
        %vm6239 = vcmp.lt.s32.totalorder %v6220, 1
        %vm6240 = vcmp.lt.s32.totalorder %v6220, 2
        %vm6241 = vcmp.lt.s32.totalorder %v6220, 3
        %vm6242 = vcmp.lt.s32.totalorder %v6220, 4
        %v6243 = vsel %vm6239, %v6223, %v6226
        %v6244 = vsel %vm6242, %v6232, 2102212464
        %v6245 = vsel %vm6241, %v6229, %v6244
        %v6246 = vsel %vm6240, %v6243, %v6245
        %v6247 = vsel %vm6239, %v6226, %v6229
        %v6248 = vsel %vm6242, %v6235, 920167782
        %v6249 = vsel %vm6241, %v6232, %v6248
        %v6250 = vsel %vm6240, %v6247, %v6249
        %v6251 = vsel %vm6239, %v6229, %v6232
        %v6252 = vsel %vm6242, %v6238, 1326507024
        %v6253 = vsel %vm6241, %v6235, %v6252
        %v6254 = vsel %vm6240, %v6251, %v6253
        %v6255 = vshll.u32 %v6215, 8
        %v6256 = vmul.u32.u64.compose %v6255, %v6254
        %v6257 = vextract.low.u32 %v6256
        %v6258 = vextract.high.u32 %v6256
        %v6259 = vmul.u32.u64.compose %v6255, %v6250
        %v6260 = vextract.low.u32 %v6259
        %v6261 = vextract.high.u32 %v6259
        %v6262 = vmul.u32 %v6255, %v6246
        %v6263 = vadd.s32 %v6258, %v6260
        %vm6264 = vc.u32 %v6258, %v6260
        %v6265 = vadd.s32 %v6261, 1
        %v6266 = vsel %vm6264, %v6265, %v6261
        %v6267 = vadd.s32 %v6262, %v6266
        %v6268 = vadd.s32 %v6267, 536870912
        %v6269 = vshrl.u32 %v6268, 30
        %v6270 = vshll.u32 %v6269, 30
        %v6271 = vsub.s32 %v6267, %v6270
        %vm6272 = vcmp.lt.s32.totalorder %v6271, 0
        %v6273 = vsub.s32 0, %v6271
        %v6274 = vsel %vm6272, %v6273, %v6271
        %v6275 = vclz %v6274
        %v6276 = vsub.s32 %v6275, 2
        %vm6277 = vcmp.gt.s32.totalorder 0, %v6276
        %v6278 = vsel %vm6277, 0, %v6276
        %v6279 = vsub.s32 32, %v6278
        %v6280 = vshll.u32 %v6271, %v6278
        %v6281 = vshrl.u32 %v6263, %v6279
        %v6282 = vor.u32 %v6280, %v6281
        %v6283 = vsub.s32 4294967266, %v6278
        %v6284 = vadd.s32 %v6283, 127
        %v6285 = vshll.u32 %v6284, 23
        %v6286 = vor.u32 4788187, %v6285
        %v6287 = vand.u32 2147483647, %v6286
        %v6289 = vcvt.s32.f32 %v6282
        %v6290 = vmul.f32 %v6289, %v6287
        %v6291 = vxor.u32 %v6290, 2147483648
        %v6292 = vsel %vm6209, %v6291, %v6290
        %v6293 = vsub.s32 4, %v6269
        %v6294 = vsel %vm6209, %v6293, %v6269
        %v6295 = vsel %vm6208, %v5894, %v6292
        %v6296 = vsel %vm6208, 0, %v6294
        %v6297 = vcosq.f32.pop %v6295
        %v6298 = vsinq.f32.pop %v6295
        %vm6299 = vweird.f32 %v5894
        %v6300 = vadd.s32 %v6296, 3
        %v6301 = vand.u32 %v6300, 3
        %vm6302 = vcmp.lt.s32.totalorder %v6301, 2
        %vm6303 = vcmp.eq.s32.totalorder %v6301, 0
        %v6304 = vxor.u32 %v6298, 2147483648
        %v6305 = vsel %vm6303, %v6297, %v6304
        %vm6306 = vcmp.eq.s32.totalorder %v6301, 2
        %v6307 = vxor.u32 %v6297, 2147483648
        %v6308 = vsel %vm6306, %v6307, %v6298
        %v6309 = vsel %vm6302, %v6305, %v6308
        %v6310 = vsel %vm6299, nan, %v6309
        %v6315 = vcombine.low %v5998, %v6102
        %v6316 = vcombine.low %v6206, %v6310
        %v6318 = vunpack.c.l.s4 1966171168
        %v6319 = vunpack.c.0.s8 %v6318
        %v6320 = vlaneseq
        %v6321 = vshrl.u32 %v6320, 7
        %v6322 = vsub.s32 %v6319, %v6321
        %v6323 = vrot.slane %v6315, %v6322
        %v6325 = vunpack.c.l.s4 1966171168
        %v6326 = vunpack.c.0.s8 %v6325
        %v6327 = vlaneseq
        %v6328 = vshrl.u32 %v6327, 7
        %v6329 = vsub.s32 %v6326, %v6328
        %v6330 = vrot.slane %v6316, %v6329
        %v6331 = vcombine.low %v6323, %v6330
        %v6333 = vunpack.c.l.s4 1966171168
        %v6334 = vunpack.c.0.s8 %v6333
        %v6335 = vlaneseq
        %v6336 = vshrl.u32 %v6335, 7
        %v6337 = vsub.s32 %v6334, %v6336
        %v6338 = vrot.slane %v6331, %v6337
        %v6340 = vlaneseq
        %vm6341 = vcmp.ge.s32.totalorder %v6340, 0
        %vm6342 = vcmp.lt.s32.totalorder %v6340, 512
        %vm6343 = vmand %vm6341, %vm6342
        %6344 = vst.msk [vmem:[%s188] sm:$0xf] %vm6343, %v6338
        %s6345 = sand.u32 %s101, 1
        %s6346 = scalar_lea.sflag [#allocation5], %s6345
        %s6347 = sand.u32 %s101, 1
        %s6348 = smul.addr %s6347, 4
        %s6349 = scalar_lea.vmem [#allocation4], %s6348
        // Predicated region
        $region29: #{siren_collection_forward_batched.1} parent=27 // pred_check
          %p6350 = pneg %p111
        $region30: #{siren_collection_forward_batched.1} parent=27 // pred_check_branch
          %6352 = sbr.rel (%p6350) target = $region32
        $region31: #{siren_collection_forward_batched.1} parent=27 // pred_region
          %s6353 = smul.u32 4, %s28
          %s6355 = ssub.s32 64, 64
          %6356 = vsyncadd %s6346, %s6355
          %s6357 = smul.addr %s27, 8
          %s6358 = sadd.s32 %s6353, %s6357
          %s6359 = smul.addr %s6358, 16
          %s6360 = scalar_lea.hbm %s3, %s6359
          %s6362 = sshll.u32 %s6349, 4
          %s6363 = int_to_ptr.vmem [resolvable:$true] %s6362
          %6365 = dma.vmem_to_hbm [thread:$0]  %s6363, 64, %s6360, %s6346
        $region32: #{siren_collection_forward_batched.1} parent=27 // pred_fallthru
          _
      $region28: #{siren_collection_forward_batched.1} parent=5 // pred_fallthru
        _
      %p6366 = scmp.le.s32.totalorder 2, %s18
      // Predicated region
      $region33: #{siren_collection_forward_batched.1} parent=5 // pred_check
        %p6367 = pneg %p6366
      $region34: #{siren_collection_forward_batched.1} parent=5 // pred_check_branch
        %6369 = sbr.rel (%p6367) target = $region36
      $region35: #{siren_collection_forward_batched.1} parent=5 // pred_region
        %s6370 = ssub.s32 %s18, 2
        // Predicated region
        $region37: #{siren_collection_forward_batched.1} parent=35 // pred_check
          %p6371 = pneg %p117
        $region38: #{siren_collection_forward_batched.1} parent=35 // pred_check_branch
          %6373 = sbr.rel (%p6371) target = $region40
        $region39: #{siren_collection_forward_batched.1} parent=35 // pred_region
          %s6374 = sand.u32 %s102, 1
          %s6375 = scalar_lea.sflag [#allocation5], %s6374
          %s6376 = sand.u32 %s102, 1
          %s6377 = smul.addr %s6376, 4
          %s6378 = scalar_lea.vmem [#allocation4], %s6377
          %6379 = dma.done %s6375, 64
        $region40: #{siren_collection_forward_batched.1} parent=35 // pred_fallthru
          _
      $region36: #{siren_collection_forward_batched.1} parent=5 // pred_fallthru
        _
    $region6: #{siren_collection_forward_batched.1} parent=1 // loop_footer
      %s22 = sadd.s32 1, %s18
    $region7: #{siren_collection_forward_batched.1} parent=1 // loop_footer_branch
      %17 = sbr.rel target = $region3
    $region8: #{siren_collection_forward_batched.1} parent=1 // loop_exit
      _
    %6380 = vsyncpa [#allocation5], 1
    %s6381 = scalar_lea.sflag [#allocation5], 1
    %6382 = vsyncpa %s6381, 1

</llo_original>
